<compile_context>
chip_gen: v7x
topology: tpu7x:2x2x1
jax: 0.10.0
libtpu: 0.0.40
codegen_flags: <defaults>
</compile_context>

<pallas_src>
import functools

import jax
import jax.numpy as jnp
from jax.experimental import pallas as pl
from jax.experimental.pallas import tpu as pltpu

F_IN = 704          # per-board feature width
F_PAIR = 2 * F_IN   # 1408 = 11 * 128 lanes -> lane-dense input blocks
OUT_PAD = 8         # final layer padded 1 -> 8 output columns


def _round_up(n, m):
    return ((n + m - 1) // m) * m


def _cdiv(a, b):
    return -(-a // b)


# ---------------------------------------------------------------------------
# Kernel
# ---------------------------------------------------------------------------
def _chess_kernel(x_ref,
                  w1_ref, b1_ref, w2_ref, b2_ref, w3_ref, b3_ref,
                  w4a_ref, w4b_ref, b4_ref, w5_ref, b5_ref,
                  wo_ref, bo_ref, o_ref):
    """Fused 6-layer MLP.

    x_ref: (t, 1408) f32, row j = concat(x[2j], x[2j+1]) of the original batch.
    o_ref: (t, 8)  f32, column 0 holds the real result.
    """
    rows = o_ref.shape[0]                       # t output (pair) rows

    xp = x_ref[...]                             # (t, 1408) f32
    xa = xp[:, :F_IN]                           # even original rows (t, 704)
    xb = xp[:, F_IN:]                           # odd  original rows (t, 704)
    # Stack even rows on top of odd rows so layers 1-3 run as ONE (2t)-row
    # matmul chain; cast to bf16 (MXU-native) once, in-kernel.
    xs = jnp.concatenate([xa, xb], axis=0).astype(jnp.bfloat16)   # (2t, 704)

    h = jnp.dot(xs, w1_ref[...], preferred_element_type=jnp.float32)
    h = jnp.maximum(h + b1_ref[...], 0.0).astype(jnp.bfloat16)    # (2t, 1024)
    h = jnp.dot(h, w2_ref[...], preferred_element_type=jnp.float32)
    h = jnp.maximum(h + b2_ref[...], 0.0).astype(jnp.bfloat16)    # (2t, 512)
    h = jnp.dot(h, w3_ref[...], preferred_element_type=jnp.float32)
    h = jnp.maximum(h + b3_ref[...], 0.0)                         # (2t, 256) f32

    ha = h[:rows].astype(jnp.bfloat16)          # h3 of even rows   (t, 256)
    hb = h[rows:].astype(jnp.bfloat16)          # h3 of odd rows    (t, 256)

    # torch view(-1, 512) @ W4  ==  h3_even @ W4[:256] + h3_odd @ W4[256:]
    y = (jnp.dot(ha, w4a_ref[...], preferred_element_type=jnp.float32)
         + jnp.dot(hb, w4b_ref[...], preferred_element_type=jnp.float32))
    y = jnp.maximum(y + b4_ref[...], 0.0).astype(jnp.bfloat16)    # (t, 128)
    y = jnp.dot(y, w5_ref[...], preferred_element_type=jnp.float32)
    y = jnp.maximum(y + b5_ref[...], 0.0).astype(jnp.bfloat16)    # (t, 64)

    # Final 64 -> 1 layer, zero-padded to 8 output columns; real result is
    # column 0 (writeback is 16x smaller than the previous 128-wide pad).
    o = jnp.dot(y, wo_ref[...], preferred_element_type=jnp.float32)  # (t, 8)
    o_ref[...] = o + bo_ref[...]


# ---------------------------------------------------------------------------
# Parameter preparation (done once, outside the kernel)
# ---------------------------------------------------------------------------
def prepare_params(params):
    """f32 (in,out)/(1,out) params -> bf16 kernel layout."""
    (w1, b1, w2, b2, w3, b3, w4, b4, w5, b5, wo, bo) = params
    wop = jnp.pad(wo, ((0, 0), (0, OUT_PAD - 1))).astype(jnp.bfloat16)  # (64, 8)
    bop = jnp.pad(bo, ((0, 0), (0, OUT_PAD - 1)))                       # (1, 8) f32
    return (w1.astype(jnp.bfloat16), b1,
            w2.astype(jnp.bfloat16), b2,
            w3.astype(jnp.bfloat16), b3,
            w4[:256].astype(jnp.bfloat16),      # W4 top half    (256, 128)
            w4[256:].astype(jnp.bfloat16),      # W4 bottom half (256, 128)
            b4,
            w5.astype(jnp.bfloat16), b5,
            wop, bop)


# ---------------------------------------------------------------------------
# Wrapper
# ---------------------------------------------------------------------------
@functools.partial(jax.jit, static_argnames=("tile", "vmem_limit_mb"))
def chess_forward(x, kernel_params, tile=512, vmem_limit_mb=32):
    """x: (B, 704) f32, B even. Returns (B//2, 1) f32."""
    B, f = x.shape
    assert f == F_IN and B % 2 == 0
    half = B // 2

    # Zero-copy reshape: row j of x2 = concat(x[2j], x[2j+1]); 1408 = 11*128
    # lanes so the input block is lane-dense.  x is read from HBM once, by
    # the kernel's own block DMA.
    x2 = x.reshape(half, F_PAIR)

    # Adaptive, balanced batch tile (units = output/pair rows):
    #  - small batch: one block sized exactly to the data (no overcompute),
    #  - large batch: blocks balanced across the grid so the ragged tail
    #    wastes at most 7 rows (instead of up to tile-1).
    if half <= tile:
        t = half
    else:
        nblk = _cdiv(half, tile)
        t = _round_up(_cdiv(half, nblk), 8)
    grid = (_cdiv(half, t),)

    x_spec = pl.BlockSpec((t, F_PAIR), lambda i: (i, 0))
    # Weights/biases: full-array blocks with constant index maps -> DMA'd
    # once, VMEM resident across the whole grid.
    w_specs = [pl.BlockSpec(p.shape, lambda i: (0, 0)) for p in kernel_params]

    out = pl.pallas_call(
        _chess_kernel,
        out_shape=jax.ShapeDtypeStruct((half, OUT_PAD), jnp.float32),
        grid_spec=pltpu.PrefetchScalarGridSpec(
            num_scalar_prefetch=0,
            grid=grid,
            in_specs=[x_spec] + w_specs,
            out_specs=pl.BlockSpec((t, OUT_PAD), lambda i: (i, 0)),
        ),
        compiler_params=pltpu.CompilerParams(
            dimension_semantics=("parallel",),        # megacore sharding (v7x)
            vmem_limit_bytes=vmem_limit_mb * 1024 * 1024,
        ),
    )(x2, *kernel_params)

    return out[:, :1]                                  # (half, 1)


# ---------------------------------------------------------------------------
# Deterministic parameter init (PyTorch-Linear-style uniform(-1/sqrt(fan_in)))
# ---------------------------------------------------------------------------
def init_params(key):
    dims = [(704, 1024), (1024, 512), (512, 256), (512, 128), (128, 64),
            (64, 1)]
    params = []
    for (fan_in, fan_out) in dims:
        key, kw, kb = jax.random.split(key, 3)
        bound = 1.0 / (fan_in ** 0.5)
        # stored as (in, out) so the kernel does x @ W
        w = jax.random.uniform(kw, (fan_in, fan_out), jnp.float32,
                               minval=-bound, maxval=bound)
        b = jax.random.uniform(kb, (1, fan_out), jnp.float32,
                               minval=-bound, maxval=bound)
        params.extend([w, b])
    return tuple(params)


def _reference_forward(x, params):
    (w1, b1, w2, b2, w3, b3, w4, b4, w5, b5, wo, bo) = params
    h = jax.nn.relu(x @ w1 + b1)
    h = jax.nn.relu(h @ w2 + b2)
    h = jax.nn.relu(h @ w3 + b3)
    h = h.reshape(-1, 512)
    h = jax.nn.relu(h @ w4 + b4)
    h = jax.nn.relu(h @ w5 + b5)
    return h @ wo + bo


if __name__ == "__main__":
    key = jax.random.PRNGKey(0)
    kx, kp = jax.random.split(key)

    B = 32  # must be even (the torch view(-1, 512) halves the batch)
    x = jax.random.normal(kx, (B, 704), jnp.float32)
    params = init_params(kp)
    kernel_params = prepare_params(params)

    out = chess_forward(x, kernel_params)
    out = jax.block_until_ready(out)

    ref = _reference_forward(x, params)
    assert out.shape == (B // 2, 1), out.shape
    # bf16 matmul operands with f32 accumulation vs. the pure-f32 reference.
    assert jnp.allclose(out, ref, atol=3e-2, rtol=3e-2), (
        float(jnp.max(jnp.abs(out - ref))))

    print("KERNEL_OK")
</pallas_src>

<mosaic_0001>
module attributes {stable_mosaic.version = 11 : i64} {
  func.func @_chess_kernel(%arg0: i32, %arg1: memref<16x1408xf32, #tpu.memory_space<vmem>>, %arg2: memref<704x1024xbf16, #tpu.memory_space<vmem>>, %arg3: memref<1x1024xf32, #tpu.memory_space<vmem>>, %arg4: memref<1024x512xbf16, #tpu.memory_space<vmem>>, %arg5: memref<1x512xf32, #tpu.memory_space<vmem>>, %arg6: memref<512x256xbf16, #tpu.memory_space<vmem>>, %arg7: memref<1x256xf32, #tpu.memory_space<vmem>>, %arg8: memref<256x128xbf16, #tpu.memory_space<vmem>>, %arg9: memref<256x128xbf16, #tpu.memory_space<vmem>>, %arg10: memref<1x128xf32, #tpu.memory_space<vmem>>, %arg11: memref<128x64xbf16, #tpu.memory_space<vmem>>, %arg12: memref<1x64xf32, #tpu.memory_space<vmem>>, %arg13: memref<64x8xbf16, #tpu.memory_space<vmem>>, %arg14: memref<1x8xf32, #tpu.memory_space<vmem>>, %arg15: memref<16x8xf32, #tpu.memory_space<vmem>>) attributes {dimension_semantics = [#tpu.dimension_semantics<parallel>], iteration_bounds = array<i64: 1>, scalar_prefetch = 0 : i64, scratch_operands = 0 : i64, tpu.core_type = #tpu.core_type<tc>, window_params = [{transform_indices = @transform_0, window_bounds = array<i64: 16, 1408>}, {pipeline_mode = #tpu.pipeline_mode<synchronous>, transform_indices = @transform_1, window_bounds = array<i64: 704, 1024>}, {pipeline_mode = #tpu.pipeline_mode<synchronous>, transform_indices = @transform_2, window_bounds = array<i64: 1, 1024>}, {pipeline_mode = #tpu.pipeline_mode<synchronous>, transform_indices = @transform_3, window_bounds = array<i64: 1024, 512>}, {pipeline_mode = #tpu.pipeline_mode<synchronous>, transform_indices = @transform_4, window_bounds = array<i64: 1, 512>}, {pipeline_mode = #tpu.pipeline_mode<synchronous>, transform_indices = @transform_5, window_bounds = array<i64: 512, 256>}, {pipeline_mode = #tpu.pipeline_mode<synchronous>, transform_indices = @transform_6, window_bounds = array<i64: 1, 256>}, {pipeline_mode = #tpu.pipeline_mode<synchronous>, transform_indices = @transform_7, window_bounds = array<i64: 256, 128>}, {pipeline_mode = #tpu.pipeline_mode<synchronous>, transform_indices = @transform_8, window_bounds = array<i64: 256, 128>}, {pipeline_mode = #tpu.pipeline_mode<synchronous>, transform_indices = @transform_9, window_bounds = array<i64: 1, 128>}, {pipeline_mode = #tpu.pipeline_mode<synchronous>, transform_indices = @transform_10, window_bounds = array<i64: 128, 64>}, {pipeline_mode = #tpu.pipeline_mode<synchronous>, transform_indices = @transform_11, window_bounds = array<i64: 1, 64>}, {pipeline_mode = #tpu.pipeline_mode<synchronous>, transform_indices = @transform_12, window_bounds = array<i64: 64, 8>}, {pipeline_mode = #tpu.pipeline_mode<synchronous>, transform_indices = @transform_13, window_bounds = array<i64: 1, 8>}, {transform_indices = @transform_14, window_bounds = array<i64: 16, 8>}]} {
    %c0 = arith.constant 0 : index
    %c0_0 = arith.constant 0 : index
    %0 = vector.load %arg1[%c0, %c0_0] : memref<16x1408xf32, #tpu.memory_space<vmem>>, vector<16x1408xf32>
    %1 = vector.extract_strided_slice %0 {offsets = [0, 0], sizes = [16, 704], strides = [1, 1]} : vector<16x1408xf32> to vector<16x704xf32>
    %2 = vector.extract_strided_slice %0 {offsets = [0, 704], sizes = [16, 704], strides = [1, 1]} : vector<16x1408xf32> to vector<16x704xf32>
    %3 = tpu.concatenate %1, %2 in 0 : vector<16x704xf32>, vector<16x704xf32> -> vector<32x704xf32>
    %4 = arith.truncf %3 : vector<32x704xf32> to vector<32x704xbf16>
    %c0_1 = arith.constant 0 : index
    %c0_2 = arith.constant 0 : index
    %5 = vector.load %arg2[%c0_1, %c0_2] : memref<704x1024xbf16, #tpu.memory_space<vmem>>, vector<704x1024xbf16>
    %cst = arith.constant dense<0.000000e+00> : vector<32x1024xf32>
    %6 = tpu.matmul %4, %5, %cst {dimension_numbers = #tpu.dot_dimension_numbers<[1], [0], [0], [1], [0, 0, 1, 1], [], []>} : vector<32x704xbf16>, vector<704x1024xbf16>, vector<32x1024xf32> -> vector<32x1024xf32>
    %c0_3 = arith.constant 0 : index
    %c0_4 = arith.constant 0 : index
    %7 = vector.load %arg3[%c0_3, %c0_4] : memref<1x1024xf32, #tpu.memory_space<vmem>>, vector<1x1024xf32>
    %8 = vector.broadcast %7 : vector<1x1024xf32> to vector<32x1024xf32>
    %9 = arith.addf %6, %8 : vector<32x1024xf32>
    %cst_5 = arith.constant 0.000000e+00 : f32
    %10 = vector.broadcast %cst_5 : f32 to vector<32x1024xf32>
    %11 = arith.maximumf %9, %10 : vector<32x1024xf32>
    %12 = arith.truncf %11 : vector<32x1024xf32> to vector<32x1024xbf16>
    %c0_6 = arith.constant 0 : index
    %c0_7 = arith.constant 0 : index
    %13 = vector.load %arg4[%c0_6, %c0_7] : memref<1024x512xbf16, #tpu.memory_space<vmem>>, vector<1024x512xbf16>
    %cst_8 = arith.constant dense<0.000000e+00> : vector<32x512xf32>
    %14 = tpu.matmul %12, %13, %cst_8 {dimension_numbers = #tpu.dot_dimension_numbers<[1], [0], [0], [1], [0, 0, 1, 1], [], []>} : vector<32x1024xbf16>, vector<1024x512xbf16>, vector<32x512xf32> -> vector<32x512xf32>
    %c0_9 = arith.constant 0 : index
    %c0_10 = arith.constant 0 : index
    %15 = vector.load %arg5[%c0_9, %c0_10] : memref<1x512xf32, #tpu.memory_space<vmem>>, vector<1x512xf32>
    %16 = vector.broadcast %15 : vector<1x512xf32> to vector<32x512xf32>
    %17 = arith.addf %14, %16 : vector<32x512xf32>
    %cst_11 = arith.constant 0.000000e+00 : f32
    %18 = vector.broadcast %cst_11 : f32 to vector<32x512xf32>
    %19 = arith.maximumf %17, %18 : vector<32x512xf32>
    %20 = arith.truncf %19 : vector<32x512xf32> to vector<32x512xbf16>
    %c0_12 = arith.constant 0 : index
    %c0_13 = arith.constant 0 : index
    %21 = vector.load %arg6[%c0_12, %c0_13] : memref<512x256xbf16, #tpu.memory_space<vmem>>, vector<512x256xbf16>
    %cst_14 = arith.constant dense<0.000000e+00> : vector<32x256xf32>
    %22 = tpu.matmul %20, %21, %cst_14 {dimension_numbers = #tpu.dot_dimension_numbers<[1], [0], [0], [1], [0, 0, 1, 1], [], []>} : vector<32x512xbf16>, vector<512x256xbf16>, vector<32x256xf32> -> vector<32x256xf32>
    %c0_15 = arith.constant 0 : index
    %c0_16 = arith.constant 0 : index
    %23 = vector.load %arg7[%c0_15, %c0_16] : memref<1x256xf32, #tpu.memory_space<vmem>>, vector<1x256xf32>
    %24 = vector.broadcast %23 : vector<1x256xf32> to vector<32x256xf32>
    %25 = arith.addf %22, %24 : vector<32x256xf32>
    %cst_17 = arith.constant 0.000000e+00 : f32
    %26 = vector.broadcast %cst_17 : f32 to vector<32x256xf32>
    %27 = arith.maximumf %25, %26 : vector<32x256xf32>
    %28 = vector.extract_strided_slice %27 {offsets = [0, 0], sizes = [16, 256], strides = [1, 1]} : vector<32x256xf32> to vector<16x256xf32>
    %29 = arith.truncf %28 : vector<16x256xf32> to vector<16x256xbf16>
    %30 = vector.extract_strided_slice %27 {offsets = [16, 0], sizes = [16, 256], strides = [1, 1]} : vector<32x256xf32> to vector<16x256xf32>
    %31 = arith.truncf %30 : vector<16x256xf32> to vector<16x256xbf16>
    %c0_18 = arith.constant 0 : index
    %c0_19 = arith.constant 0 : index
    %32 = vector.load %arg8[%c0_18, %c0_19] : memref<256x128xbf16, #tpu.memory_space<vmem>>, vector<256x128xbf16>
    %cst_20 = arith.constant dense<0.000000e+00> : vector<16x128xf32>
    %33 = tpu.matmul %29, %32, %cst_20 {dimension_numbers = #tpu.dot_dimension_numbers<[1], [0], [0], [1], [0, 0, 1, 1], [], []>} : vector<16x256xbf16>, vector<256x128xbf16>, vector<16x128xf32> -> vector<16x128xf32>
    %c0_21 = arith.constant 0 : index
    %c0_22 = arith.constant 0 : index
    %34 = vector.load %arg9[%c0_21, %c0_22] : memref<256x128xbf16, #tpu.memory_space<vmem>>, vector<256x128xbf16>
    %cst_23 = arith.constant dense<0.000000e+00> : vector<16x128xf32>
    %35 = tpu.matmul %31, %34, %cst_23 {dimension_numbers = #tpu.dot_dimension_numbers<[1], [0], [0], [1], [0, 0, 1, 1], [], []>} : vector<16x256xbf16>, vector<256x128xbf16>, vector<16x128xf32> -> vector<16x128xf32>
    %36 = arith.addf %33, %35 : vector<16x128xf32>
    %c0_24 = arith.constant 0 : index
    %c0_25 = arith.constant 0 : index
    %37 = vector.load %arg10[%c0_24, %c0_25] : memref<1x128xf32, #tpu.memory_space<vmem>>, vector<1x128xf32>
    %38 = vector.broadcast %37 : vector<1x128xf32> to vector<16x128xf32>
    %39 = arith.addf %36, %38 : vector<16x128xf32>
    %cst_26 = arith.constant 0.000000e+00 : f32
    %40 = vector.broadcast %cst_26 : f32 to vector<16x128xf32>
    %41 = arith.maximumf %39, %40 : vector<16x128xf32>
    %42 = arith.truncf %41 : vector<16x128xf32> to vector<16x128xbf16>
    %c0_27 = arith.constant 0 : index
    %c0_28 = arith.constant 0 : index
    %43 = vector.load %arg11[%c0_27, %c0_28] : memref<128x64xbf16, #tpu.memory_space<vmem>>, vector<128x64xbf16>
    %cst_29 = arith.constant dense<0.000000e+00> : vector<16x64xf32>
    %44 = tpu.matmul %42, %43, %cst_29 {dimension_numbers = #tpu.dot_dimension_numbers<[1], [0], [0], [1], [0, 0, 1, 1], [], []>} : vector<16x128xbf16>, vector<128x64xbf16>, vector<16x64xf32> -> vector<16x64xf32>
    %c0_30 = arith.constant 0 : index
    %c0_31 = arith.constant 0 : index
    %45 = vector.load %arg12[%c0_30, %c0_31] : memref<1x64xf32, #tpu.memory_space<vmem>>, vector<1x64xf32>
    %46 = vector.broadcast %45 : vector<1x64xf32> to vector<16x64xf32>
    %47 = arith.addf %44, %46 : vector<16x64xf32>
    %cst_32 = arith.constant 0.000000e+00 : f32
    %48 = vector.broadcast %cst_32 : f32 to vector<16x64xf32>
    %49 = arith.maximumf %47, %48 : vector<16x64xf32>
    %50 = arith.truncf %49 : vector<16x64xf32> to vector<16x64xbf16>
    %c0_33 = arith.constant 0 : index
    %c0_34 = arith.constant 0 : index
    %51 = vector.load %arg13[%c0_33, %c0_34] : memref<64x8xbf16, #tpu.memory_space<vmem>>, vector<64x8xbf16>
    %cst_35 = arith.constant dense<0.000000e+00> : vector<16x8xf32>
    %52 = tpu.matmul %50, %51, %cst_35 {dimension_numbers = #tpu.dot_dimension_numbers<[1], [0], [0], [1], [0, 0, 1, 1], [], []>} : vector<16x64xbf16>, vector<64x8xbf16>, vector<16x8xf32> -> vector<16x8xf32>
    %c0_36 = arith.constant 0 : index
    %c0_37 = arith.constant 0 : index
    %53 = vector.load %arg14[%c0_36, %c0_37] : memref<1x8xf32, #tpu.memory_space<vmem>>, vector<1x8xf32>
    %54 = vector.broadcast %53 : vector<1x8xf32> to vector<16x8xf32>
    %55 = arith.addf %52, %54 : vector<16x8xf32>
    %c0_38 = arith.constant 0 : index
    %c0_39 = arith.constant 0 : index
    %56 = vector.load %arg15[%c0_38, %c0_39] : memref<16x8xf32, #tpu.memory_space<vmem>>, vector<16x8xf32>
    tpu.vector_store %arg15[%c0_38, %c0_39], %55 {strides = array<i32>} : memref<16x8xf32, #tpu.memory_space<vmem>>, vector<16x8xf32>,
    return
  }
  func.func @transform_0(%arg0: i32) -> (i32, i32) {
    %c0_i32 = arith.constant 0 : i32
    %c0_i32_0 = arith.constant 0 : i32
    return %arg0, %c0_i32 : i32, i32
  }
  func.func @transform_1(%arg0: i32) -> (i32, i32) {
    %c0_i32 = arith.constant 0 : i32
    %c0_i32_0 = arith.constant 0 : i32
    %c0_i32_1 = arith.constant 0 : i32
    return %c0_i32, %c0_i32_0 : i32, i32
  }
  func.func @transform_2(%arg0: i32) -> (i32, i32) {
    %c0_i32 = arith.constant 0 : i32
    %c0_i32_0 = arith.constant 0 : i32
    %c0_i32_1 = arith.constant 0 : i32
    return %c0_i32, %c0_i32_0 : i32, i32
  }
  func.func @transform_3(%arg0: i32) -> (i32, i32) {
    %c0_i32 = arith.constant 0 : i32
    %c0_i32_0 = arith.constant 0 : i32
    %c0_i32_1 = arith.constant 0 : i32
    return %c0_i32, %c0_i32_0 : i32, i32
  }
  func.func @transform_4(%arg0: i32) -> (i32, i32) {
    %c0_i32 = arith.constant 0 : i32
    %c0_i32_0 = arith.constant 0 : i32
    %c0_i32_1 = arith.constant 0 : i32
    return %c0_i32, %c0_i32_0 : i32, i32
  }
  func.func @transform_5(%arg0: i32) -> (i32, i32) {
    %c0_i32 = arith.constant 0 : i32
    %c0_i32_0 = arith.constant 0 : i32
    %c0_i32_1 = arith.constant 0 : i32
    return %c0_i32, %c0_i32_0 : i32, i32
  }
  func.func @transform_6(%arg0: i32) -> (i32, i32) {
    %c0_i32 = arith.constant 0 : i32
    %c0_i32_0 = arith.constant 0 : i32
    %c0_i32_1 = arith.constant 0 : i32
    return %c0_i32, %c0_i32_0 : i32, i32
  }
  func.func @transform_7(%arg0: i32) -> (i32, i32) {
    %c0_i32 = arith.constant 0 : i32
    %c0_i32_0 = arith.constant 0 : i32
    %c0_i32_1 = arith.constant 0 : i32
    return %c0_i32, %c0_i32_0 : i32, i32
  }
  func.func @transform_8(%arg0: i32) -> (i32, i32) {
    %c0_i32 = arith.constant 0 : i32
    %c0_i32_0 = arith.constant 0 : i32
    %c0_i32_1 = arith.constant 0 : i32
    return %c0_i32, %c0_i32_0 : i32, i32
  }
  func.func @transform_9(%arg0: i32) -> (i32, i32) {
    %c0_i32 = arith.constant 0 : i32
    %c0_i32_0 = arith.constant 0 : i32
    %c0_i32_1 = arith.constant 0 : i32
    return %c0_i32, %c0_i32_0 : i32, i32
  }
  func.func @transform_10(%arg0: i32) -> (i32, i32) {
    %c0_i32 = arith.constant 0 : i32
    %c0_i32_0 = arith.constant 0 : i32
    %c0_i32_1 = arith.constant 0 : i32
    return %c0_i32, %c0_i32_0 : i32, i32
  }
  func.func @transform_11(%arg0: i32) -> (i32, i32) {
    %c0_i32 = arith.constant 0 : i32
    %c0_i32_0 = arith.constant 0 : i32
    %c0_i32_1 = arith.constant 0 : i32
    return %c0_i32, %c0_i32_0 : i32, i32
  }
  func.func @transform_12(%arg0: i32) -> (i32, i32) {
    %c0_i32 = arith.constant 0 : i32
    %c0_i32_0 = arith.constant 0 : i32
    %c0_i32_1 = arith.constant 0 : i32
    return %c0_i32, %c0_i32_0 : i32, i32
  }
  func.func @transform_13(%arg0: i32) -> (i32, i32) {
    %c0_i32 = arith.constant 0 : i32
    %c0_i32_0 = arith.constant 0 : i32
    %c0_i32_1 = arith.constant 0 : i32
    return %c0_i32, %c0_i32_0 : i32, i32
  }
  func.func @transform_14(%arg0: i32) -> (i32, i32) {
    %c0_i32 = arith.constant 0 : i32
    %c0_i32_0 = arith.constant 0 : i32
    return %arg0, %c0_i32 : i32, i32
  }
}

</mosaic_0001>

<llo_original>
// kernel: chess_forward.1
$region0: #{chess_forward.1}
  #allocation0 [shape = 'u32[]', space=smem, size = 0x4, offset = 0x4, fixed_abs, tag = 'smem constant byte address 0x4 - core index']
  #allocation1 [shape = 'u32[144,128]{1,0:T(1,128)}', space=vmem, size = 0x12000, scoped, tag = 'internal scratch']
  %s0 = inlined_call_operand.vmem [shape: f32[16,1408], index: 0, kind: input, shape index: {}]
  %s1 = inlined_call_operand.hbm [shape: bf16[704,1024], index: 1, kind: input, shape index: {}]
  %s2 = inlined_call_operand.hbm [shape: f32[1,1024], index: 2, kind: input, shape index: {}]
  %s3 = inlined_call_operand.hbm [shape: bf16[1024,512], index: 3, kind: input, shape index: {}]
  %s4 = inlined_call_operand.hbm [shape: f32[1,512], index: 4, kind: input, shape index: {}]
  %s5 = inlined_call_operand.hbm [shape: bf16[512,256], index: 5, kind: input, shape index: {}]
  %s6 = inlined_call_operand.hbm [shape: f32[1,256], index: 6, kind: input, shape index: {}]
  %s7 = inlined_call_operand.hbm [shape: bf16[256,128], index: 7, kind: input, shape index: {}]
  %s8 = inlined_call_operand.hbm [shape: bf16[256,128], index: 8, kind: input, shape index: {}]
  %s9 = inlined_call_operand.hbm [shape: f32[1,128], index: 9, kind: input, shape index: {}]
  %s10 = inlined_call_operand.vmem [shape: bf16[128,64], index: 10, kind: input, shape index: {}]
  %s11 = inlined_call_operand.hbm [shape: f32[1,64], index: 11, kind: input, shape index: {}]
  %s12 = inlined_call_operand.vmem [shape: bf16[64,8], index: 12, kind: input, shape index: {}]
  %s13 = inlined_call_operand.hbm [shape: f32[1,8], index: 13, kind: input, shape index: {}]
  %s14 = inlined_call_operand.vmem [shape: f32[16,8], index: 14, kind: output, shape index: {}]
  %s15 = sld [smem:[#allocation0]]
  $region110: #{chess_forward.1} parent=0
    _
  %s17 = ssub.s32 1, %s15
  %s18 = scalar_select 0, %s17, %s15
  $region1: #{chess_forward.1} parent=0
    #allocation2 [shape = 'u8[1441792]{0}', space=vmem, size = 0x160000, scoped, tag = 'input window, operand 1, single buffered']
    #allocation3 [shape = 's32[1]{0}', space=sflag, size = 0x4, scoped, tag = 'scoped memory for chess_forward.1']
    #allocation4 [shape = 'u8[4096]{0}', space=vmem, size = 0x1000, scoped, tag = 'input window, operand 2, single buffered']
    #allocation5 [shape = 's32[1]{0}', space=sflag, size = 0x4, scoped, tag = 'scoped memory for chess_forward.1']
    #allocation6 [shape = 'u8[1048576]{0}', space=vmem, size = 0x100000, scoped, tag = 'input window, operand 3, single buffered']
    #allocation7 [shape = 'u8[2048]{0}', space=vmem, size = 0x800, scoped, tag = 'input window, operand 4, single buffered']
    #allocation8 [shape = 's32[1]{0}', space=sflag, size = 0x4, scoped, tag = 'scoped memory for chess_forward.1']
    #allocation9 [shape = 'u8[262144]{0}', space=vmem, size = 0x40000, scoped, tag = 'input window, operand 5, single buffered']
    #allocation10 [shape = 'u8[1024]{0}', space=vmem, size = 0x400, scoped, tag = 'input window, operand 6, single buffered']
    #allocation11 [shape = 's32[1]{0}', space=sflag, size = 0x4, scoped, tag = 'scoped memory for chess_forward.1']
    #allocation12 [shape = 'u8[65536]{0}', space=vmem, size = 0x10000, scoped, tag = 'input window, operand 7, single buffered']
    #allocation13 [shape = 'u8[65536]{0}', space=vmem, size = 0x10000, scoped, tag = 'input window, operand 8, single buffered']
    #allocation14 [shape = 's32[1]{0}', space=sflag, size = 0x4, scoped, tag = 'scoped memory for chess_forward.1']
    #allocation15 [shape = 'u8[512]{0}', space=vmem, size = 0x400, scoped, tag = 'input window, operand 9, single buffered']
    #allocation16 [shape = 'u8[512]{0}', space=vmem, size = 0x400, scoped, tag = 'input window, operand 11, single buffered']
    #allocation17 [shape = 's32[1]{0}', space=sflag, size = 0x4, scoped, tag = 'scoped memory for chess_forward.1']
    #allocation18 [shape = 'u8[512]{0}', space=vmem, size = 0x400, scoped, tag = 'input window, operand 13, single buffered']
    %19 = vsyncpa [#allocation3], 0
    %20 = vsyncpa [#allocation5], 0
    %21 = vsyncpa [#allocation8], 0
    %22 = vsyncpa [#allocation11], 0
    %23 = vsyncpa [#allocation14], 0
    %24 = vsyncpa [#allocation17], 0
    // Predicated region
    $region2: #{chess_forward.1} parent=1 // pred_check
      _
    $region3: #{chess_forward.1} parent=1 // pred_check_branch
      %26 = sbr.rel (0) target = $region5
    $region4: #{chess_forward.1} parent=1 // pred_region
      _
    $region5: #{chess_forward.1} parent=1 // pred_fallthru
      _
    // Predicated region
    $region6: #{chess_forward.1} parent=1 // pred_check
      _
    $region7: #{chess_forward.1} parent=1 // pred_check_branch
      %28 = sbr.rel (0) target = $region9
    $region8: #{chess_forward.1} parent=1 // pred_region
      %s30 = ssub.s32 45056, 45056
      %31 = vsyncadd [#allocation3], %s30
      %s32 = sshll.u32 [#allocation2], 4
      %s33 = int_to_ptr.vmem [resolvable:$true] %s32
      %38 = dma.hbm_to_vmem [thread:$0]  %s1, 45056, %s33, [#allocation3], 512, 512, 32
    $region9: #{chess_forward.1} parent=1 // pred_fallthru
      _
    // Predicated region
    $region10: #{chess_forward.1} parent=1 // pred_check
      _
    $region11: #{chess_forward.1} parent=1 // pred_check_branch
      %40 = sbr.rel (0) target = $region13
    $region12: #{chess_forward.1} parent=1 // pred_region
      %s42 = ssub.s32 128, 128
      %43 = vsyncadd [#allocation5], %s42
      %s45 = sshll.u32 [#allocation4], 4
      %s46 = int_to_ptr.vmem [resolvable:$true] %s45
      %48 = dma.hbm_to_vmem [thread:$0]  %s2, 128, %s46, [#allocation5]
    $region13: #{chess_forward.1} parent=1 // pred_fallthru
      _
    // Predicated region
    $region14: #{chess_forward.1} parent=1 // pred_check
      _
    $region15: #{chess_forward.1} parent=1 // pred_check_branch
      %50 = sbr.rel (0) target = $region17
    $region16: #{chess_forward.1} parent=1 // pred_region
      %s52 = ssub.s32 32768, 32768
      %53 = vsyncadd [#allocation5], %s52
      %s54 = sshll.u32 [#allocation6], 4
      %s55 = int_to_ptr.vmem [resolvable:$true] %s54
      %60 = dma.hbm_to_vmem [thread:$0]  %s3, 32768, %s55, [#allocation5], 256, 256, 16
    $region17: #{chess_forward.1} parent=1 // pred_fallthru
      _
    // Predicated region
    $region18: #{chess_forward.1} parent=1 // pred_check
      _
    $region19: #{chess_forward.1} parent=1 // pred_check_branch
      %62 = sbr.rel (0) target = $region21
    $region20: #{chess_forward.1} parent=1 // pred_region
      %s64 = ssub.s32 64, 64
      %65 = vsyncadd [#allocation8], %s64
      %s67 = sshll.u32 [#allocation7], 4
      %s68 = int_to_ptr.vmem [resolvable:$true] %s67
      %70 = dma.hbm_to_vmem [thread:$0]  %s4, 64, %s68, [#allocation8]
    $region21: #{chess_forward.1} parent=1 // pred_fallthru
      _
    // Predicated region
    $region22: #{chess_forward.1} parent=1 // pred_check
      _
    $region23: #{chess_forward.1} parent=1 // pred_check_branch
      %72 = sbr.rel (0) target = $region25
    $region24: #{chess_forward.1} parent=1 // pred_region
      %s74 = ssub.s32 8192, 8192
      %75 = vsyncadd [#allocation8], %s74
      %s76 = sshll.u32 [#allocation9], 4
      %s77 = int_to_ptr.vmem [resolvable:$true] %s76
      %82 = dma.hbm_to_vmem [thread:$0]  %s5, 8192, %s77, [#allocation8], 128, 128, 8
    $region25: #{chess_forward.1} parent=1 // pred_fallthru
      _
    // Predicated region
    $region26: #{chess_forward.1} parent=1 // pred_check
      _
    $region27: #{chess_forward.1} parent=1 // pred_check_branch
      %84 = sbr.rel (0) target = $region29
    $region28: #{chess_forward.1} parent=1 // pred_region
      %s86 = ssub.s32 32, 32
      %87 = vsyncadd [#allocation11], %s86
      %s89 = sshll.u32 [#allocation10], 4
      %s90 = int_to_ptr.vmem [resolvable:$true] %s89
      %92 = dma.hbm_to_vmem [thread:$0]  %s6, 32, %s90, [#allocation11]
    $region29: #{chess_forward.1} parent=1 // pred_fallthru
      _
    // Predicated region
    $region30: #{chess_forward.1} parent=1 // pred_check
      _
    $region31: #{chess_forward.1} parent=1 // pred_check_branch
      %94 = sbr.rel (0) target = $region33
    $region32: #{chess_forward.1} parent=1 // pred_region
      %s96 = ssub.s32 2048, 2048
      %97 = vsyncadd [#allocation11], %s96
      %s98 = sshll.u32 [#allocation12], 4
      %s99 = int_to_ptr.vmem [resolvable:$true] %s98
      %104 = dma.hbm_to_vmem [thread:$0]  %s7, 2048, %s99, [#allocation11], 64, 64, 4
    $region33: #{chess_forward.1} parent=1 // pred_fallthru
      _
    // Predicated region
    $region34: #{chess_forward.1} parent=1 // pred_check
      _
    $region35: #{chess_forward.1} parent=1 // pred_check_branch
      %106 = sbr.rel (0) target = $region37
    $region36: #{chess_forward.1} parent=1 // pred_region
      %s108 = ssub.s32 2048, 2048
      %109 = vsyncadd [#allocation14], %s108
      %s110 = sshll.u32 [#allocation13], 4
      %s111 = int_to_ptr.vmem [resolvable:$true] %s110
      %116 = dma.hbm_to_vmem [thread:$0]  %s8, 2048, %s111, [#allocation14], 64, 64, 4
    $region37: #{chess_forward.1} parent=1 // pred_fallthru
      _
    // Predicated region
    $region38: #{chess_forward.1} parent=1 // pred_check
      _
    $region39: #{chess_forward.1} parent=1 // pred_check_branch
      %118 = sbr.rel (0) target = $region41
    $region40: #{chess_forward.1} parent=1 // pred_region
      %s120 = ssub.s32 16, 16
      %121 = vsyncadd [#allocation14], %s120
      %s123 = sshll.u32 [#allocation15], 4
      %s124 = int_to_ptr.vmem [resolvable:$true] %s123
      %126 = dma.hbm_to_vmem [thread:$0]  %s9, 16, %s124, [#allocation14]
    $region41: #{chess_forward.1} parent=1 // pred_fallthru
      _
    // Predicated region
    $region42: #{chess_forward.1} parent=1 // pred_check
      _
    $region43: #{chess_forward.1} parent=1 // pred_check_branch
      %128 = sbr.rel (0) target = $region45
    $region44: #{chess_forward.1} parent=1 // pred_region
      _
    $region45: #{chess_forward.1} parent=1 // pred_fallthru
      _
    // Predicated region
    $region46: #{chess_forward.1} parent=1 // pred_check
      _
    $region47: #{chess_forward.1} parent=1 // pred_check_branch
      %130 = sbr.rel (0) target = $region49
    $region48: #{chess_forward.1} parent=1 // pred_region
      %s132 = ssub.s32 16, 16
      %133 = vsyncadd [#allocation17], %s132
      %s135 = sshll.u32 [#allocation16], 4
      %s136 = int_to_ptr.vmem [resolvable:$true] %s135
      %138 = dma.hbm_to_vmem [thread:$0]  %s11, 16, %s136, [#allocation17]
    $region49: #{chess_forward.1} parent=1 // pred_fallthru
      _
    // Predicated region
    $region50: #{chess_forward.1} parent=1 // pred_check
      _
    $region51: #{chess_forward.1} parent=1 // pred_check_branch
      %140 = sbr.rel (0) target = $region53
    $region52: #{chess_forward.1} parent=1 // pred_region
      _
    $region53: #{chess_forward.1} parent=1 // pred_fallthru
      _
    // Predicated region
    $region54: #{chess_forward.1} parent=1 // pred_check
      _
    $region55: #{chess_forward.1} parent=1 // pred_check_branch
      %142 = sbr.rel (0) target = $region57
    $region56: #{chess_forward.1} parent=1 // pred_region
      %s144 = ssub.s32 16, 16
      %145 = vsyncadd [#allocation17], %s144
      %s147 = sshll.u32 [#allocation18], 4
      %s148 = int_to_ptr.vmem [resolvable:$true] %s147
      %150 = dma.hbm_to_vmem [thread:$0]  %s13, 16, %s148, [#allocation17]
    $region57: #{chess_forward.1} parent=1 // pred_fallthru
      _
    // Predicated region
    $region58: #{chess_forward.1} parent=1 // pred_check
      _
    $region59: #{chess_forward.1} parent=1 // pred_check_branch
      %152 = sbr.rel (0) target = $region61
    $region60: #{chess_forward.1} parent=1 // pred_region
      %153 = dma.done [#allocation3], 45056
    $region61: #{chess_forward.1} parent=1 // pred_fallthru
      _
    // Predicated region
    $region62: #{chess_forward.1} parent=1 // pred_check
      _
    $region63: #{chess_forward.1} parent=1 // pred_check_branch
      %155 = sbr.rel (0) target = $region65
    $region64: #{chess_forward.1} parent=1 // pred_region
      %156 = dma.done [#allocation5], 128
    $region65: #{chess_forward.1} parent=1 // pred_fallthru
      _
    // Predicated region
    $region66: #{chess_forward.1} parent=1 // pred_check
      _
    $region67: #{chess_forward.1} parent=1 // pred_check_branch
      %158 = sbr.rel (0) target = $region69
    $region68: #{chess_forward.1} parent=1 // pred_region
      %159 = dma.done [#allocation5], 32768
    $region69: #{chess_forward.1} parent=1 // pred_fallthru
      _
    // Predicated region
    $region70: #{chess_forward.1} parent=1 // pred_check
      _
    $region71: #{chess_forward.1} parent=1 // pred_check_branch
      %161 = sbr.rel (0) target = $region73
    $region72: #{chess_forward.1} parent=1 // pred_region
      %162 = dma.done [#allocation8], 64
    $region73: #{chess_forward.1} parent=1 // pred_fallthru
      _
    // Predicated region
    $region74: #{chess_forward.1} parent=1 // pred_check
      _
    $region75: #{chess_forward.1} parent=1 // pred_check_branch
      %164 = sbr.rel (0) target = $region77
    $region76: #{chess_forward.1} parent=1 // pred_region
      %165 = dma.done [#allocation8], 8192
    $region77: #{chess_forward.1} parent=1 // pred_fallthru
      _
    // Predicated region
    $region78: #{chess_forward.1} parent=1 // pred_check
      _
    $region79: #{chess_forward.1} parent=1 // pred_check_branch
      %167 = sbr.rel (0) target = $region81
    $region80: #{chess_forward.1} parent=1 // pred_region
      %168 = dma.done [#allocation11], 32
    $region81: #{chess_forward.1} parent=1 // pred_fallthru
      _
    // Predicated region
    $region82: #{chess_forward.1} parent=1 // pred_check
      _
    $region83: #{chess_forward.1} parent=1 // pred_check_branch
      %170 = sbr.rel (0) target = $region85
    $region84: #{chess_forward.1} parent=1 // pred_region
      %171 = dma.done [#allocation11], 2048
    $region85: #{chess_forward.1} parent=1 // pred_fallthru
      _
    // Predicated region
    $region86: #{chess_forward.1} parent=1 // pred_check
      _
    $region87: #{chess_forward.1} parent=1 // pred_check_branch
      %173 = sbr.rel (0) target = $region89
    $region88: #{chess_forward.1} parent=1 // pred_region
      %174 = dma.done [#allocation14], 2048
    $region89: #{chess_forward.1} parent=1 // pred_fallthru
      _
    // Predicated region
    $region90: #{chess_forward.1} parent=1 // pred_check
      _
    $region91: #{chess_forward.1} parent=1 // pred_check_branch
      %176 = sbr.rel (0) target = $region93
    $region92: #{chess_forward.1} parent=1 // pred_region
      %177 = dma.done [#allocation14], 16
    $region93: #{chess_forward.1} parent=1 // pred_fallthru
      _
    // Predicated region
    $region94: #{chess_forward.1} parent=1 // pred_check
      _
    $region95: #{chess_forward.1} parent=1 // pred_check_branch
      %179 = sbr.rel (0) target = $region97
    $region96: #{chess_forward.1} parent=1 // pred_region
      %180 = dma.done [#allocation17], 16
    $region97: #{chess_forward.1} parent=1 // pred_fallthru
      _
    // Predicated region
    $region98: #{chess_forward.1} parent=1 // pred_check
      _
    $region99: #{chess_forward.1} parent=1 // pred_check_branch
      %182 = sbr.rel (0) target = $region101
    $region100: #{chess_forward.1} parent=1 // pred_region
      %183 = dma.done [#allocation17], 16
    $region101: #{chess_forward.1} parent=1 // pred_fallthru
      _
    %v185 = vld [vmem:[%s0] sm:$0xff]
    %v186 = vld [vmem:[%s0 + $0x8] sm:$0xff]
    %v187 = vld [vmem:[%s0 + $0x10] sm:$0xff]
    %v188 = vld [vmem:[%s0 + $0x18] sm:$0xff]
    %v189 = vld [vmem:[%s0 + $0x20] sm:$0xff]
    %v190 = vld [vmem:[%s0 + $0x28] sm:$0xff]
    %v191 = vld [vmem:[%s0 + $0x30] sm:$0xff]
    %v192 = vld [vmem:[%s0 + $0x38] sm:$0xff]
    %v193 = vld [vmem:[%s0 + $0x40] sm:$0xff]
    %v194 = vld [vmem:[%s0 + $0x48] sm:$0xff]
    %v195 = vld [vmem:[%s0 + $0x50] sm:$0xff]
    %v196 = vld [vmem:[%s0 + $0x58] sm:$0xff]
    %v197 = vld [vmem:[%s0 + $0x60] sm:$0xff]
    %v198 = vld [vmem:[%s0 + $0x68] sm:$0xff]
    %v199 = vld [vmem:[%s0 + $0x70] sm:$0xff]
    %v200 = vld [vmem:[%s0 + $0x78] sm:$0xff]
    %v201 = vld [vmem:[%s0 + $0x80] sm:$0xff]
    %v202 = vld [vmem:[%s0 + $0x88] sm:$0xff]
    %v203 = vld [vmem:[%s0 + $0x90] sm:$0xff]
    %v204 = vld [vmem:[%s0 + $0x98] sm:$0xff]
    %v205 = vld [vmem:[%s0 + $0xa0] sm:$0xff]
    %v206 = vld [vmem:[%s0 + $0xa8] sm:$0xff]
    %219 = vrot.lane.b32.xlu0 %v190, 64
    %v220 = vpop.permute.xlu0 %219
    %221 = vrot.lane.b32.xlu0 %v191, 64
    %v222 = vpop.permute.xlu0 %221
    %223 = vrot.lane.b32.xlu0 %v192, 64
    %v224 = vpop.permute.xlu0 %223
    %225 = vrot.lane.b32.xlu0 %v193, 64
    %v226 = vpop.permute.xlu0 %225
    %227 = vrot.lane.b32.xlu0 %v194, 64
    %v228 = vpop.permute.xlu0 %227
    %229 = vrot.lane.b32.xlu0 %v195, 64
    %v230 = vpop.permute.xlu0 %229
    %231 = vrot.lane.b32.xlu0 %v201, 64
    %v232 = vpop.permute.xlu0 %231
    %233 = vrot.lane.b32.xlu0 %v202, 64
    %v234 = vpop.permute.xlu0 %233
    %235 = vrot.lane.b32.xlu0 %v203, 64
    %v236 = vpop.permute.xlu0 %235
    %237 = vrot.lane.b32.xlu0 %v204, 64
    %v238 = vpop.permute.xlu0 %237
    %239 = vrot.lane.b32.xlu0 %v205, 64
    %v240 = vpop.permute.xlu0 %239
    %241 = vrot.lane.b32.xlu0 %v206, 64
    %v242 = vpop.permute.xlu0 %241
    %vm243 = vcmask 523264
    %v244 = vsel %vm243, %v220, %v222
    %v245 = vsel %vm243, %v222, %v224
    %v246 = vsel %vm243, %v224, %v226
    %v247 = vsel %vm243, %v226, %v228
    %v248 = vsel %vm243, %v228, %v230
    %v249 = vsel %vm243, %v232, %v234
    %v250 = vsel %vm243, %v234, %v236
    %v251 = vsel %vm243, %v236, %v238
    %v252 = vsel %vm243, %v238, %v240
    %v253 = vsel %vm243, %v240, %v242
    %v266 = vpack.c.bf16 %v196, %v185
    %v267 = vpack.c.bf16 %v197, %v186
    %v268 = vpack.c.bf16 %v198, %v187
    %v269 = vpack.c.bf16 %v199, %v188
    %v270 = vpack.c.bf16 %v200, %v189
    %v271 = vpack.c.bf16 %v201, %v190
    %v272 = vpack.c.bf16 %v249, %v244
    %v273 = vpack.c.bf16 %v250, %v245
    %v274 = vpack.c.bf16 %v251, %v246
    %v275 = vpack.c.bf16 %v252, %v247
    %v276 = vpack.c.bf16 %v253, %v248
    %v277 = vpack.c.bf16 %v242, %v230
    %v278 = vld [vmem:[#allocation2] sm:$0xff]
    %v279 = vld [vmem:[#allocation2 + $0x8] sm:$0xff]
    %v280 = vld [vmem:[#allocation2 + $0x10] sm:$0xff]
    %v281 = vld [vmem:[#allocation2 + $0x18] sm:$0xff]
    %v282 = vld [vmem:[#allocation2 + $0x20] sm:$0xff]
    %v283 = vld [vmem:[#allocation2 + $0x28] sm:$0xff]
    %v284 = vld [vmem:[#allocation2 + $0x30] sm:$0xff]
    %v285 = vld [vmem:[#allocation2 + $0x38] sm:$0xff]
    %v286 = vld [vmem:[#allocation2 + $0x40] sm:$0xff]
    %v287 = vld [vmem:[#allocation2 + $0x48] sm:$0xff]
    %v288 = vld [vmem:[#allocation2 + $0x50] sm:$0xff]
    %v289 = vld [vmem:[#allocation2 + $0x58] sm:$0xff]
    %v290 = vld [vmem:[#allocation2 + $0x60] sm:$0xff]
    %v291 = vld [vmem:[#allocation2 + $0x68] sm:$0xff]
    %v292 = vld [vmem:[#allocation2 + $0x70] sm:$0xff]
    %v293 = vld [vmem:[#allocation2 + $0x78] sm:$0xff]
    %v294 = vld [vmem:[#allocation2 + $0x80] sm:$0xff]
    %v295 = vld [vmem:[#allocation2 + $0x88] sm:$0xff]
    %v296 = vld [vmem:[#allocation2 + $0x90] sm:$0xff]
    %v297 = vld [vmem:[#allocation2 + $0x98] sm:$0xff]
    %v298 = vld [vmem:[#allocation2 + $0xa0] sm:$0xff]
    %v299 = vld [vmem:[#allocation2 + $0xa8] sm:$0xff]
    %v300 = vld [vmem:[#allocation2 + $0xb0] sm:$0xff]
    %v301 = vld [vmem:[#allocation2 + $0xb8] sm:$0xff]
    %v302 = vld [vmem:[#allocation2 + $0xc0] sm:$0xff]
    %v303 = vld [vmem:[#allocation2 + $0xc8] sm:$0xff]
    %v304 = vld [vmem:[#allocation2 + $0xd0] sm:$0xff]
    %v305 = vld [vmem:[#allocation2 + $0xd8] sm:$0xff]
    %v306 = vld [vmem:[#allocation2 + $0xe0] sm:$0xff]
    %v307 = vld [vmem:[#allocation2 + $0xe8] sm:$0xff]
    %v308 = vld [vmem:[#allocation2 + $0xf0] sm:$0xff]
    %v309 = vld [vmem:[#allocation2 + $0xf8] sm:$0xff]
    %v310 = vld [vmem:[#allocation2 + $0x100] sm:$0xff]
    %v311 = vld [vmem:[#allocation2 + $0x108] sm:$0xff]
    %v312 = vld [vmem:[#allocation2 + $0x110] sm:$0xff]
    %v313 = vld [vmem:[#allocation2 + $0x118] sm:$0xff]
    %v314 = vld [vmem:[#allocation2 + $0x120] sm:$0xff]
    %v315 = vld [vmem:[#allocation2 + $0x128] sm:$0xff]
    %v316 = vld [vmem:[#allocation2 + $0x130] sm:$0xff]
    %v317 = vld [vmem:[#allocation2 + $0x138] sm:$0xff]
    %v318 = vld [vmem:[#allocation2 + $0x140] sm:$0xff]
    %v319 = vld [vmem:[#allocation2 + $0x148] sm:$0xff]
    %v320 = vld [vmem:[#allocation2 + $0x150] sm:$0xff]
    %v321 = vld [vmem:[#allocation2 + $0x158] sm:$0xff]
    %v322 = vld [vmem:[#allocation2 + $0x160] sm:$0xff]
    %v323 = vld [vmem:[#allocation2 + $0x168] sm:$0xff]
    %v324 = vld [vmem:[#allocation2 + $0x170] sm:$0xff]
    %v325 = vld [vmem:[#allocation2 + $0x178] sm:$0xff]
    %v326 = vld [vmem:[#allocation2 + $0x180] sm:$0xff]
    %v327 = vld [vmem:[#allocation2 + $0x188] sm:$0xff]
    %v328 = vld [vmem:[#allocation2 + $0x190] sm:$0xff]
    %v329 = vld [vmem:[#allocation2 + $0x198] sm:$0xff]
    %v330 = vld [vmem:[#allocation2 + $0x1a0] sm:$0xff]
    %v331 = vld [vmem:[#allocation2 + $0x1a8] sm:$0xff]
    %v332 = vld [vmem:[#allocation2 + $0x1b0] sm:$0xff]
    %v333 = vld [vmem:[#allocation2 + $0x1b8] sm:$0xff]
    %v334 = vld [vmem:[#allocation2 + $0x1c0] sm:$0xff]
    %v335 = vld [vmem:[#allocation2 + $0x1c8] sm:$0xff]
    %v336 = vld [vmem:[#allocation2 + $0x1d0] sm:$0xff]
    %v337 = vld [vmem:[#allocation2 + $0x1d8] sm:$0xff]
    %v338 = vld [vmem:[#allocation2 + $0x1e0] sm:$0xff]
    %v339 = vld [vmem:[#allocation2 + $0x1e8] sm:$0xff]
    %v340 = vld [vmem:[#allocation2 + $0x1f0] sm:$0xff]
    %v341 = vld [vmem:[#allocation2 + $0x1f8] sm:$0xff]
    %v342 = vld [vmem:[#allocation2 + $0x200] sm:$0xff]
    %v343 = vld [vmem:[#allocation2 + $0x208] sm:$0xff]
    %v344 = vld [vmem:[#allocation2 + $0x210] sm:$0xff]
    %v345 = vld [vmem:[#allocation2 + $0x218] sm:$0xff]
    %v346 = vld [vmem:[#allocation2 + $0x220] sm:$0xff]
    %v347 = vld [vmem:[#allocation2 + $0x228] sm:$0xff]
    %v348 = vld [vmem:[#allocation2 + $0x230] sm:$0xff]
    %v349 = vld [vmem:[#allocation2 + $0x238] sm:$0xff]
    %v350 = vld [vmem:[#allocation2 + $0x240] sm:$0xff]
    %v351 = vld [vmem:[#allocation2 + $0x248] sm:$0xff]
    %v352 = vld [vmem:[#allocation2 + $0x250] sm:$0xff]
    %v353 = vld [vmem:[#allocation2 + $0x258] sm:$0xff]
    %v354 = vld [vmem:[#allocation2 + $0x260] sm:$0xff]
    %v355 = vld [vmem:[#allocation2 + $0x268] sm:$0xff]
    %v356 = vld [vmem:[#allocation2 + $0x270] sm:$0xff]
    %v357 = vld [vmem:[#allocation2 + $0x278] sm:$0xff]
    %v358 = vld [vmem:[#allocation2 + $0x280] sm:$0xff]
    %v359 = vld [vmem:[#allocation2 + $0x288] sm:$0xff]
    %v360 = vld [vmem:[#allocation2 + $0x290] sm:$0xff]
    %v361 = vld [vmem:[#allocation2 + $0x298] sm:$0xff]
    %v362 = vld [vmem:[#allocation2 + $0x2a0] sm:$0xff]
    %v363 = vld [vmem:[#allocation2 + $0x2a8] sm:$0xff]
    %v364 = vld [vmem:[#allocation2 + $0x2b0] sm:$0xff]
    %v365 = vld [vmem:[#allocation2 + $0x2b8] sm:$0xff]
    %v366 = vld [vmem:[#allocation2 + $0x2c0] sm:$0xff]
    %v367 = vld [vmem:[#allocation2 + $0x2c8] sm:$0xff]
    %v368 = vld [vmem:[#allocation2 + $0x2d0] sm:$0xff]
    %v369 = vld [vmem:[#allocation2 + $0x2d8] sm:$0xff]
    %v370 = vld [vmem:[#allocation2 + $0x2e0] sm:$0xff]
    %v371 = vld [vmem:[#allocation2 + $0x2e8] sm:$0xff]
    %v372 = vld [vmem:[#allocation2 + $0x2f0] sm:$0xff]
    %v373 = vld [vmem:[#allocation2 + $0x2f8] sm:$0xff]
    %v374 = vld [vmem:[#allocation2 + $0x300] sm:$0xff]
    %v375 = vld [vmem:[#allocation2 + $0x308] sm:$0xff]
    %v376 = vld [vmem:[#allocation2 + $0x310] sm:$0xff]
    %v377 = vld [vmem:[#allocation2 + $0x318] sm:$0xff]
    %v378 = vld [vmem:[#allocation2 + $0x320] sm:$0xff]
    %v379 = vld [vmem:[#allocation2 + $0x328] sm:$0xff]
    %v380 = vld [vmem:[#allocation2 + $0x330] sm:$0xff]
    %v381 = vld [vmem:[#allocation2 + $0x338] sm:$0xff]
    %v382 = vld [vmem:[#allocation2 + $0x340] sm:$0xff]
    %v383 = vld [vmem:[#allocation2 + $0x348] sm:$0xff]
    %v384 = vld [vmem:[#allocation2 + $0x350] sm:$0xff]
    %v385 = vld [vmem:[#allocation2 + $0x358] sm:$0xff]
    %v386 = vld [vmem:[#allocation2 + $0x360] sm:$0xff]
    %v387 = vld [vmem:[#allocation2 + $0x368] sm:$0xff]
    %v388 = vld [vmem:[#allocation2 + $0x370] sm:$0xff]
    %v389 = vld [vmem:[#allocation2 + $0x378] sm:$0xff]
    %v390 = vld [vmem:[#allocation2 + $0x380] sm:$0xff]
    %v391 = vld [vmem:[#allocation2 + $0x388] sm:$0xff]
    %v392 = vld [vmem:[#allocation2 + $0x390] sm:$0xff]
    %v393 = vld [vmem:[#allocation2 + $0x398] sm:$0xff]
    %v394 = vld [vmem:[#allocation2 + $0x3a0] sm:$0xff]
    %v395 = vld [vmem:[#allocation2 + $0x3a8] sm:$0xff]
    %v396 = vld [vmem:[#allocation2 + $0x3b0] sm:$0xff]
    %v397 = vld [vmem:[#allocation2 + $0x3b8] sm:$0xff]
    %v398 = vld [vmem:[#allocation2 + $0x3c0] sm:$0xff]
    %v399 = vld [vmem:[#allocation2 + $0x3c8] sm:$0xff]
    %v400 = vld [vmem:[#allocation2 + $0x3d0] sm:$0xff]
    %v401 = vld [vmem:[#allocation2 + $0x3d8] sm:$0xff]
    %v402 = vld [vmem:[#allocation2 + $0x3e0] sm:$0xff]
    %v403 = vld [vmem:[#allocation2 + $0x3e8] sm:$0xff]
    %v404 = vld [vmem:[#allocation2 + $0x3f0] sm:$0xff]
    %v405 = vld [vmem:[#allocation2 + $0x3f8] sm:$0xff]
    %v406 = vld [vmem:[#allocation2 + $0x400] sm:$0xff]
    %v407 = vld [vmem:[#allocation2 + $0x408] sm:$0xff]
    %v408 = vld [vmem:[#allocation2 + $0x410] sm:$0xff]
    %v409 = vld [vmem:[#allocation2 + $0x418] sm:$0xff]
    %v410 = vld [vmem:[#allocation2 + $0x420] sm:$0xff]
    %v411 = vld [vmem:[#allocation2 + $0x428] sm:$0xff]
    %v412 = vld [vmem:[#allocation2 + $0x430] sm:$0xff]
    %v413 = vld [vmem:[#allocation2 + $0x438] sm:$0xff]
    %v414 = vld [vmem:[#allocation2 + $0x440] sm:$0xff]
    %v415 = vld [vmem:[#allocation2 + $0x448] sm:$0xff]
    %v416 = vld [vmem:[#allocation2 + $0x450] sm:$0xff]
    %v417 = vld [vmem:[#allocation2 + $0x458] sm:$0xff]
    %v418 = vld [vmem:[#allocation2 + $0x460] sm:$0xff]
    %v419 = vld [vmem:[#allocation2 + $0x468] sm:$0xff]
    %v420 = vld [vmem:[#allocation2 + $0x470] sm:$0xff]
    %v421 = vld [vmem:[#allocation2 + $0x478] sm:$0xff]
    %v422 = vld [vmem:[#allocation2 + $0x480] sm:$0xff]
    %v423 = vld [vmem:[#allocation2 + $0x488] sm:$0xff]
    %v424 = vld [vmem:[#allocation2 + $0x490] sm:$0xff]
    %v425 = vld [vmem:[#allocation2 + $0x498] sm:$0xff]
    %v426 = vld [vmem:[#allocation2 + $0x4a0] sm:$0xff]
    %v427 = vld [vmem:[#allocation2 + $0x4a8] sm:$0xff]
    %v428 = vld [vmem:[#allocation2 + $0x4b0] sm:$0xff]
    %v429 = vld [vmem:[#allocation2 + $0x4b8] sm:$0xff]
    %v430 = vld [vmem:[#allocation2 + $0x4c0] sm:$0xff]
    %v431 = vld [vmem:[#allocation2 + $0x4c8] sm:$0xff]
    %v432 = vld [vmem:[#allocation2 + $0x4d0] sm:$0xff]
    %v433 = vld [vmem:[#allocation2 + $0x4d8] sm:$0xff]
    %v434 = vld [vmem:[#allocation2 + $0x4e0] sm:$0xff]
    %v435 = vld [vmem:[#allocation2 + $0x4e8] sm:$0xff]
    %v436 = vld [vmem:[#allocation2 + $0x4f0] sm:$0xff]
    %v437 = vld [vmem:[#allocation2 + $0x4f8] sm:$0xff]
    %v438 = vld [vmem:[#allocation2 + $0x500] sm:$0xff]
    %v439 = vld [vmem:[#allocation2 + $0x508] sm:$0xff]
    %v440 = vld [vmem:[#allocation2 + $0x510] sm:$0xff]
    %v441 = vld [vmem:[#allocation2 + $0x518] sm:$0xff]
    %v442 = vld [vmem:[#allocation2 + $0x520] sm:$0xff]
    %v443 = vld [vmem:[#allocation2 + $0x528] sm:$0xff]
    %v444 = vld [vmem:[#allocation2 + $0x530] sm:$0xff]
    %v445 = vld [vmem:[#allocation2 + $0x538] sm:$0xff]
    %v446 = vld [vmem:[#allocation2 + $0x540] sm:$0xff]
    %v447 = vld [vmem:[#allocation2 + $0x548] sm:$0xff]
    %v448 = vld [vmem:[#allocation2 + $0x550] sm:$0xff]
    %v449 = vld [vmem:[#allocation2 + $0x558] sm:$0xff]
    %v450 = vld [vmem:[#allocation2 + $0x560] sm:$0xff]
    %v451 = vld [vmem:[#allocation2 + $0x568] sm:$0xff]
    %v452 = vld [vmem:[#allocation2 + $0x570] sm:$0xff]
    %v453 = vld [vmem:[#allocation2 + $0x578] sm:$0xff]
    %v454 = vld [vmem:[#allocation2 + $0x580] sm:$0xff]
    %v455 = vld [vmem:[#allocation2 + $0x588] sm:$0xff]
    %v456 = vld [vmem:[#allocation2 + $0x590] sm:$0xff]
    %v457 = vld [vmem:[#allocation2 + $0x598] sm:$0xff]
    %v458 = vld [vmem:[#allocation2 + $0x5a0] sm:$0xff]
    %v459 = vld [vmem:[#allocation2 + $0x5a8] sm:$0xff]
    %v460 = vld [vmem:[#allocation2 + $0x5b0] sm:$0xff]
    %v461 = vld [vmem:[#allocation2 + $0x5b8] sm:$0xff]
    %v462 = vld [vmem:[#allocation2 + $0x5c0] sm:$0xff]
    %v463 = vld [vmem:[#allocation2 + $0x5c8] sm:$0xff]
    %v464 = vld [vmem:[#allocation2 + $0x5d0] sm:$0xff]
    %v465 = vld [vmem:[#allocation2 + $0x5d8] sm:$0xff]
    %v466 = vld [vmem:[#allocation2 + $0x5e0] sm:$0xff]
    %v467 = vld [vmem:[#allocation2 + $0x5e8] sm:$0xff]
    %v468 = vld [vmem:[#allocation2 + $0x5f0] sm:$0xff]
    %v469 = vld [vmem:[#allocation2 + $0x5f8] sm:$0xff]
    %v470 = vld [vmem:[#allocation2 + $0x600] sm:$0xff]
    %v471 = vld [vmem:[#allocation2 + $0x608] sm:$0xff]
    %v472 = vld [vmem:[#allocation2 + $0x610] sm:$0xff]
    %v473 = vld [vmem:[#allocation2 + $0x618] sm:$0xff]
    %v474 = vld [vmem:[#allocation2 + $0x620] sm:$0xff]
    %v475 = vld [vmem:[#allocation2 + $0x628] sm:$0xff]
    %v476 = vld [vmem:[#allocation2 + $0x630] sm:$0xff]
    %v477 = vld [vmem:[#allocation2 + $0x638] sm:$0xff]
    %v478 = vld [vmem:[#allocation2 + $0x640] sm:$0xff]
    %v479 = vld [vmem:[#allocation2 + $0x648] sm:$0xff]
    %v480 = vld [vmem:[#allocation2 + $0x650] sm:$0xff]
    %v481 = vld [vmem:[#allocation2 + $0x658] sm:$0xff]
    %v482 = vld [vmem:[#allocation2 + $0x660] sm:$0xff]
    %v483 = vld [vmem:[#allocation2 + $0x668] sm:$0xff]
    %v484 = vld [vmem:[#allocation2 + $0x670] sm:$0xff]
    %v485 = vld [vmem:[#allocation2 + $0x678] sm:$0xff]
    %v486 = vld [vmem:[#allocation2 + $0x680] sm:$0xff]
    %v487 = vld [vmem:[#allocation2 + $0x688] sm:$0xff]
    %v488 = vld [vmem:[#allocation2 + $0x690] sm:$0xff]
    %v489 = vld [vmem:[#allocation2 + $0x698] sm:$0xff]
    %v490 = vld [vmem:[#allocation2 + $0x6a0] sm:$0xff]
    %v491 = vld [vmem:[#allocation2 + $0x6a8] sm:$0xff]
    %v492 = vld [vmem:[#allocation2 + $0x6b0] sm:$0xff]
    %v493 = vld [vmem:[#allocation2 + $0x6b8] sm:$0xff]
    %v494 = vld [vmem:[#allocation2 + $0x6c0] sm:$0xff]
    %v495 = vld [vmem:[#allocation2 + $0x6c8] sm:$0xff]
    %v496 = vld [vmem:[#allocation2 + $0x6d0] sm:$0xff]
    %v497 = vld [vmem:[#allocation2 + $0x6d8] sm:$0xff]
    %v498 = vld [vmem:[#allocation2 + $0x6e0] sm:$0xff]
    %v499 = vld [vmem:[#allocation2 + $0x6e8] sm:$0xff]
    %v500 = vld [vmem:[#allocation2 + $0x6f0] sm:$0xff]
    %v501 = vld [vmem:[#allocation2 + $0x6f8] sm:$0xff]
    %v502 = vld [vmem:[#allocation2 + $0x700] sm:$0xff]
    %v503 = vld [vmem:[#allocation2 + $0x708] sm:$0xff]
    %v504 = vld [vmem:[#allocation2 + $0x710] sm:$0xff]
    %v505 = vld [vmem:[#allocation2 + $0x718] sm:$0xff]
    %v506 = vld [vmem:[#allocation2 + $0x720] sm:$0xff]
    %v507 = vld [vmem:[#allocation2 + $0x728] sm:$0xff]
    %v508 = vld [vmem:[#allocation2 + $0x730] sm:$0xff]
    %v509 = vld [vmem:[#allocation2 + $0x738] sm:$0xff]
    %v510 = vld [vmem:[#allocation2 + $0x740] sm:$0xff]
    %v511 = vld [vmem:[#allocation2 + $0x748] sm:$0xff]
    %v512 = vld [vmem:[#allocation2 + $0x750] sm:$0xff]
    %v513 = vld [vmem:[#allocation2 + $0x758] sm:$0xff]
    %v514 = vld [vmem:[#allocation2 + $0x760] sm:$0xff]
    %v515 = vld [vmem:[#allocation2 + $0x768] sm:$0xff]
    %v516 = vld [vmem:[#allocation2 + $0x770] sm:$0xff]
    %v517 = vld [vmem:[#allocation2 + $0x778] sm:$0xff]
    %v518 = vld [vmem:[#allocation2 + $0x780] sm:$0xff]
    %v519 = vld [vmem:[#allocation2 + $0x788] sm:$0xff]
    %v520 = vld [vmem:[#allocation2 + $0x790] sm:$0xff]
    %v521 = vld [vmem:[#allocation2 + $0x798] sm:$0xff]
    %v522 = vld [vmem:[#allocation2 + $0x7a0] sm:$0xff]
    %v523 = vld [vmem:[#allocation2 + $0x7a8] sm:$0xff]
    %v524 = vld [vmem:[#allocation2 + $0x7b0] sm:$0xff]
    %v525 = vld [vmem:[#allocation2 + $0x7b8] sm:$0xff]
    %v526 = vld [vmem:[#allocation2 + $0x7c0] sm:$0xff]
    %v527 = vld [vmem:[#allocation2 + $0x7c8] sm:$0xff]
    %v528 = vld [vmem:[#allocation2 + $0x7d0] sm:$0xff]
    %v529 = vld [vmem:[#allocation2 + $0x7d8] sm:$0xff]
    %v530 = vld [vmem:[#allocation2 + $0x7e0] sm:$0xff]
    %v531 = vld [vmem:[#allocation2 + $0x7e8] sm:$0xff]
    %v532 = vld [vmem:[#allocation2 + $0x7f0] sm:$0xff]
    %v533 = vld [vmem:[#allocation2 + $0x7f8] sm:$0xff]
    %v534 = vld [vmem:[#allocation2 + $0x800] sm:$0xff]
    %v535 = vld [vmem:[#allocation2 + $0x808] sm:$0xff]
    %v536 = vld [vmem:[#allocation2 + $0x810] sm:$0xff]
    %v537 = vld [vmem:[#allocation2 + $0x818] sm:$0xff]
    %v538 = vld [vmem:[#allocation2 + $0x820] sm:$0xff]
    %v539 = vld [vmem:[#allocation2 + $0x828] sm:$0xff]
    %v540 = vld [vmem:[#allocation2 + $0x830] sm:$0xff]
    %v541 = vld [vmem:[#allocation2 + $0x838] sm:$0xff]
    %v542 = vld [vmem:[#allocation2 + $0x840] sm:$0xff]
    %v543 = vld [vmem:[#allocation2 + $0x848] sm:$0xff]
    %v544 = vld [vmem:[#allocation2 + $0x850] sm:$0xff]
    %v545 = vld [vmem:[#allocation2 + $0x858] sm:$0xff]
    %v546 = vld [vmem:[#allocation2 + $0x860] sm:$0xff]
    %v547 = vld [vmem:[#allocation2 + $0x868] sm:$0xff]
    %v548 = vld [vmem:[#allocation2 + $0x870] sm:$0xff]
    %v549 = vld [vmem:[#allocation2 + $0x878] sm:$0xff]
    %v550 = vld [vmem:[#allocation2 + $0x880] sm:$0xff]
    %v551 = vld [vmem:[#allocation2 + $0x888] sm:$0xff]
    %v552 = vld [vmem:[#allocation2 + $0x890] sm:$0xff]
    %v553 = vld [vmem:[#allocation2 + $0x898] sm:$0xff]
    %v554 = vld [vmem:[#allocation2 + $0x8a0] sm:$0xff]
    %v555 = vld [vmem:[#allocation2 + $0x8a8] sm:$0xff]
    %v556 = vld [vmem:[#allocation2 + $0x8b0] sm:$0xff]
    %v557 = vld [vmem:[#allocation2 + $0x8b8] sm:$0xff]
    %v558 = vld [vmem:[#allocation2 + $0x8c0] sm:$0xff]
    %v559 = vld [vmem:[#allocation2 + $0x8c8] sm:$0xff]
    %v560 = vld [vmem:[#allocation2 + $0x8d0] sm:$0xff]
    %v561 = vld [vmem:[#allocation2 + $0x8d8] sm:$0xff]
    %v562 = vld [vmem:[#allocation2 + $0x8e0] sm:$0xff]
    %v563 = vld [vmem:[#allocation2 + $0x8e8] sm:$0xff]
    %v564 = vld [vmem:[#allocation2 + $0x8f0] sm:$0xff]
    %v565 = vld [vmem:[#allocation2 + $0x8f8] sm:$0xff]
    %v566 = vld [vmem:[#allocation2 + $0x900] sm:$0xff]
    %v567 = vld [vmem:[#allocation2 + $0x908] sm:$0xff]
    %v568 = vld [vmem:[#allocation2 + $0x910] sm:$0xff]
    %v569 = vld [vmem:[#allocation2 + $0x918] sm:$0xff]
    %v570 = vld [vmem:[#allocation2 + $0x920] sm:$0xff]
    %v571 = vld [vmem:[#allocation2 + $0x928] sm:$0xff]
    %v572 = vld [vmem:[#allocation2 + $0x930] sm:$0xff]
    %v573 = vld [vmem:[#allocation2 + $0x938] sm:$0xff]
    %v574 = vld [vmem:[#allocation2 + $0x940] sm:$0xff]
    %v575 = vld [vmem:[#allocation2 + $0x948] sm:$0xff]
    %v576 = vld [vmem:[#allocation2 + $0x950] sm:$0xff]
    %v577 = vld [vmem:[#allocation2 + $0x958] sm:$0xff]
    %v578 = vld [vmem:[#allocation2 + $0x960] sm:$0xff]
    %v579 = vld [vmem:[#allocation2 + $0x968] sm:$0xff]
    %v580 = vld [vmem:[#allocation2 + $0x970] sm:$0xff]
    %v581 = vld [vmem:[#allocation2 + $0x978] sm:$0xff]
    %v582 = vld [vmem:[#allocation2 + $0x980] sm:$0xff]
    %v583 = vld [vmem:[#allocation2 + $0x988] sm:$0xff]
    %v584 = vld [vmem:[#allocation2 + $0x990] sm:$0xff]
    %v585 = vld [vmem:[#allocation2 + $0x998] sm:$0xff]
    %v586 = vld [vmem:[#allocation2 + $0x9a0] sm:$0xff]
    %v587 = vld [vmem:[#allocation2 + $0x9a8] sm:$0xff]
    %v588 = vld [vmem:[#allocation2 + $0x9b0] sm:$0xff]
    %v589 = vld [vmem:[#allocation2 + $0x9b8] sm:$0xff]
    %v590 = vld [vmem:[#allocation2 + $0x9c0] sm:$0xff]
    %v591 = vld [vmem:[#allocation2 + $0x9c8] sm:$0xff]
    %v592 = vld [vmem:[#allocation2 + $0x9d0] sm:$0xff]
    %v593 = vld [vmem:[#allocation2 + $0x9d8] sm:$0xff]
    %v594 = vld [vmem:[#allocation2 + $0x9e0] sm:$0xff]
    %v595 = vld [vmem:[#allocation2 + $0x9e8] sm:$0xff]
    %v596 = vld [vmem:[#allocation2 + $0x9f0] sm:$0xff]
    %v597 = vld [vmem:[#allocation2 + $0x9f8] sm:$0xff]
    %v598 = vld [vmem:[#allocation2 + $0xa00] sm:$0xff]
    %v599 = vld [vmem:[#allocation2 + $0xa08] sm:$0xff]
    %v600 = vld [vmem:[#allocation2 + $0xa10] sm:$0xff]
    %v601 = vld [vmem:[#allocation2 + $0xa18] sm:$0xff]
    %v602 = vld [vmem:[#allocation2 + $0xa20] sm:$0xff]
    %v603 = vld [vmem:[#allocation2 + $0xa28] sm:$0xff]
    %v604 = vld [vmem:[#allocation2 + $0xa30] sm:$0xff]
    %v605 = vld [vmem:[#allocation2 + $0xa38] sm:$0xff]
    %v606 = vld [vmem:[#allocation2 + $0xa40] sm:$0xff]
    %v607 = vld [vmem:[#allocation2 + $0xa48] sm:$0xff]
    %v608 = vld [vmem:[#allocation2 + $0xa50] sm:$0xff]
    %v609 = vld [vmem:[#allocation2 + $0xa58] sm:$0xff]
    %v610 = vld [vmem:[#allocation2 + $0xa60] sm:$0xff]
    %v611 = vld [vmem:[#allocation2 + $0xa68] sm:$0xff]
    %v612 = vld [vmem:[#allocation2 + $0xa70] sm:$0xff]
    %v613 = vld [vmem:[#allocation2 + $0xa78] sm:$0xff]
    %v614 = vld [vmem:[#allocation2 + $0xa80] sm:$0xff]
    %v615 = vld [vmem:[#allocation2 + $0xa88] sm:$0xff]
    %v616 = vld [vmem:[#allocation2 + $0xa90] sm:$0xff]
    %v617 = vld [vmem:[#allocation2 + $0xa98] sm:$0xff]
    %v618 = vld [vmem:[#allocation2 + $0xaa0] sm:$0xff]
    %v619 = vld [vmem:[#allocation2 + $0xaa8] sm:$0xff]
    %v620 = vld [vmem:[#allocation2 + $0xab0] sm:$0xff]
    %v621 = vld [vmem:[#allocation2 + $0xab8] sm:$0xff]
    %v622 = vld [vmem:[#allocation2 + $0xac0] sm:$0xff]
    %v623 = vld [vmem:[#allocation2 + $0xac8] sm:$0xff]
    %v624 = vld [vmem:[#allocation2 + $0xad0] sm:$0xff]
    %v625 = vld [vmem:[#allocation2 + $0xad8] sm:$0xff]
    %v626 = vld [vmem:[#allocation2 + $0xae0] sm:$0xff]
    %v627 = vld [vmem:[#allocation2 + $0xae8] sm:$0xff]
    %v628 = vld [vmem:[#allocation2 + $0xaf0] sm:$0xff]
    %v629 = vld [vmem:[#allocation2 + $0xaf8] sm:$0xff]
    %v630 = vld [vmem:[#allocation4] sm:$0xff]
    %v632 = vlaneseq
    %v633 = vshrl.u32 %v632, 7
    %v634 = vsub.s32 0, %v633
    %v635 = vrot.slane %v630, %v634
    %v636 = vlaneseq
    %v637 = vshrl.u32 %v636, 7
    %v638 = vsub.s32 1, %v637
    %v639 = vrot.slane %v630, %v638
    %v640 = vlaneseq
    %v641 = vshrl.u32 %v640, 7
    %v642 = vsub.s32 2, %v641
    %v643 = vrot.slane %v630, %v642
    %v644 = vlaneseq
    %v645 = vshrl.u32 %v644, 7
    %v646 = vsub.s32 3, %v645
    %v647 = vrot.slane %v630, %v646
    %v648 = vlaneseq
    %v649 = vshrl.u32 %v648, 7
    %v650 = vsub.s32 4, %v649
    %v651 = vrot.slane %v630, %v650
    %v652 = vlaneseq
    %v653 = vshrl.u32 %v652, 7
    %v654 = vsub.s32 5, %v653
    %v655 = vrot.slane %v630, %v654
    %v656 = vlaneseq
    %v657 = vshrl.u32 %v656, 7
    %v658 = vsub.s32 6, %v657
    %v659 = vrot.slane %v630, %v658
    %v660 = vlaneseq
    %v661 = vshrl.u32 %v660, 7
    %v662 = vsub.s32 7, %v661
    %v663 = vrot.slane %v630, %v662
    %v1024 = vunpack.c.l.b16 %v278
    %v1025 = vunpack.c.h.b16 %v278
    %v1026 = vunpack.c.l.b16 %v279
    %v1027 = vunpack.c.h.b16 %v279
    %v1028 = vunpack.c.l.b16 %v280
    %v1029 = vunpack.c.h.b16 %v280
    %v1030 = vunpack.c.l.b16 %v281
    %v1031 = vunpack.c.h.b16 %v281
    %v1032 = vunpack.c.l.b16 %v282
    %v1033 = vunpack.c.h.b16 %v282
    %v1034 = vunpack.c.l.b16 %v283
    %v1035 = vunpack.c.h.b16 %v283
    %v1036 = vunpack.c.l.b16 %v284
    %v1037 = vunpack.c.h.b16 %v284
    %v1038 = vunpack.c.l.b16 %v285
    %v1039 = vunpack.c.h.b16 %v285
    %v1040 = vunpack.c.l.b16 %v286
    %v1041 = vunpack.c.h.b16 %v286
    %v1042 = vunpack.c.l.b16 %v287
    %v1043 = vunpack.c.h.b16 %v287
    %v1044 = vunpack.c.l.b16 %v288
    %v1045 = vunpack.c.h.b16 %v288
    %v1046 = vunpack.c.l.b16 %v289
    %v1047 = vunpack.c.h.b16 %v289
    %v1048 = vunpack.c.l.b16 %v290
    %v1049 = vunpack.c.h.b16 %v290
    %v1050 = vunpack.c.l.b16 %v291
    %v1051 = vunpack.c.h.b16 %v291
    %v1052 = vunpack.c.l.b16 %v292
    %v1053 = vunpack.c.h.b16 %v292
    %v1054 = vunpack.c.l.b16 %v293
    %v1055 = vunpack.c.h.b16 %v293
    %v1056 = vunpack.c.l.b16 %v294
    %v1057 = vunpack.c.h.b16 %v294
    %v1058 = vunpack.c.l.b16 %v295
    %v1059 = vunpack.c.h.b16 %v295
    %v1060 = vunpack.c.l.b16 %v296
    %v1061 = vunpack.c.h.b16 %v296
    %v1062 = vunpack.c.l.b16 %v297
    %v1063 = vunpack.c.h.b16 %v297
    %v1064 = vunpack.c.l.b16 %v298
    %v1065 = vunpack.c.h.b16 %v298
    %v1066 = vunpack.c.l.b16 %v299
    %v1067 = vunpack.c.h.b16 %v299
    %v1068 = vunpack.c.l.b16 %v300
    %v1069 = vunpack.c.h.b16 %v300
    %v1070 = vunpack.c.l.b16 %v301
    %v1071 = vunpack.c.h.b16 %v301
    %v1072 = vunpack.c.l.b16 %v302
    %v1073 = vunpack.c.h.b16 %v302
    %v1074 = vunpack.c.l.b16 %v303
    %v1075 = vunpack.c.h.b16 %v303
    %v1076 = vunpack.c.l.b16 %v304
    %v1077 = vunpack.c.h.b16 %v304
    %v1078 = vunpack.c.l.b16 %v305
    %v1079 = vunpack.c.h.b16 %v305
    %v1080 = vunpack.c.l.b16 %v306
    %v1081 = vunpack.c.h.b16 %v306
    %v1082 = vunpack.c.l.b16 %v307
    %v1083 = vunpack.c.h.b16 %v307
    %v1084 = vunpack.c.l.b16 %v308
    %v1085 = vunpack.c.h.b16 %v308
    %v1086 = vunpack.c.l.b16 %v309
    %v1087 = vunpack.c.h.b16 %v309
    %v1088 = vunpack.c.l.b16 %v310
    %v1089 = vunpack.c.h.b16 %v310
    %v1090 = vunpack.c.l.b16 %v311
    %v1091 = vunpack.c.h.b16 %v311
    %v1092 = vunpack.c.l.b16 %v312
    %v1093 = vunpack.c.h.b16 %v312
    %v1094 = vunpack.c.l.b16 %v313
    %v1095 = vunpack.c.h.b16 %v313
    %v1096 = vunpack.c.l.b16 %v314
    %v1097 = vunpack.c.h.b16 %v314
    %v1098 = vunpack.c.l.b16 %v315
    %v1099 = vunpack.c.h.b16 %v315
    %v1100 = vunpack.c.l.b16 %v316
    %v1101 = vunpack.c.h.b16 %v316
    %v1102 = vunpack.c.l.b16 %v317
    %v1103 = vunpack.c.h.b16 %v317
    %v1104 = vunpack.c.l.b16 %v318
    %v1105 = vunpack.c.h.b16 %v318
    %v1106 = vunpack.c.l.b16 %v319
    %v1107 = vunpack.c.h.b16 %v319
    %v1108 = vunpack.c.l.b16 %v320
    %v1109 = vunpack.c.h.b16 %v320
    %v1110 = vunpack.c.l.b16 %v321
    %v1111 = vunpack.c.h.b16 %v321
    %v1112 = vunpack.c.l.b16 %v322
    %v1113 = vunpack.c.h.b16 %v322
    %v1114 = vunpack.c.l.b16 %v323
    %v1115 = vunpack.c.h.b16 %v323
    %v1116 = vunpack.c.l.b16 %v324
    %v1117 = vunpack.c.h.b16 %v324
    %v1118 = vunpack.c.l.b16 %v325
    %v1119 = vunpack.c.h.b16 %v325
    %v1120 = vunpack.c.l.b16 %v326
    %v1121 = vunpack.c.h.b16 %v326
    %v1122 = vunpack.c.l.b16 %v327
    %v1123 = vunpack.c.h.b16 %v327
    %v1124 = vunpack.c.l.b16 %v328
    %v1125 = vunpack.c.h.b16 %v328
    %v1126 = vunpack.c.l.b16 %v329
    %v1127 = vunpack.c.h.b16 %v329
    %v1128 = vunpack.c.l.b16 %v330
    %v1129 = vunpack.c.h.b16 %v330
    %v1130 = vunpack.c.l.b16 %v331
    %v1131 = vunpack.c.h.b16 %v331
    %v1132 = vunpack.c.l.b16 %v332
    %v1133 = vunpack.c.h.b16 %v332
    %v1134 = vunpack.c.l.b16 %v333
    %v1135 = vunpack.c.h.b16 %v333
    %v1136 = vunpack.c.l.b16 %v334
    %v1137 = vunpack.c.h.b16 %v334
    %v1138 = vunpack.c.l.b16 %v335
    %v1139 = vunpack.c.h.b16 %v335
    %v1140 = vunpack.c.l.b16 %v336
    %v1141 = vunpack.c.h.b16 %v336
    %v1142 = vunpack.c.l.b16 %v337
    %v1143 = vunpack.c.h.b16 %v337
    %v1144 = vunpack.c.l.b16 %v338
    %v1145 = vunpack.c.h.b16 %v338
    %v1146 = vunpack.c.l.b16 %v339
    %v1147 = vunpack.c.h.b16 %v339
    %v1148 = vunpack.c.l.b16 %v340
    %v1149 = vunpack.c.h.b16 %v340
    %v1150 = vunpack.c.l.b16 %v341
    %v1151 = vunpack.c.h.b16 %v341
    %v1152 = vunpack.c.l.b16 %v342
    %v1153 = vunpack.c.h.b16 %v342
    %v1154 = vunpack.c.l.b16 %v343
    %v1155 = vunpack.c.h.b16 %v343
    %v1156 = vunpack.c.l.b16 %v344
    %v1157 = vunpack.c.h.b16 %v344
    %v1158 = vunpack.c.l.b16 %v345
    %v1159 = vunpack.c.h.b16 %v345
    %v1160 = vunpack.c.l.b16 %v346
    %v1161 = vunpack.c.h.b16 %v346
    %v1162 = vunpack.c.l.b16 %v347
    %v1163 = vunpack.c.h.b16 %v347
    %v1164 = vunpack.c.l.b16 %v348
    %v1165 = vunpack.c.h.b16 %v348
    %v1166 = vunpack.c.l.b16 %v349
    %v1167 = vunpack.c.h.b16 %v349
    %v1168 = vunpack.c.l.b16 %v350
    %v1169 = vunpack.c.h.b16 %v350
    %v1170 = vunpack.c.l.b16 %v351
    %v1171 = vunpack.c.h.b16 %v351
    %v1172 = vunpack.c.l.b16 %v352
    %v1173 = vunpack.c.h.b16 %v352
    %v1174 = vunpack.c.l.b16 %v353
    %v1175 = vunpack.c.h.b16 %v353
    %v1176 = vunpack.c.l.b16 %v354
    %v1177 = vunpack.c.h.b16 %v354
    %v1178 = vunpack.c.l.b16 %v355
    %v1179 = vunpack.c.h.b16 %v355
    %v1180 = vunpack.c.l.b16 %v356
    %v1181 = vunpack.c.h.b16 %v356
    %v1182 = vunpack.c.l.b16 %v357
    %v1183 = vunpack.c.h.b16 %v357
    %v1184 = vunpack.c.l.b16 %v358
    %v1185 = vunpack.c.h.b16 %v358
    %v1186 = vunpack.c.l.b16 %v359
    %v1187 = vunpack.c.h.b16 %v359
    %v1188 = vunpack.c.l.b16 %v360
    %v1189 = vunpack.c.h.b16 %v360
    %v1190 = vunpack.c.l.b16 %v361
    %v1191 = vunpack.c.h.b16 %v361
    %v1192 = vunpack.c.l.b16 %v362
    %v1193 = vunpack.c.h.b16 %v362
    %v1194 = vunpack.c.l.b16 %v363
    %v1195 = vunpack.c.h.b16 %v363
    %v1196 = vunpack.c.l.b16 %v364
    %v1197 = vunpack.c.h.b16 %v364
    %v1198 = vunpack.c.l.b16 %v365
    %v1199 = vunpack.c.h.b16 %v365
    %v1200 = vunpack.c.l.b16 %v366
    %v1201 = vunpack.c.h.b16 %v366
    %v1202 = vunpack.c.l.b16 %v367
    %v1203 = vunpack.c.h.b16 %v367
    %v1204 = vunpack.c.l.b16 %v368
    %v1205 = vunpack.c.h.b16 %v368
    %v1206 = vunpack.c.l.b16 %v369
    %v1207 = vunpack.c.h.b16 %v369
    %v1208 = vunpack.c.l.b16 %v370
    %v1209 = vunpack.c.h.b16 %v370
    %v1210 = vunpack.c.l.b16 %v371
    %v1211 = vunpack.c.h.b16 %v371
    %v1212 = vunpack.c.l.b16 %v372
    %v1213 = vunpack.c.h.b16 %v372
    %v1214 = vunpack.c.l.b16 %v373
    %v1215 = vunpack.c.h.b16 %v373
    %v1216 = vunpack.c.l.b16 %v374
    %v1217 = vunpack.c.h.b16 %v374
    %v1218 = vunpack.c.l.b16 %v375
    %v1219 = vunpack.c.h.b16 %v375
    %v1220 = vunpack.c.l.b16 %v376
    %v1221 = vunpack.c.h.b16 %v376
    %v1222 = vunpack.c.l.b16 %v377
    %v1223 = vunpack.c.h.b16 %v377
    %v1224 = vunpack.c.l.b16 %v378
    %v1225 = vunpack.c.h.b16 %v378
    %v1226 = vunpack.c.l.b16 %v379
    %v1227 = vunpack.c.h.b16 %v379
    %v1228 = vunpack.c.l.b16 %v380
    %v1229 = vunpack.c.h.b16 %v380
    %v1230 = vunpack.c.l.b16 %v381
    %v1231 = vunpack.c.h.b16 %v381
    %v1232 = vunpack.c.l.b16 %v382
    %v1233 = vunpack.c.h.b16 %v382
    %v1234 = vunpack.c.l.b16 %v383
    %v1235 = vunpack.c.h.b16 %v383
    %v1236 = vunpack.c.l.b16 %v384
    %v1237 = vunpack.c.h.b16 %v384
    %v1238 = vunpack.c.l.b16 %v385
    %v1239 = vunpack.c.h.b16 %v385
    %v1240 = vunpack.c.l.b16 %v386
    %v1241 = vunpack.c.h.b16 %v386
    %v1242 = vunpack.c.l.b16 %v387
    %v1243 = vunpack.c.h.b16 %v387
    %v1244 = vunpack.c.l.b16 %v388
    %v1245 = vunpack.c.h.b16 %v388
    %v1246 = vunpack.c.l.b16 %v389
    %v1247 = vunpack.c.h.b16 %v389
    %v1248 = vunpack.c.l.b16 %v390
    %v1249 = vunpack.c.h.b16 %v390
    %v1250 = vunpack.c.l.b16 %v391
    %v1251 = vunpack.c.h.b16 %v391
    %v1252 = vunpack.c.l.b16 %v392
    %v1253 = vunpack.c.h.b16 %v392
    %v1254 = vunpack.c.l.b16 %v393
    %v1255 = vunpack.c.h.b16 %v393
    %v1256 = vunpack.c.l.b16 %v394
    %v1257 = vunpack.c.h.b16 %v394
    %v1258 = vunpack.c.l.b16 %v395
    %v1259 = vunpack.c.h.b16 %v395
    %v1260 = vunpack.c.l.b16 %v396
    %v1261 = vunpack.c.h.b16 %v396
    %v1262 = vunpack.c.l.b16 %v397
    %v1263 = vunpack.c.h.b16 %v397
    %v1264 = vunpack.c.l.b16 %v398
    %v1265 = vunpack.c.h.b16 %v398
    %v1266 = vunpack.c.l.b16 %v399
    %v1267 = vunpack.c.h.b16 %v399
    %v1268 = vunpack.c.l.b16 %v400
    %v1269 = vunpack.c.h.b16 %v400
    %v1270 = vunpack.c.l.b16 %v401
    %v1271 = vunpack.c.h.b16 %v401
    %v1272 = vunpack.c.l.b16 %v402
    %v1273 = vunpack.c.h.b16 %v402
    %v1274 = vunpack.c.l.b16 %v403
    %v1275 = vunpack.c.h.b16 %v403
    %v1276 = vunpack.c.l.b16 %v404
    %v1277 = vunpack.c.h.b16 %v404
    %v1278 = vunpack.c.l.b16 %v405
    %v1279 = vunpack.c.h.b16 %v405
    %v1280 = vunpack.c.l.b16 %v406
    %v1281 = vunpack.c.h.b16 %v406
    %v1282 = vunpack.c.l.b16 %v407
    %v1283 = vunpack.c.h.b16 %v407
    %v1284 = vunpack.c.l.b16 %v408
    %v1285 = vunpack.c.h.b16 %v408
    %v1286 = vunpack.c.l.b16 %v409
    %v1287 = vunpack.c.h.b16 %v409
    %v1288 = vunpack.c.l.b16 %v410
    %v1289 = vunpack.c.h.b16 %v410
    %v1290 = vunpack.c.l.b16 %v411
    %v1291 = vunpack.c.h.b16 %v411
    %v1292 = vunpack.c.l.b16 %v412
    %v1293 = vunpack.c.h.b16 %v412
    %v1294 = vunpack.c.l.b16 %v413
    %v1295 = vunpack.c.h.b16 %v413
    %v1296 = vunpack.c.l.b16 %v414
    %v1297 = vunpack.c.h.b16 %v414
    %v1298 = vunpack.c.l.b16 %v415
    %v1299 = vunpack.c.h.b16 %v415
    %v1300 = vunpack.c.l.b16 %v416
    %v1301 = vunpack.c.h.b16 %v416
    %v1302 = vunpack.c.l.b16 %v417
    %v1303 = vunpack.c.h.b16 %v417
    %v1304 = vunpack.c.l.b16 %v418
    %v1305 = vunpack.c.h.b16 %v418
    %v1306 = vunpack.c.l.b16 %v419
    %v1307 = vunpack.c.h.b16 %v419
    %v1308 = vunpack.c.l.b16 %v420
    %v1309 = vunpack.c.h.b16 %v420
    %v1310 = vunpack.c.l.b16 %v421
    %v1311 = vunpack.c.h.b16 %v421
    %v1312 = vunpack.c.l.b16 %v422
    %v1313 = vunpack.c.h.b16 %v422
    %v1314 = vunpack.c.l.b16 %v423
    %v1315 = vunpack.c.h.b16 %v423
    %v1316 = vunpack.c.l.b16 %v424
    %v1317 = vunpack.c.h.b16 %v424
    %v1318 = vunpack.c.l.b16 %v425
    %v1319 = vunpack.c.h.b16 %v425
    %v1320 = vunpack.c.l.b16 %v426
    %v1321 = vunpack.c.h.b16 %v426
    %v1322 = vunpack.c.l.b16 %v427
    %v1323 = vunpack.c.h.b16 %v427
    %v1324 = vunpack.c.l.b16 %v428
    %v1325 = vunpack.c.h.b16 %v428
    %v1326 = vunpack.c.l.b16 %v429
    %v1327 = vunpack.c.h.b16 %v429
    %v1328 = vunpack.c.l.b16 %v430
    %v1329 = vunpack.c.h.b16 %v430
    %v1330 = vunpack.c.l.b16 %v431
    %v1331 = vunpack.c.h.b16 %v431
    %v1332 = vunpack.c.l.b16 %v432
    %v1333 = vunpack.c.h.b16 %v432
    %v1334 = vunpack.c.l.b16 %v433
    %v1335 = vunpack.c.h.b16 %v433
    %v1336 = vunpack.c.l.b16 %v434
    %v1337 = vunpack.c.h.b16 %v434
    %v1338 = vunpack.c.l.b16 %v435
    %v1339 = vunpack.c.h.b16 %v435
    %v1340 = vunpack.c.l.b16 %v436
    %v1341 = vunpack.c.h.b16 %v436
    %v1342 = vunpack.c.l.b16 %v437
    %v1343 = vunpack.c.h.b16 %v437
    %v1344 = vunpack.c.l.b16 %v438
    %v1345 = vunpack.c.h.b16 %v438
    %v1346 = vunpack.c.l.b16 %v439
    %v1347 = vunpack.c.h.b16 %v439
    %v1348 = vunpack.c.l.b16 %v440
    %v1349 = vunpack.c.h.b16 %v440
    %v1350 = vunpack.c.l.b16 %v441
    %v1351 = vunpack.c.h.b16 %v441
    %v1352 = vunpack.c.l.b16 %v442
    %v1353 = vunpack.c.h.b16 %v442
    %v1354 = vunpack.c.l.b16 %v443
    %v1355 = vunpack.c.h.b16 %v443
    %v1356 = vunpack.c.l.b16 %v444
    %v1357 = vunpack.c.h.b16 %v444
    %v1358 = vunpack.c.l.b16 %v445
    %v1359 = vunpack.c.h.b16 %v445
    %v1360 = vunpack.c.l.b16 %v446
    %v1361 = vunpack.c.h.b16 %v446
    %v1362 = vunpack.c.l.b16 %v447
    %v1363 = vunpack.c.h.b16 %v447
    %v1364 = vunpack.c.l.b16 %v448
    %v1365 = vunpack.c.h.b16 %v448
    %v1366 = vunpack.c.l.b16 %v449
    %v1367 = vunpack.c.h.b16 %v449
    %v1368 = vunpack.c.l.b16 %v450
    %v1369 = vunpack.c.h.b16 %v450
    %v1370 = vunpack.c.l.b16 %v451
    %v1371 = vunpack.c.h.b16 %v451
    %v1372 = vunpack.c.l.b16 %v452
    %v1373 = vunpack.c.h.b16 %v452
    %v1374 = vunpack.c.l.b16 %v453
    %v1375 = vunpack.c.h.b16 %v453
    %v1376 = vunpack.c.l.b16 %v454
    %v1377 = vunpack.c.h.b16 %v454
    %v1378 = vunpack.c.l.b16 %v455
    %v1379 = vunpack.c.h.b16 %v455
    %v1380 = vunpack.c.l.b16 %v456
    %v1381 = vunpack.c.h.b16 %v456
    %v1382 = vunpack.c.l.b16 %v457
    %v1383 = vunpack.c.h.b16 %v457
    %v1384 = vunpack.c.l.b16 %v458
    %v1385 = vunpack.c.h.b16 %v458
    %v1386 = vunpack.c.l.b16 %v459
    %v1387 = vunpack.c.h.b16 %v459
    %v1388 = vunpack.c.l.b16 %v460
    %v1389 = vunpack.c.h.b16 %v460
    %v1390 = vunpack.c.l.b16 %v461
    %v1391 = vunpack.c.h.b16 %v461
    %v1392 = vunpack.c.l.b16 %v462
    %v1393 = vunpack.c.h.b16 %v462
    %v1394 = vunpack.c.l.b16 %v463
    %v1395 = vunpack.c.h.b16 %v463
    %v1396 = vunpack.c.l.b16 %v464
    %v1397 = vunpack.c.h.b16 %v464
    %v1398 = vunpack.c.l.b16 %v465
    %v1399 = vunpack.c.h.b16 %v465
    %v1400 = vunpack.c.l.b16 %v466
    %v1401 = vunpack.c.h.b16 %v466
    %v1402 = vunpack.c.l.b16 %v467
    %v1403 = vunpack.c.h.b16 %v467
    %v1404 = vunpack.c.l.b16 %v468
    %v1405 = vunpack.c.h.b16 %v468
    %v1406 = vunpack.c.l.b16 %v469
    %v1407 = vunpack.c.h.b16 %v469
    %v1408 = vunpack.c.l.b16 %v470
    %v1409 = vunpack.c.h.b16 %v470
    %v1410 = vunpack.c.l.b16 %v471
    %v1411 = vunpack.c.h.b16 %v471
    %v1412 = vunpack.c.l.b16 %v472
    %v1413 = vunpack.c.h.b16 %v472
    %v1414 = vunpack.c.l.b16 %v473
    %v1415 = vunpack.c.h.b16 %v473
    %v1416 = vunpack.c.l.b16 %v474
    %v1417 = vunpack.c.h.b16 %v474
    %v1418 = vunpack.c.l.b16 %v475
    %v1419 = vunpack.c.h.b16 %v475
    %v1420 = vunpack.c.l.b16 %v476
    %v1421 = vunpack.c.h.b16 %v476
    %v1422 = vunpack.c.l.b16 %v477
    %v1423 = vunpack.c.h.b16 %v477
    %v1424 = vunpack.c.l.b16 %v478
    %v1425 = vunpack.c.h.b16 %v478
    %v1426 = vunpack.c.l.b16 %v479
    %v1427 = vunpack.c.h.b16 %v479
    %v1428 = vunpack.c.l.b16 %v480
    %v1429 = vunpack.c.h.b16 %v480
    %v1430 = vunpack.c.l.b16 %v481
    %v1431 = vunpack.c.h.b16 %v481
    %v1432 = vunpack.c.l.b16 %v482
    %v1433 = vunpack.c.h.b16 %v482
    %v1434 = vunpack.c.l.b16 %v483
    %v1435 = vunpack.c.h.b16 %v483
    %v1436 = vunpack.c.l.b16 %v484
    %v1437 = vunpack.c.h.b16 %v484
    %v1438 = vunpack.c.l.b16 %v485
    %v1439 = vunpack.c.h.b16 %v485
    %v1440 = vunpack.c.l.b16 %v486
    %v1441 = vunpack.c.h.b16 %v486
    %v1442 = vunpack.c.l.b16 %v487
    %v1443 = vunpack.c.h.b16 %v487
    %v1444 = vunpack.c.l.b16 %v488
    %v1445 = vunpack.c.h.b16 %v488
    %v1446 = vunpack.c.l.b16 %v489
    %v1447 = vunpack.c.h.b16 %v489
    %v1448 = vunpack.c.l.b16 %v490
    %v1449 = vunpack.c.h.b16 %v490
    %v1450 = vunpack.c.l.b16 %v491
    %v1451 = vunpack.c.h.b16 %v491
    %v1452 = vunpack.c.l.b16 %v492
    %v1453 = vunpack.c.h.b16 %v492
    %v1454 = vunpack.c.l.b16 %v493
    %v1455 = vunpack.c.h.b16 %v493
    %v1456 = vunpack.c.l.b16 %v494
    %v1457 = vunpack.c.h.b16 %v494
    %v1458 = vunpack.c.l.b16 %v495
    %v1459 = vunpack.c.h.b16 %v495
    %v1460 = vunpack.c.l.b16 %v496
    %v1461 = vunpack.c.h.b16 %v496
    %v1462 = vunpack.c.l.b16 %v497
    %v1463 = vunpack.c.h.b16 %v497
    %v1464 = vunpack.c.l.b16 %v498
    %v1465 = vunpack.c.h.b16 %v498
    %v1466 = vunpack.c.l.b16 %v499
    %v1467 = vunpack.c.h.b16 %v499
    %v1468 = vunpack.c.l.b16 %v500
    %v1469 = vunpack.c.h.b16 %v500
    %v1470 = vunpack.c.l.b16 %v501
    %v1471 = vunpack.c.h.b16 %v501
    %v1472 = vunpack.c.l.b16 %v502
    %v1473 = vunpack.c.h.b16 %v502
    %v1474 = vunpack.c.l.b16 %v503
    %v1475 = vunpack.c.h.b16 %v503
    %v1476 = vunpack.c.l.b16 %v504
    %v1477 = vunpack.c.h.b16 %v504
    %v1478 = vunpack.c.l.b16 %v505
    %v1479 = vunpack.c.h.b16 %v505
    %v1480 = vunpack.c.l.b16 %v506
    %v1481 = vunpack.c.h.b16 %v506
    %v1482 = vunpack.c.l.b16 %v507
    %v1483 = vunpack.c.h.b16 %v507
    %v1484 = vunpack.c.l.b16 %v508
    %v1485 = vunpack.c.h.b16 %v508
    %v1486 = vunpack.c.l.b16 %v509
    %v1487 = vunpack.c.h.b16 %v509
    %v1488 = vunpack.c.l.b16 %v510
    %v1489 = vunpack.c.h.b16 %v510
    %v1490 = vunpack.c.l.b16 %v511
    %v1491 = vunpack.c.h.b16 %v511
    %v1492 = vunpack.c.l.b16 %v512
    %v1493 = vunpack.c.h.b16 %v512
    %v1494 = vunpack.c.l.b16 %v513
    %v1495 = vunpack.c.h.b16 %v513
    %v1496 = vunpack.c.l.b16 %v514
    %v1497 = vunpack.c.h.b16 %v514
    %v1498 = vunpack.c.l.b16 %v515
    %v1499 = vunpack.c.h.b16 %v515
    %v1500 = vunpack.c.l.b16 %v516
    %v1501 = vunpack.c.h.b16 %v516
    %v1502 = vunpack.c.l.b16 %v517
    %v1503 = vunpack.c.h.b16 %v517
    %v1504 = vunpack.c.l.b16 %v518
    %v1505 = vunpack.c.h.b16 %v518
    %v1506 = vunpack.c.l.b16 %v519
    %v1507 = vunpack.c.h.b16 %v519
    %v1508 = vunpack.c.l.b16 %v520
    %v1509 = vunpack.c.h.b16 %v520
    %v1510 = vunpack.c.l.b16 %v521
    %v1511 = vunpack.c.h.b16 %v521
    %v1512 = vunpack.c.l.b16 %v522
    %v1513 = vunpack.c.h.b16 %v522
    %v1514 = vunpack.c.l.b16 %v523
    %v1515 = vunpack.c.h.b16 %v523
    %v1516 = vunpack.c.l.b16 %v524
    %v1517 = vunpack.c.h.b16 %v524
    %v1518 = vunpack.c.l.b16 %v525
    %v1519 = vunpack.c.h.b16 %v525
    %v1520 = vunpack.c.l.b16 %v526
    %v1521 = vunpack.c.h.b16 %v526
    %v1522 = vunpack.c.l.b16 %v527
    %v1523 = vunpack.c.h.b16 %v527
    %v1524 = vunpack.c.l.b16 %v528
    %v1525 = vunpack.c.h.b16 %v528
    %v1526 = vunpack.c.l.b16 %v529
    %v1527 = vunpack.c.h.b16 %v529
    %v1528 = vunpack.c.l.b16 %v530
    %v1529 = vunpack.c.h.b16 %v530
    %v1530 = vunpack.c.l.b16 %v531
    %v1531 = vunpack.c.h.b16 %v531
    %v1532 = vunpack.c.l.b16 %v532
    %v1533 = vunpack.c.h.b16 %v532
    %v1534 = vunpack.c.l.b16 %v533
    %v1535 = vunpack.c.h.b16 %v533
    %v1536 = vunpack.c.l.b16 %v534
    %v1537 = vunpack.c.h.b16 %v534
    %v1538 = vunpack.c.l.b16 %v535
    %v1539 = vunpack.c.h.b16 %v535
    %v1540 = vunpack.c.l.b16 %v536
    %v1541 = vunpack.c.h.b16 %v536
    %v1542 = vunpack.c.l.b16 %v537
    %v1543 = vunpack.c.h.b16 %v537
    %v1544 = vunpack.c.l.b16 %v538
    %v1545 = vunpack.c.h.b16 %v538
    %v1546 = vunpack.c.l.b16 %v539
    %v1547 = vunpack.c.h.b16 %v539
    %v1548 = vunpack.c.l.b16 %v540
    %v1549 = vunpack.c.h.b16 %v540
    %v1550 = vunpack.c.l.b16 %v541
    %v1551 = vunpack.c.h.b16 %v541
    %v1552 = vunpack.c.l.b16 %v542
    %v1553 = vunpack.c.h.b16 %v542
    %v1554 = vunpack.c.l.b16 %v543
    %v1555 = vunpack.c.h.b16 %v543
    %v1556 = vunpack.c.l.b16 %v544
    %v1557 = vunpack.c.h.b16 %v544
    %v1558 = vunpack.c.l.b16 %v545
    %v1559 = vunpack.c.h.b16 %v545
    %v1560 = vunpack.c.l.b16 %v546
    %v1561 = vunpack.c.h.b16 %v546
    %v1562 = vunpack.c.l.b16 %v547
    %v1563 = vunpack.c.h.b16 %v547
    %v1564 = vunpack.c.l.b16 %v548
    %v1565 = vunpack.c.h.b16 %v548
    %v1566 = vunpack.c.l.b16 %v549
    %v1567 = vunpack.c.h.b16 %v549
    %v1568 = vunpack.c.l.b16 %v550
    %v1569 = vunpack.c.h.b16 %v550
    %v1570 = vunpack.c.l.b16 %v551
    %v1571 = vunpack.c.h.b16 %v551
    %v1572 = vunpack.c.l.b16 %v552
    %v1573 = vunpack.c.h.b16 %v552
    %v1574 = vunpack.c.l.b16 %v553
    %v1575 = vunpack.c.h.b16 %v553
    %v1576 = vunpack.c.l.b16 %v554
    %v1577 = vunpack.c.h.b16 %v554
    %v1578 = vunpack.c.l.b16 %v555
    %v1579 = vunpack.c.h.b16 %v555
    %v1580 = vunpack.c.l.b16 %v556
    %v1581 = vunpack.c.h.b16 %v556
    %v1582 = vunpack.c.l.b16 %v557
    %v1583 = vunpack.c.h.b16 %v557
    %v1584 = vunpack.c.l.b16 %v558
    %v1585 = vunpack.c.h.b16 %v558
    %v1586 = vunpack.c.l.b16 %v559
    %v1587 = vunpack.c.h.b16 %v559
    %v1588 = vunpack.c.l.b16 %v560
    %v1589 = vunpack.c.h.b16 %v560
    %v1590 = vunpack.c.l.b16 %v561
    %v1591 = vunpack.c.h.b16 %v561
    %v1592 = vunpack.c.l.b16 %v562
    %v1593 = vunpack.c.h.b16 %v562
    %v1594 = vunpack.c.l.b16 %v563
    %v1595 = vunpack.c.h.b16 %v563
    %v1596 = vunpack.c.l.b16 %v564
    %v1597 = vunpack.c.h.b16 %v564
    %v1598 = vunpack.c.l.b16 %v565
    %v1599 = vunpack.c.h.b16 %v565
    %v1600 = vunpack.c.l.b16 %v566
    %v1601 = vunpack.c.h.b16 %v566
    %v1602 = vunpack.c.l.b16 %v567
    %v1603 = vunpack.c.h.b16 %v567
    %v1604 = vunpack.c.l.b16 %v568
    %v1605 = vunpack.c.h.b16 %v568
    %v1606 = vunpack.c.l.b16 %v569
    %v1607 = vunpack.c.h.b16 %v569
    %v1608 = vunpack.c.l.b16 %v570
    %v1609 = vunpack.c.h.b16 %v570
    %v1610 = vunpack.c.l.b16 %v571
    %v1611 = vunpack.c.h.b16 %v571
    %v1612 = vunpack.c.l.b16 %v572
    %v1613 = vunpack.c.h.b16 %v572
    %v1614 = vunpack.c.l.b16 %v573
    %v1615 = vunpack.c.h.b16 %v573
    %v1616 = vunpack.c.l.b16 %v574
    %v1617 = vunpack.c.h.b16 %v574
    %v1618 = vunpack.c.l.b16 %v575
    %v1619 = vunpack.c.h.b16 %v575
    %v1620 = vunpack.c.l.b16 %v576
    %v1621 = vunpack.c.h.b16 %v576
    %v1622 = vunpack.c.l.b16 %v577
    %v1623 = vunpack.c.h.b16 %v577
    %v1624 = vunpack.c.l.b16 %v578
    %v1625 = vunpack.c.h.b16 %v578
    %v1626 = vunpack.c.l.b16 %v579
    %v1627 = vunpack.c.h.b16 %v579
    %v1628 = vunpack.c.l.b16 %v580
    %v1629 = vunpack.c.h.b16 %v580
    %v1630 = vunpack.c.l.b16 %v581
    %v1631 = vunpack.c.h.b16 %v581
    %v1632 = vunpack.c.l.b16 %v582
    %v1633 = vunpack.c.h.b16 %v582
    %v1634 = vunpack.c.l.b16 %v583
    %v1635 = vunpack.c.h.b16 %v583
    %v1636 = vunpack.c.l.b16 %v584
    %v1637 = vunpack.c.h.b16 %v584
    %v1638 = vunpack.c.l.b16 %v585
    %v1639 = vunpack.c.h.b16 %v585
    %v1640 = vunpack.c.l.b16 %v586
    %v1641 = vunpack.c.h.b16 %v586
    %v1642 = vunpack.c.l.b16 %v587
    %v1643 = vunpack.c.h.b16 %v587
    %v1644 = vunpack.c.l.b16 %v588
    %v1645 = vunpack.c.h.b16 %v588
    %v1646 = vunpack.c.l.b16 %v589
    %v1647 = vunpack.c.h.b16 %v589
    %v1648 = vunpack.c.l.b16 %v590
    %v1649 = vunpack.c.h.b16 %v590
    %v1650 = vunpack.c.l.b16 %v591
    %v1651 = vunpack.c.h.b16 %v591
    %v1652 = vunpack.c.l.b16 %v592
    %v1653 = vunpack.c.h.b16 %v592
    %v1654 = vunpack.c.l.b16 %v593
    %v1655 = vunpack.c.h.b16 %v593
    %v1656 = vunpack.c.l.b16 %v594
    %v1657 = vunpack.c.h.b16 %v594
    %v1658 = vunpack.c.l.b16 %v595
    %v1659 = vunpack.c.h.b16 %v595
    %v1660 = vunpack.c.l.b16 %v596
    %v1661 = vunpack.c.h.b16 %v596
    %v1662 = vunpack.c.l.b16 %v597
    %v1663 = vunpack.c.h.b16 %v597
    %v1664 = vunpack.c.l.b16 %v598
    %v1665 = vunpack.c.h.b16 %v598
    %v1666 = vunpack.c.l.b16 %v599
    %v1667 = vunpack.c.h.b16 %v599
    %v1668 = vunpack.c.l.b16 %v600
    %v1669 = vunpack.c.h.b16 %v600
    %v1670 = vunpack.c.l.b16 %v601
    %v1671 = vunpack.c.h.b16 %v601
    %v1672 = vunpack.c.l.b16 %v602
    %v1673 = vunpack.c.h.b16 %v602
    %v1674 = vunpack.c.l.b16 %v603
    %v1675 = vunpack.c.h.b16 %v603
    %v1676 = vunpack.c.l.b16 %v604
    %v1677 = vunpack.c.h.b16 %v604
    %v1678 = vunpack.c.l.b16 %v605
    %v1679 = vunpack.c.h.b16 %v605
    %v1680 = vunpack.c.l.b16 %v606
    %v1681 = vunpack.c.h.b16 %v606
    %v1682 = vunpack.c.l.b16 %v607
    %v1683 = vunpack.c.h.b16 %v607
    %v1684 = vunpack.c.l.b16 %v608
    %v1685 = vunpack.c.h.b16 %v608
    %v1686 = vunpack.c.l.b16 %v609
    %v1687 = vunpack.c.h.b16 %v609
    %v1688 = vunpack.c.l.b16 %v610
    %v1689 = vunpack.c.h.b16 %v610
    %v1690 = vunpack.c.l.b16 %v611
    %v1691 = vunpack.c.h.b16 %v611
    %v1692 = vunpack.c.l.b16 %v612
    %v1693 = vunpack.c.h.b16 %v612
    %v1694 = vunpack.c.l.b16 %v613
    %v1695 = vunpack.c.h.b16 %v613
    %v1696 = vunpack.c.l.b16 %v614
    %v1697 = vunpack.c.h.b16 %v614
    %v1698 = vunpack.c.l.b16 %v615
    %v1699 = vunpack.c.h.b16 %v615
    %v1700 = vunpack.c.l.b16 %v616
    %v1701 = vunpack.c.h.b16 %v616
    %v1702 = vunpack.c.l.b16 %v617
    %v1703 = vunpack.c.h.b16 %v617
    %v1704 = vunpack.c.l.b16 %v618
    %v1705 = vunpack.c.h.b16 %v618
    %v1706 = vunpack.c.l.b16 %v619
    %v1707 = vunpack.c.h.b16 %v619
    %v1708 = vunpack.c.l.b16 %v620
    %v1709 = vunpack.c.h.b16 %v620
    %v1710 = vunpack.c.l.b16 %v621
    %v1711 = vunpack.c.h.b16 %v621
    %v1712 = vunpack.c.l.b16 %v622
    %v1713 = vunpack.c.h.b16 %v622
    %v1714 = vunpack.c.l.b16 %v623
    %v1715 = vunpack.c.h.b16 %v623
    %v1716 = vunpack.c.l.b16 %v624
    %v1717 = vunpack.c.h.b16 %v624
    %v1718 = vunpack.c.l.b16 %v625
    %v1719 = vunpack.c.h.b16 %v625
    %v1720 = vunpack.c.l.b16 %v626
    %v1721 = vunpack.c.h.b16 %v626
    %v1722 = vunpack.c.l.b16 %v627
    %v1723 = vunpack.c.h.b16 %v627
    %v1724 = vunpack.c.l.b16 %v628
    %v1725 = vunpack.c.h.b16 %v628
    %v1726 = vunpack.c.l.b16 %v629
    %v1727 = vunpack.c.h.b16 %v629
    %v1728 = vpack.c.b16 %v1032, %v1024
    %v1729 = vpack.c.b16 %v1033, %v1025
    %v1730 = vpack.c.b16 %v1034, %v1026
    %v1731 = vpack.c.b16 %v1035, %v1027
    %v1732 = vpack.c.b16 %v1036, %v1028
    %v1733 = vpack.c.b16 %v1037, %v1029
    %v1734 = vpack.c.b16 %v1038, %v1030
    %v1735 = vpack.c.b16 %v1039, %v1031
    %v1736 = vpack.c.b16 %v1048, %v1040
    %v1737 = vpack.c.b16 %v1049, %v1041
    %v1738 = vpack.c.b16 %v1050, %v1042
    %v1739 = vpack.c.b16 %v1051, %v1043
    %v1740 = vpack.c.b16 %v1052, %v1044
    %v1741 = vpack.c.b16 %v1053, %v1045
    %v1742 = vpack.c.b16 %v1054, %v1046
    %v1743 = vpack.c.b16 %v1055, %v1047
    %v1744 = vpack.c.b16 %v1064, %v1056
    %v1745 = vpack.c.b16 %v1065, %v1057
    %v1746 = vpack.c.b16 %v1066, %v1058
    %v1747 = vpack.c.b16 %v1067, %v1059
    %v1748 = vpack.c.b16 %v1068, %v1060
    %v1749 = vpack.c.b16 %v1069, %v1061
    %v1750 = vpack.c.b16 %v1070, %v1062
    %v1751 = vpack.c.b16 %v1071, %v1063
    %v1752 = vpack.c.b16 %v1080, %v1072
    %v1753 = vpack.c.b16 %v1081, %v1073
    %v1754 = vpack.c.b16 %v1082, %v1074
    %v1755 = vpack.c.b16 %v1083, %v1075
    %v1756 = vpack.c.b16 %v1084, %v1076
    %v1757 = vpack.c.b16 %v1085, %v1077
    %v1758 = vpack.c.b16 %v1086, %v1078
    %v1759 = vpack.c.b16 %v1087, %v1079
    %v1760 = vpack.c.b16 %v1096, %v1088
    %v1761 = vpack.c.b16 %v1097, %v1089
    %v1762 = vpack.c.b16 %v1098, %v1090
    %v1763 = vpack.c.b16 %v1099, %v1091
    %v1764 = vpack.c.b16 %v1100, %v1092
    %v1765 = vpack.c.b16 %v1101, %v1093
    %v1766 = vpack.c.b16 %v1102, %v1094
    %v1767 = vpack.c.b16 %v1103, %v1095
    %v1768 = vpack.c.b16 %v1112, %v1104
    %v1769 = vpack.c.b16 %v1113, %v1105
    %v1770 = vpack.c.b16 %v1114, %v1106
    %v1771 = vpack.c.b16 %v1115, %v1107
    %v1772 = vpack.c.b16 %v1116, %v1108
    %v1773 = vpack.c.b16 %v1117, %v1109
    %v1774 = vpack.c.b16 %v1118, %v1110
    %v1775 = vpack.c.b16 %v1119, %v1111
    %v1776 = vpack.c.b16 %v1128, %v1120
    %v1777 = vpack.c.b16 %v1129, %v1121
    %v1778 = vpack.c.b16 %v1130, %v1122
    %v1779 = vpack.c.b16 %v1131, %v1123
    %v1780 = vpack.c.b16 %v1132, %v1124
    %v1781 = vpack.c.b16 %v1133, %v1125
    %v1782 = vpack.c.b16 %v1134, %v1126
    %v1783 = vpack.c.b16 %v1135, %v1127
    %v1784 = vpack.c.b16 %v1144, %v1136
    %v1785 = vpack.c.b16 %v1145, %v1137
    %v1786 = vpack.c.b16 %v1146, %v1138
    %v1787 = vpack.c.b16 %v1147, %v1139
    %v1788 = vpack.c.b16 %v1148, %v1140
    %v1789 = vpack.c.b16 %v1149, %v1141
    %v1790 = vpack.c.b16 %v1150, %v1142
    %v1791 = vpack.c.b16 %v1151, %v1143
    %v1792 = vpack.c.b16 %v1160, %v1152
    %v1793 = vpack.c.b16 %v1161, %v1153
    %v1794 = vpack.c.b16 %v1162, %v1154
    %v1795 = vpack.c.b16 %v1163, %v1155
    %v1796 = vpack.c.b16 %v1164, %v1156
    %v1797 = vpack.c.b16 %v1165, %v1157
    %v1798 = vpack.c.b16 %v1166, %v1158
    %v1799 = vpack.c.b16 %v1167, %v1159
    %v1800 = vpack.c.b16 %v1176, %v1168
    %v1801 = vpack.c.b16 %v1177, %v1169
    %v1802 = vpack.c.b16 %v1178, %v1170
    %v1803 = vpack.c.b16 %v1179, %v1171
    %v1804 = vpack.c.b16 %v1180, %v1172
    %v1805 = vpack.c.b16 %v1181, %v1173
    %v1806 = vpack.c.b16 %v1182, %v1174
    %v1807 = vpack.c.b16 %v1183, %v1175
    %v1808 = vpack.c.b16 %v1192, %v1184
    %v1809 = vpack.c.b16 %v1193, %v1185
    %v1810 = vpack.c.b16 %v1194, %v1186
    %v1811 = vpack.c.b16 %v1195, %v1187
    %v1812 = vpack.c.b16 %v1196, %v1188
    %v1813 = vpack.c.b16 %v1197, %v1189
    %v1814 = vpack.c.b16 %v1198, %v1190
    %v1815 = vpack.c.b16 %v1199, %v1191
    %v1816 = vpack.c.b16 %v1208, %v1200
    %v1817 = vpack.c.b16 %v1209, %v1201
    %v1818 = vpack.c.b16 %v1210, %v1202
    %v1819 = vpack.c.b16 %v1211, %v1203
    %v1820 = vpack.c.b16 %v1212, %v1204
    %v1821 = vpack.c.b16 %v1213, %v1205
    %v1822 = vpack.c.b16 %v1214, %v1206
    %v1823 = vpack.c.b16 %v1215, %v1207
    %v1824 = vpack.c.b16 %v1224, %v1216
    %v1825 = vpack.c.b16 %v1225, %v1217
    %v1826 = vpack.c.b16 %v1226, %v1218
    %v1827 = vpack.c.b16 %v1227, %v1219
    %v1828 = vpack.c.b16 %v1228, %v1220
    %v1829 = vpack.c.b16 %v1229, %v1221
    %v1830 = vpack.c.b16 %v1230, %v1222
    %v1831 = vpack.c.b16 %v1231, %v1223
    %v1832 = vpack.c.b16 %v1240, %v1232
    %v1833 = vpack.c.b16 %v1241, %v1233
    %v1834 = vpack.c.b16 %v1242, %v1234
    %v1835 = vpack.c.b16 %v1243, %v1235
    %v1836 = vpack.c.b16 %v1244, %v1236
    %v1837 = vpack.c.b16 %v1245, %v1237
    %v1838 = vpack.c.b16 %v1246, %v1238
    %v1839 = vpack.c.b16 %v1247, %v1239
    %v1840 = vpack.c.b16 %v1256, %v1248
    %v1841 = vpack.c.b16 %v1257, %v1249
    %v1842 = vpack.c.b16 %v1258, %v1250
    %v1843 = vpack.c.b16 %v1259, %v1251
    %v1844 = vpack.c.b16 %v1260, %v1252
    %v1845 = vpack.c.b16 %v1261, %v1253
    %v1846 = vpack.c.b16 %v1262, %v1254
    %v1847 = vpack.c.b16 %v1263, %v1255
    %v1848 = vpack.c.b16 %v1272, %v1264
    %v1849 = vpack.c.b16 %v1273, %v1265
    %v1850 = vpack.c.b16 %v1274, %v1266
    %v1851 = vpack.c.b16 %v1275, %v1267
    %v1852 = vpack.c.b16 %v1276, %v1268
    %v1853 = vpack.c.b16 %v1277, %v1269
    %v1854 = vpack.c.b16 %v1278, %v1270
    %v1855 = vpack.c.b16 %v1279, %v1271
    %v1856 = vpack.c.b16 %v1288, %v1280
    %v1857 = vpack.c.b16 %v1289, %v1281
    %v1858 = vpack.c.b16 %v1290, %v1282
    %v1859 = vpack.c.b16 %v1291, %v1283
    %v1860 = vpack.c.b16 %v1292, %v1284
    %v1861 = vpack.c.b16 %v1293, %v1285
    %v1862 = vpack.c.b16 %v1294, %v1286
    %v1863 = vpack.c.b16 %v1295, %v1287
    %v1864 = vpack.c.b16 %v1304, %v1296
    %v1865 = vpack.c.b16 %v1305, %v1297
    %v1866 = vpack.c.b16 %v1306, %v1298
    %v1867 = vpack.c.b16 %v1307, %v1299
    %v1868 = vpack.c.b16 %v1308, %v1300
    %v1869 = vpack.c.b16 %v1309, %v1301
    %v1870 = vpack.c.b16 %v1310, %v1302
    %v1871 = vpack.c.b16 %v1311, %v1303
    %v1872 = vpack.c.b16 %v1320, %v1312
    %v1873 = vpack.c.b16 %v1321, %v1313
    %v1874 = vpack.c.b16 %v1322, %v1314
    %v1875 = vpack.c.b16 %v1323, %v1315
    %v1876 = vpack.c.b16 %v1324, %v1316
    %v1877 = vpack.c.b16 %v1325, %v1317
    %v1878 = vpack.c.b16 %v1326, %v1318
    %v1879 = vpack.c.b16 %v1327, %v1319
    %v1880 = vpack.c.b16 %v1336, %v1328
    %v1881 = vpack.c.b16 %v1337, %v1329
    %v1882 = vpack.c.b16 %v1338, %v1330
    %v1883 = vpack.c.b16 %v1339, %v1331
    %v1884 = vpack.c.b16 %v1340, %v1332
    %v1885 = vpack.c.b16 %v1341, %v1333
    %v1886 = vpack.c.b16 %v1342, %v1334
    %v1887 = vpack.c.b16 %v1343, %v1335
    %v1888 = vpack.c.b16 %v1352, %v1344
    %v1889 = vpack.c.b16 %v1353, %v1345
    %v1890 = vpack.c.b16 %v1354, %v1346
    %v1891 = vpack.c.b16 %v1355, %v1347
    %v1892 = vpack.c.b16 %v1356, %v1348
    %v1893 = vpack.c.b16 %v1357, %v1349
    %v1894 = vpack.c.b16 %v1358, %v1350
    %v1895 = vpack.c.b16 %v1359, %v1351
    %v1896 = vpack.c.b16 %v1368, %v1360
    %v1897 = vpack.c.b16 %v1369, %v1361
    %v1898 = vpack.c.b16 %v1370, %v1362
    %v1899 = vpack.c.b16 %v1371, %v1363
    %v1900 = vpack.c.b16 %v1372, %v1364
    %v1901 = vpack.c.b16 %v1373, %v1365
    %v1902 = vpack.c.b16 %v1374, %v1366
    %v1903 = vpack.c.b16 %v1375, %v1367
    %v1904 = vpack.c.b16 %v1384, %v1376
    %v1905 = vpack.c.b16 %v1385, %v1377
    %v1906 = vpack.c.b16 %v1386, %v1378
    %v1907 = vpack.c.b16 %v1387, %v1379
    %v1908 = vpack.c.b16 %v1388, %v1380
    %v1909 = vpack.c.b16 %v1389, %v1381
    %v1910 = vpack.c.b16 %v1390, %v1382
    %v1911 = vpack.c.b16 %v1391, %v1383
    %v1912 = vpack.c.b16 %v1400, %v1392
    %v1913 = vpack.c.b16 %v1401, %v1393
    %v1914 = vpack.c.b16 %v1402, %v1394
    %v1915 = vpack.c.b16 %v1403, %v1395
    %v1916 = vpack.c.b16 %v1404, %v1396
    %v1917 = vpack.c.b16 %v1405, %v1397
    %v1918 = vpack.c.b16 %v1406, %v1398
    %v1919 = vpack.c.b16 %v1407, %v1399
    %v1920 = vpack.c.b16 %v1416, %v1408
    %v1921 = vpack.c.b16 %v1417, %v1409
    %v1922 = vpack.c.b16 %v1418, %v1410
    %v1923 = vpack.c.b16 %v1419, %v1411
    %v1924 = vpack.c.b16 %v1420, %v1412
    %v1925 = vpack.c.b16 %v1421, %v1413
    %v1926 = vpack.c.b16 %v1422, %v1414
    %v1927 = vpack.c.b16 %v1423, %v1415
    %v1928 = vpack.c.b16 %v1432, %v1424
    %v1929 = vpack.c.b16 %v1433, %v1425
    %v1930 = vpack.c.b16 %v1434, %v1426
    %v1931 = vpack.c.b16 %v1435, %v1427
    %v1932 = vpack.c.b16 %v1436, %v1428
    %v1933 = vpack.c.b16 %v1437, %v1429
    %v1934 = vpack.c.b16 %v1438, %v1430
    %v1935 = vpack.c.b16 %v1439, %v1431
    %v1936 = vpack.c.b16 %v1448, %v1440
    %v1937 = vpack.c.b16 %v1449, %v1441
    %v1938 = vpack.c.b16 %v1450, %v1442
    %v1939 = vpack.c.b16 %v1451, %v1443
    %v1940 = vpack.c.b16 %v1452, %v1444
    %v1941 = vpack.c.b16 %v1453, %v1445
    %v1942 = vpack.c.b16 %v1454, %v1446
    %v1943 = vpack.c.b16 %v1455, %v1447
    %v1944 = vpack.c.b16 %v1464, %v1456
    %v1945 = vpack.c.b16 %v1465, %v1457
    %v1946 = vpack.c.b16 %v1466, %v1458
    %v1947 = vpack.c.b16 %v1467, %v1459
    %v1948 = vpack.c.b16 %v1468, %v1460
    %v1949 = vpack.c.b16 %v1469, %v1461
    %v1950 = vpack.c.b16 %v1470, %v1462
    %v1951 = vpack.c.b16 %v1471, %v1463
    %v1952 = vpack.c.b16 %v1480, %v1472
    %v1953 = vpack.c.b16 %v1481, %v1473
    %v1954 = vpack.c.b16 %v1482, %v1474
    %v1955 = vpack.c.b16 %v1483, %v1475
    %v1956 = vpack.c.b16 %v1484, %v1476
    %v1957 = vpack.c.b16 %v1485, %v1477
    %v1958 = vpack.c.b16 %v1486, %v1478
    %v1959 = vpack.c.b16 %v1487, %v1479
    %v1960 = vpack.c.b16 %v1496, %v1488
    %v1961 = vpack.c.b16 %v1497, %v1489
    %v1962 = vpack.c.b16 %v1498, %v1490
    %v1963 = vpack.c.b16 %v1499, %v1491
    %v1964 = vpack.c.b16 %v1500, %v1492
    %v1965 = vpack.c.b16 %v1501, %v1493
    %v1966 = vpack.c.b16 %v1502, %v1494
    %v1967 = vpack.c.b16 %v1503, %v1495
    %v1968 = vpack.c.b16 %v1512, %v1504
    %v1969 = vpack.c.b16 %v1513, %v1505
    %v1970 = vpack.c.b16 %v1514, %v1506
    %v1971 = vpack.c.b16 %v1515, %v1507
    %v1972 = vpack.c.b16 %v1516, %v1508
    %v1973 = vpack.c.b16 %v1517, %v1509
    %v1974 = vpack.c.b16 %v1518, %v1510
    %v1975 = vpack.c.b16 %v1519, %v1511
    %v1976 = vpack.c.b16 %v1528, %v1520
    %v1977 = vpack.c.b16 %v1529, %v1521
    %v1978 = vpack.c.b16 %v1530, %v1522
    %v1979 = vpack.c.b16 %v1531, %v1523
    %v1980 = vpack.c.b16 %v1532, %v1524
    %v1981 = vpack.c.b16 %v1533, %v1525
    %v1982 = vpack.c.b16 %v1534, %v1526
    %v1983 = vpack.c.b16 %v1535, %v1527
    %v1984 = vpack.c.b16 %v1544, %v1536
    %v1985 = vpack.c.b16 %v1545, %v1537
    %v1986 = vpack.c.b16 %v1546, %v1538
    %v1987 = vpack.c.b16 %v1547, %v1539
    %v1988 = vpack.c.b16 %v1548, %v1540
    %v1989 = vpack.c.b16 %v1549, %v1541
    %v1990 = vpack.c.b16 %v1550, %v1542
    %v1991 = vpack.c.b16 %v1551, %v1543
    %v1992 = vpack.c.b16 %v1560, %v1552
    %v1993 = vpack.c.b16 %v1561, %v1553
    %v1994 = vpack.c.b16 %v1562, %v1554
    %v1995 = vpack.c.b16 %v1563, %v1555
    %v1996 = vpack.c.b16 %v1564, %v1556
    %v1997 = vpack.c.b16 %v1565, %v1557
    %v1998 = vpack.c.b16 %v1566, %v1558
    %v1999 = vpack.c.b16 %v1567, %v1559
    %v2000 = vpack.c.b16 %v1576, %v1568
    %v2001 = vpack.c.b16 %v1577, %v1569
    %v2002 = vpack.c.b16 %v1578, %v1570
    %v2003 = vpack.c.b16 %v1579, %v1571
    %v2004 = vpack.c.b16 %v1580, %v1572
    %v2005 = vpack.c.b16 %v1581, %v1573
    %v2006 = vpack.c.b16 %v1582, %v1574
    %v2007 = vpack.c.b16 %v1583, %v1575
    %v2008 = vpack.c.b16 %v1592, %v1584
    %v2009 = vpack.c.b16 %v1593, %v1585
    %v2010 = vpack.c.b16 %v1594, %v1586
    %v2011 = vpack.c.b16 %v1595, %v1587
    %v2012 = vpack.c.b16 %v1596, %v1588
    %v2013 = vpack.c.b16 %v1597, %v1589
    %v2014 = vpack.c.b16 %v1598, %v1590
    %v2015 = vpack.c.b16 %v1599, %v1591
    %v2016 = vpack.c.b16 %v1608, %v1600
    %v2017 = vpack.c.b16 %v1609, %v1601
    %v2018 = vpack.c.b16 %v1610, %v1602
    %v2019 = vpack.c.b16 %v1611, %v1603
    %v2020 = vpack.c.b16 %v1612, %v1604
    %v2021 = vpack.c.b16 %v1613, %v1605
    %v2022 = vpack.c.b16 %v1614, %v1606
    %v2023 = vpack.c.b16 %v1615, %v1607
    %v2024 = vpack.c.b16 %v1624, %v1616
    %v2025 = vpack.c.b16 %v1625, %v1617
    %v2026 = vpack.c.b16 %v1626, %v1618
    %v2027 = vpack.c.b16 %v1627, %v1619
    %v2028 = vpack.c.b16 %v1628, %v1620
    %v2029 = vpack.c.b16 %v1629, %v1621
    %v2030 = vpack.c.b16 %v1630, %v1622
    %v2031 = vpack.c.b16 %v1631, %v1623
    %v2032 = vpack.c.b16 %v1640, %v1632
    %v2033 = vpack.c.b16 %v1641, %v1633
    %v2034 = vpack.c.b16 %v1642, %v1634
    %v2035 = vpack.c.b16 %v1643, %v1635
    %v2036 = vpack.c.b16 %v1644, %v1636
    %v2037 = vpack.c.b16 %v1645, %v1637
    %v2038 = vpack.c.b16 %v1646, %v1638
    %v2039 = vpack.c.b16 %v1647, %v1639
    %v2040 = vpack.c.b16 %v1656, %v1648
    %v2041 = vpack.c.b16 %v1657, %v1649
    %v2042 = vpack.c.b16 %v1658, %v1650
    %v2043 = vpack.c.b16 %v1659, %v1651
    %v2044 = vpack.c.b16 %v1660, %v1652
    %v2045 = vpack.c.b16 %v1661, %v1653
    %v2046 = vpack.c.b16 %v1662, %v1654
    %v2047 = vpack.c.b16 %v1663, %v1655
    %v2048 = vpack.c.b16 %v1672, %v1664
    %v2049 = vpack.c.b16 %v1673, %v1665
    %v2050 = vpack.c.b16 %v1674, %v1666
    %v2051 = vpack.c.b16 %v1675, %v1667
    %v2052 = vpack.c.b16 %v1676, %v1668
    %v2053 = vpack.c.b16 %v1677, %v1669
    %v2054 = vpack.c.b16 %v1678, %v1670
    %v2055 = vpack.c.b16 %v1679, %v1671
    %v2056 = vpack.c.b16 %v1688, %v1680
    %v2057 = vpack.c.b16 %v1689, %v1681
    %v2058 = vpack.c.b16 %v1690, %v1682
    %v2059 = vpack.c.b16 %v1691, %v1683
    %v2060 = vpack.c.b16 %v1692, %v1684
    %v2061 = vpack.c.b16 %v1693, %v1685
    %v2062 = vpack.c.b16 %v1694, %v1686
    %v2063 = vpack.c.b16 %v1695, %v1687
    %v2064 = vpack.c.b16 %v1704, %v1696
    %v2065 = vpack.c.b16 %v1705, %v1697
    %v2066 = vpack.c.b16 %v1706, %v1698
    %v2067 = vpack.c.b16 %v1707, %v1699
    %v2068 = vpack.c.b16 %v1708, %v1700
    %v2069 = vpack.c.b16 %v1709, %v1701
    %v2070 = vpack.c.b16 %v1710, %v1702
    %v2071 = vpack.c.b16 %v1711, %v1703
    %v2072 = vpack.c.b16 %v1720, %v1712
    %v2073 = vpack.c.b16 %v1721, %v1713
    %v2074 = vpack.c.b16 %v1722, %v1714
    %v2075 = vpack.c.b16 %v1723, %v1715
    %v2076 = vpack.c.b16 %v1724, %v1716
    %v2077 = vpack.c.b16 %v1725, %v1717
    %v2078 = vpack.c.b16 %v1726, %v1718
    %v2079 = vpack.c.b16 %v1727, %v1719
    %v2433 = vsel %vm243, %v271, 0
    %v2436 = vsel %vm243, %v277, 0
    %2438 = vmatprep.subr.bf16.mxu0 %v1729
    %2439 = vmatpush1.bf16.msra.mxu0 %v1728
    %2440 = vmatprep.subr.bf16.mxu0 %v1737
    %2441 = vmatpush1.bf16.msra.mxu0 %v1736
    %2442 = vmatprep.subr.bf16.mxu0 %v1745
    %2443 = vmatpush1.bf16.msra.mxu0 %v1744
    %2444 = vmatprep.subr.bf16.mxu0 %v1753
    %2445 = vmatpush1.bf16.msra.mxu0 %v1752
    %2446 = vmatprep.subr.bf16.mxu0 %v1761
    %2447 = vmatpush1.bf16.msra.mxu0 %v1760
    %2448 = vmatprep.subr.bf16.mxu0 %v1769
    %2449 = vmatpush1.bf16.msra.mxu0 %v1768
    %2450 = vmatprep.subr.bf16.mxu0 %v1777
    %2451 = vmatpush1.bf16.msra.mxu0 %v1776
    %2452 = vmatprep.subr.bf16.mxu0 %v1785
    %2453 = vmatpush1.bf16.msra.mxu0 %v1784
    %2454 = vmatprep.subr.bf16.mxu0 %v1793
    %2455 = vmatpush1.bf16.msra.mxu0 %v1792
    %2456 = vmatprep.subr.bf16.mxu0 %v1801
    %2457 = vmatpush1.bf16.msra.mxu0 %v1800
    %2458 = vmatprep.subr.bf16.mxu0 %v1809
    %2459 = vmatpush1.bf16.msra.mxu0 %v1808
    %2460 = vmatprep.subr.bf16.mxu0 %v1817
    %2461 = vmatpush1.bf16.msra.mxu0 %v1816
    %2462 = vmatprep.subr.bf16.mxu0 %v1825
    %2463 = vmatpush1.bf16.msra.mxu0 %v1824
    %2464 = vmatprep.subr.bf16.mxu0 %v1833
    %2465 = vmatpush1.bf16.msra.mxu0 %v1832
    %2466 = vmatprep.subr.bf16.mxu0 %v1841
    %2467 = vmatpush1.bf16.msra.mxu0 %v1840
    %2468 = vmatprep.subr.bf16.mxu0 %v1849
    %2469 = vmatpush1.bf16.msra.mxu0 %v1848
    %2470 = vmatprep.mubr.bf16.mxu0 %v267
    %2471 = vmatmul.mubr.bf16.gmra.mrb[0].mxu0 %v266
    %v2472 = vpop.f32.mrb[0].mxu0
    %v2473 = vadd.f32 %v635, %v2472
    %v2474 = vpop.f32.mrb[0].mxu0
    %v2475 = vadd.f32 %v639, %v2474
    %v2476 = vpop.f32.mrb[0].mxu0
    %v2477 = vadd.f32 %v635, %v2476
    %v2478 = vpop.f32.mrb[0].mxu0
    %v2479 = vadd.f32 %v639, %v2478
    %2480 = vmatprep.mubr.bf16.mxu0 %v273
    %2481 = vmatmul.mubr.bf16.gmra.mrb[0].mxu0 %v272
    %v2482 = vpop.f32.mrb[0].mxu0
    %v2483 = vadd.f32 %v635, %v2482
    %v2484 = vpop.f32.mrb[0].mxu0
    %v2485 = vadd.f32 %v639, %v2484
    %v2486 = vpop.f32.mrb[0].mxu0
    %v2487 = vadd.f32 %v635, %v2486
    %v2488 = vpop.f32.mrb[0].mxu0
    %v2489 = vadd.f32 %v639, %v2488
    %2490 = vdwg.mxu0
    %2491 = vmatprep.subr.bf16.mxu0 %v1857
    %2492 = vmatpush1.bf16.msra.mxu0 %v1856
    %2493 = vmatprep.subr.bf16.mxu0 %v1865
    %2494 = vmatpush1.bf16.msra.mxu0 %v1864
    %2495 = vmatprep.subr.bf16.mxu0 %v1873
    %2496 = vmatpush1.bf16.msra.mxu0 %v1872
    %2497 = vmatprep.subr.bf16.mxu0 %v1881
    %2498 = vmatpush1.bf16.msra.mxu0 %v1880
    %2499 = vmatprep.subr.bf16.mxu0 %v1889
    %2500 = vmatpush1.bf16.msra.mxu0 %v1888
    %2501 = vmatprep.subr.bf16.mxu0 %v1897
    %2502 = vmatpush1.bf16.msra.mxu0 %v1896
    %2503 = vmatprep.subr.bf16.mxu0 %v1905
    %2504 = vmatpush1.bf16.msra.mxu0 %v1904
    %2505 = vmatprep.subr.bf16.mxu0 %v1913
    %2506 = vmatpush1.bf16.msra.mxu0 %v1912
    %2507 = vmatprep.subr.bf16.mxu0 %v1921
    %2508 = vmatpush1.bf16.msra.mxu0 %v1920
    %2509 = vmatprep.subr.bf16.mxu0 %v1929
    %2510 = vmatpush1.bf16.msra.mxu0 %v1928
    %2511 = vmatprep.subr.bf16.mxu0 %v1937
    %2512 = vmatpush1.bf16.msra.mxu0 %v1936
    %2513 = vmatprep.subr.bf16.mxu0 %v1945
    %2514 = vmatpush1.bf16.msra.mxu0 %v1944
    %2515 = vmatprep.subr.bf16.mxu0 %v1953
    %2516 = vmatpush1.bf16.msra.mxu0 %v1952
    %2517 = vmatprep.subr.bf16.mxu0 %v1961
    %2518 = vmatpush1.bf16.msra.mxu0 %v1960
    %2519 = vmatprep.subr.bf16.mxu0 %v1969
    %2520 = vmatpush1.bf16.msra.mxu0 %v1968
    %2521 = vmatprep.subr.bf16.mxu0 %v1977
    %2522 = vmatpush1.bf16.msra.mxu0 %v1976
    %2523 = vmatprep.mubr.bf16.mxu0 %v269
    %2524 = vmatmul.mubr.bf16.gmra.mrb[0].mxu0 %v268
    %v2525 = vpop.f32.mrb[0].mxu0
    %v2526 = vadd.f32 %v2473, %v2525
    %v2527 = vpop.f32.mrb[0].mxu0
    %v2528 = vadd.f32 %v2475, %v2527
    %v2529 = vpop.f32.mrb[0].mxu0
    %v2530 = vadd.f32 %v2477, %v2529
    %v2531 = vpop.f32.mrb[0].mxu0
    %v2532 = vadd.f32 %v2479, %v2531
    %2533 = vmatprep.mubr.bf16.mxu0 %v275
    %2534 = vmatmul.mubr.bf16.gmra.mrb[0].mxu0 %v274
    %v2535 = vpop.f32.mrb[0].mxu0
    %v2536 = vadd.f32 %v2483, %v2535
    %v2537 = vpop.f32.mrb[0].mxu0
    %v2538 = vadd.f32 %v2485, %v2537
    %v2539 = vpop.f32.mrb[0].mxu0
    %v2540 = vadd.f32 %v2487, %v2539
    %v2541 = vpop.f32.mrb[0].mxu0
    %v2542 = vadd.f32 %v2489, %v2541
    %2543 = vdwg.mxu0
    %2544 = vmatprep.subr.bf16.mxu0 %v1985
    %2545 = vmatpush1.bf16.msra.mxu0 %v1984
    %2546 = vmatprep.subr.bf16.mxu0 %v1993
    %2547 = vmatpush1.bf16.msra.mxu0 %v1992
    %2548 = vmatprep.subr.bf16.mxu0 %v2001
    %2549 = vmatpush1.bf16.msra.mxu0 %v2000
    %2550 = vmatprep.subr.bf16.mxu0 %v2009
    %2551 = vmatpush1.bf16.msra.mxu0 %v2008
    %2552 = vmatprep.subr.bf16.mxu0 %v2017
    %2553 = vmatpush1.bf16.msra.mxu0 %v2016
    %2554 = vmatprep.subr.bf16.mxu0 %v2025
    %2555 = vmatpush1.bf16.msra.mxu0 %v2024
    %2556 = vmatprep.subr.bf16.mxu0 %v2033
    %2557 = vmatpush1.bf16.msra.mxu0 %v2032
    %2558 = vmatprep.subr.bf16.mxu0 %v2041
    %2559 = vmatpush1.bf16.msra.mxu0 %v2040
    %2560 = vmatprep.subr.bf16.mxu0 %v2049
    %2561 = vmatpush1.bf16.msra.mxu0 %v2048
    %2562 = vmatprep.subr.bf16.mxu0 %v2057
    %2563 = vmatpush1.bf16.msra.mxu0 %v2056
    %2564 = vmatprep.subr.bf16.mxu0 %v2065
    %2565 = vmatpush1.bf16.msra.mxu0 %v2064
    %2566 = vmatprep.subr.bf16.mxu0 %v2073
    %2567 = vmatpush1.bf16.msra.mxu0 %v2072
    %2568 = vmatprep.subr.bf16.mxu0 0
    %2569 = vmatpush1.bf16.msra.mxu0 0
    %2570 = vmatprep.subr.bf16.mxu0 0
    %2571 = vmatpush1.bf16.msra.mxu0 0
    %2572 = vmatprep.subr.bf16.mxu0 0
    %2573 = vmatpush1.bf16.msra.mxu0 0
    %2574 = vmatprep.subr.bf16.mxu0 0
    %2575 = vmatpush1.bf16.msra.mxu0 0
    %2576 = vmatprep.mubr.bf16.mxu0 %v2433
    %2577 = vmatmul.mubr.bf16.gmra.mrb[0].mxu0 %v270
    %v2578 = vpop.f32.mrb[0].mxu0
    %v2579 = vadd.f32 %v2526, %v2578
    %v2580 = vpop.f32.mrb[0].mxu0
    %v2581 = vadd.f32 %v2528, %v2580
    %v2582 = vpop.f32.mrb[0].mxu0
    %v2583 = vadd.f32 %v2530, %v2582
    %v2584 = vpop.f32.mrb[0].mxu0
    %v2585 = vadd.f32 %v2532, %v2584
    %2586 = vmatprep.mubr.bf16.mxu0 %v2436
    %2587 = vmatmul.mubr.bf16.gmra.mrb[0].mxu0 %v276
    %v2588 = vpop.f32.mrb[0].mxu0
    %v2589 = vadd.f32 %v2536, %v2588
    %v2590 = vpop.f32.mrb[0].mxu0
    %v2591 = vadd.f32 %v2538, %v2590
    %v2592 = vpop.f32.mrb[0].mxu0
    %v2593 = vadd.f32 %v2540, %v2592
    %v2594 = vpop.f32.mrb[0].mxu0
    %v2595 = vadd.f32 %v2542, %v2594
    %2596 = vdwg.mxu0
    %2597 = vmatprep.subr.bf16.mxu0 %v1731
    %2598 = vmatpush1.bf16.msra.mxu0 %v1730
    %2599 = vmatprep.subr.bf16.mxu0 %v1739
    %2600 = vmatpush1.bf16.msra.mxu0 %v1738
    %2601 = vmatprep.subr.bf16.mxu0 %v1747
    %2602 = vmatpush1.bf16.msra.mxu0 %v1746
    %2603 = vmatprep.subr.bf16.mxu0 %v1755
    %2604 = vmatpush1.bf16.msra.mxu0 %v1754
    %2605 = vmatprep.subr.bf16.mxu0 %v1763
    %2606 = vmatpush1.bf16.msra.mxu0 %v1762
    %2607 = vmatprep.subr.bf16.mxu0 %v1771
    %2608 = vmatpush1.bf16.msra.mxu0 %v1770
    %2609 = vmatprep.subr.bf16.mxu0 %v1779
    %2610 = vmatpush1.bf16.msra.mxu0 %v1778
    %2611 = vmatprep.subr.bf16.mxu0 %v1787
    %2612 = vmatpush1.bf16.msra.mxu0 %v1786
    %2613 = vmatprep.subr.bf16.mxu0 %v1795
    %2614 = vmatpush1.bf16.msra.mxu0 %v1794
    %2615 = vmatprep.subr.bf16.mxu0 %v1803
    %2616 = vmatpush1.bf16.msra.mxu0 %v1802
    %2617 = vmatprep.subr.bf16.mxu0 %v1811
    %2618 = vmatpush1.bf16.msra.mxu0 %v1810
    %2619 = vmatprep.subr.bf16.mxu0 %v1819
    %2620 = vmatpush1.bf16.msra.mxu0 %v1818
    %2621 = vmatprep.subr.bf16.mxu0 %v1827
    %2622 = vmatpush1.bf16.msra.mxu0 %v1826
    %2623 = vmatprep.subr.bf16.mxu0 %v1835
    %2624 = vmatpush1.bf16.msra.mxu0 %v1834
    %2625 = vmatprep.subr.bf16.mxu0 %v1843
    %2626 = vmatpush1.bf16.msra.mxu0 %v1842
    %2627 = vmatprep.subr.bf16.mxu0 %v1851
    %2628 = vmatpush1.bf16.msra.mxu0 %v1850
    %2629 = vmatprep.mubr.bf16.mxu0 %v267
    %2630 = vmatmul.mubr.bf16.gmra.mrb[0].mxu0 %v266
    %v2631 = vpop.f32.mrb[0].mxu0
    %v2632 = vadd.f32 %v643, %v2631
    %v2633 = vpop.f32.mrb[0].mxu0
    %v2634 = vadd.f32 %v647, %v2633
    %v2635 = vpop.f32.mrb[0].mxu0
    %v2636 = vadd.f32 %v643, %v2635
    %v2637 = vpop.f32.mrb[0].mxu0
    %v2638 = vadd.f32 %v647, %v2637
    %2639 = vmatprep.mubr.bf16.mxu0 %v273
    %2640 = vmatmul.mubr.bf16.gmra.mrb[0].mxu0 %v272
    %v2641 = vpop.f32.mrb[0].mxu0
    %v2642 = vadd.f32 %v643, %v2641
    %v2643 = vpop.f32.mrb[0].mxu0
    %v2644 = vadd.f32 %v647, %v2643
    %v2645 = vpop.f32.mrb[0].mxu0
    %v2646 = vadd.f32 %v643, %v2645
    %v2647 = vpop.f32.mrb[0].mxu0
    %v2648 = vadd.f32 %v647, %v2647
    %2649 = vdwg.mxu0
    %2650 = vmatprep.subr.bf16.mxu0 %v1859
    %2651 = vmatpush1.bf16.msra.mxu0 %v1858
    %2652 = vmatprep.subr.bf16.mxu0 %v1867
    %2653 = vmatpush1.bf16.msra.mxu0 %v1866
    %2654 = vmatprep.subr.bf16.mxu0 %v1875
    %2655 = vmatpush1.bf16.msra.mxu0 %v1874
    %2656 = vmatprep.subr.bf16.mxu0 %v1883
    %2657 = vmatpush1.bf16.msra.mxu0 %v1882
    %2658 = vmatprep.subr.bf16.mxu0 %v1891
    %2659 = vmatpush1.bf16.msra.mxu0 %v1890
    %2660 = vmatprep.subr.bf16.mxu0 %v1899
    %2661 = vmatpush1.bf16.msra.mxu0 %v1898
    %2662 = vmatprep.subr.bf16.mxu0 %v1907
    %2663 = vmatpush1.bf16.msra.mxu0 %v1906
    %2664 = vmatprep.subr.bf16.mxu0 %v1915
    %2665 = vmatpush1.bf16.msra.mxu0 %v1914
    %2666 = vmatprep.subr.bf16.mxu0 %v1923
    %2667 = vmatpush1.bf16.msra.mxu0 %v1922
    %2668 = vmatprep.subr.bf16.mxu0 %v1931
    %2669 = vmatpush1.bf16.msra.mxu0 %v1930
    %2670 = vmatprep.subr.bf16.mxu0 %v1939
    %2671 = vmatpush1.bf16.msra.mxu0 %v1938
    %2672 = vmatprep.subr.bf16.mxu0 %v1947
    %2673 = vmatpush1.bf16.msra.mxu0 %v1946
    %2674 = vmatprep.subr.bf16.mxu0 %v1955
    %2675 = vmatpush1.bf16.msra.mxu0 %v1954
    %2676 = vmatprep.subr.bf16.mxu0 %v1963
    %2677 = vmatpush1.bf16.msra.mxu0 %v1962
    %2678 = vmatprep.subr.bf16.mxu0 %v1971
    %2679 = vmatpush1.bf16.msra.mxu0 %v1970
    %2680 = vmatprep.subr.bf16.mxu0 %v1979
    %2681 = vmatpush1.bf16.msra.mxu0 %v1978
    %2682 = vmatprep.mubr.bf16.mxu0 %v269
    %2683 = vmatmul.mubr.bf16.gmra.mrb[0].mxu0 %v268
    %v2684 = vpop.f32.mrb[0].mxu0
    %v2685 = vadd.f32 %v2632, %v2684
    %v2686 = vpop.f32.mrb[0].mxu0
    %v2687 = vadd.f32 %v2634, %v2686
    %v2688 = vpop.f32.mrb[0].mxu0
    %v2689 = vadd.f32 %v2636, %v2688
    %v2690 = vpop.f32.mrb[0].mxu0
    %v2691 = vadd.f32 %v2638, %v2690
    %2692 = vmatprep.mubr.bf16.mxu0 %v275
    %2693 = vmatmul.mubr.bf16.gmra.mrb[0].mxu0 %v274
    %v2694 = vpop.f32.mrb[0].mxu0
    %v2695 = vadd.f32 %v2642, %v2694
    %v2696 = vpop.f32.mrb[0].mxu0
    %v2697 = vadd.f32 %v2644, %v2696
    %v2698 = vpop.f32.mrb[0].mxu0
    %v2699 = vadd.f32 %v2646, %v2698
    %v2700 = vpop.f32.mrb[0].mxu0
    %v2701 = vadd.f32 %v2648, %v2700
    %2702 = vdwg.mxu0
    %2703 = vmatprep.subr.bf16.mxu0 %v1987
    %2704 = vmatpush1.bf16.msra.mxu0 %v1986
    %2705 = vmatprep.subr.bf16.mxu0 %v1995
    %2706 = vmatpush1.bf16.msra.mxu0 %v1994
    %2707 = vmatprep.subr.bf16.mxu0 %v2003
    %2708 = vmatpush1.bf16.msra.mxu0 %v2002
    %2709 = vmatprep.subr.bf16.mxu0 %v2011
    %2710 = vmatpush1.bf16.msra.mxu0 %v2010
    %2711 = vmatprep.subr.bf16.mxu0 %v2019
    %2712 = vmatpush1.bf16.msra.mxu0 %v2018
    %2713 = vmatprep.subr.bf16.mxu0 %v2027
    %2714 = vmatpush1.bf16.msra.mxu0 %v2026
    %2715 = vmatprep.subr.bf16.mxu0 %v2035
    %2716 = vmatpush1.bf16.msra.mxu0 %v2034
    %2717 = vmatprep.subr.bf16.mxu0 %v2043
    %2718 = vmatpush1.bf16.msra.mxu0 %v2042
    %2719 = vmatprep.subr.bf16.mxu0 %v2051
    %2720 = vmatpush1.bf16.msra.mxu0 %v2050
    %2721 = vmatprep.subr.bf16.mxu0 %v2059
    %2722 = vmatpush1.bf16.msra.mxu0 %v2058
    %2723 = vmatprep.subr.bf16.mxu0 %v2067
    %2724 = vmatpush1.bf16.msra.mxu0 %v2066
    %2725 = vmatprep.subr.bf16.mxu0 %v2075
    %2726 = vmatpush1.bf16.msra.mxu0 %v2074
    %2727 = vmatprep.subr.bf16.mxu0 0
    %2728 = vmatpush1.bf16.msra.mxu0 0
    %2729 = vmatprep.subr.bf16.mxu0 0
    %2730 = vmatpush1.bf16.msra.mxu0 0
    %2731 = vmatprep.subr.bf16.mxu0 0
    %2732 = vmatpush1.bf16.msra.mxu0 0
    %2733 = vmatprep.subr.bf16.mxu0 0
    %2734 = vmatpush1.bf16.msra.mxu0 0
    %2735 = vmatprep.mubr.bf16.mxu0 %v2433
    %2736 = vmatmul.mubr.bf16.gmra.mrb[0].mxu0 %v270
    %v2737 = vpop.f32.mrb[0].mxu0
    %v2738 = vadd.f32 %v2685, %v2737
    %v2739 = vpop.f32.mrb[0].mxu0
    %v2740 = vadd.f32 %v2687, %v2739
    %v2741 = vpop.f32.mrb[0].mxu0
    %v2742 = vadd.f32 %v2689, %v2741
    %v2743 = vpop.f32.mrb[0].mxu0
    %v2744 = vadd.f32 %v2691, %v2743
    %2745 = vmatprep.mubr.bf16.mxu0 %v2436
    %2746 = vmatmul.mubr.bf16.gmra.mrb[0].mxu0 %v276
    %v2747 = vpop.f32.mrb[0].mxu0
    %v2748 = vadd.f32 %v2695, %v2747
    %v2749 = vpop.f32.mrb[0].mxu0
    %v2750 = vadd.f32 %v2697, %v2749
    %v2751 = vpop.f32.mrb[0].mxu0
    %v2752 = vadd.f32 %v2699, %v2751
    %v2753 = vpop.f32.mrb[0].mxu0
    %v2754 = vadd.f32 %v2701, %v2753
    %2755 = vdwg.mxu0
    %2756 = vmatprep.subr.bf16.mxu0 %v1733
    %2757 = vmatpush1.bf16.msra.mxu0 %v1732
    %2758 = vmatprep.subr.bf16.mxu0 %v1741
    %2759 = vmatpush1.bf16.msra.mxu0 %v1740
    %2760 = vmatprep.subr.bf16.mxu0 %v1749
    %2761 = vmatpush1.bf16.msra.mxu0 %v1748
    %2762 = vmatprep.subr.bf16.mxu0 %v1757
    %2763 = vmatpush1.bf16.msra.mxu0 %v1756
    %2764 = vmatprep.subr.bf16.mxu0 %v1765
    %2765 = vmatpush1.bf16.msra.mxu0 %v1764
    %2766 = vmatprep.subr.bf16.mxu0 %v1773
    %2767 = vmatpush1.bf16.msra.mxu0 %v1772
    %2768 = vmatprep.subr.bf16.mxu0 %v1781
    %2769 = vmatpush1.bf16.msra.mxu0 %v1780
    %2770 = vmatprep.subr.bf16.mxu0 %v1789
    %2771 = vmatpush1.bf16.msra.mxu0 %v1788
    %2772 = vmatprep.subr.bf16.mxu0 %v1797
    %2773 = vmatpush1.bf16.msra.mxu0 %v1796
    %2774 = vmatprep.subr.bf16.mxu0 %v1805
    %2775 = vmatpush1.bf16.msra.mxu0 %v1804
    %2776 = vmatprep.subr.bf16.mxu0 %v1813
    %2777 = vmatpush1.bf16.msra.mxu0 %v1812
    %2778 = vmatprep.subr.bf16.mxu0 %v1821
    %2779 = vmatpush1.bf16.msra.mxu0 %v1820
    %2780 = vmatprep.subr.bf16.mxu0 %v1829
    %2781 = vmatpush1.bf16.msra.mxu0 %v1828
    %2782 = vmatprep.subr.bf16.mxu0 %v1837
    %2783 = vmatpush1.bf16.msra.mxu0 %v1836
    %2784 = vmatprep.subr.bf16.mxu0 %v1845
    %2785 = vmatpush1.bf16.msra.mxu0 %v1844
    %2786 = vmatprep.subr.bf16.mxu0 %v1853
    %2787 = vmatpush1.bf16.msra.mxu0 %v1852
    %2788 = vmatprep.mubr.bf16.mxu0 %v267
    %2789 = vmatmul.mubr.bf16.gmra.mrb[0].mxu0 %v266
    %v2790 = vpop.f32.mrb[0].mxu0
    %v2791 = vadd.f32 %v651, %v2790
    %v2792 = vpop.f32.mrb[0].mxu0
    %v2793 = vadd.f32 %v655, %v2792
    %v2794 = vpop.f32.mrb[0].mxu0
    %v2795 = vadd.f32 %v651, %v2794
    %v2796 = vpop.f32.mrb[0].mxu0
    %v2797 = vadd.f32 %v655, %v2796
    %2798 = vmatprep.mubr.bf16.mxu0 %v273
    %2799 = vmatmul.mubr.bf16.gmra.mrb[0].mxu0 %v272
    %v2800 = vpop.f32.mrb[0].mxu0
    %v2801 = vadd.f32 %v651, %v2800
    %v2802 = vpop.f32.mrb[0].mxu0
    %v2803 = vadd.f32 %v655, %v2802
    %v2804 = vpop.f32.mrb[0].mxu0
    %v2805 = vadd.f32 %v651, %v2804
    %v2806 = vpop.f32.mrb[0].mxu0
    %v2807 = vadd.f32 %v655, %v2806
    %2808 = vdwg.mxu0
    %2809 = vmatprep.subr.bf16.mxu0 %v1861
    %2810 = vmatpush1.bf16.msra.mxu0 %v1860
    %2811 = vmatprep.subr.bf16.mxu0 %v1869
    %2812 = vmatpush1.bf16.msra.mxu0 %v1868
    %2813 = vmatprep.subr.bf16.mxu0 %v1877
    %2814 = vmatpush1.bf16.msra.mxu0 %v1876
    %2815 = vmatprep.subr.bf16.mxu0 %v1885
    %2816 = vmatpush1.bf16.msra.mxu0 %v1884
    %2817 = vmatprep.subr.bf16.mxu0 %v1893
    %2818 = vmatpush1.bf16.msra.mxu0 %v1892
    %2819 = vmatprep.subr.bf16.mxu0 %v1901
    %2820 = vmatpush1.bf16.msra.mxu0 %v1900
    %2821 = vmatprep.subr.bf16.mxu0 %v1909
    %2822 = vmatpush1.bf16.msra.mxu0 %v1908
    %2823 = vmatprep.subr.bf16.mxu0 %v1917
    %2824 = vmatpush1.bf16.msra.mxu0 %v1916
    %2825 = vmatprep.subr.bf16.mxu0 %v1925
    %2826 = vmatpush1.bf16.msra.mxu0 %v1924
    %2827 = vmatprep.subr.bf16.mxu0 %v1933
    %2828 = vmatpush1.bf16.msra.mxu0 %v1932
    %2829 = vmatprep.subr.bf16.mxu0 %v1941
    %2830 = vmatpush1.bf16.msra.mxu0 %v1940
    %2831 = vmatprep.subr.bf16.mxu0 %v1949
    %2832 = vmatpush1.bf16.msra.mxu0 %v1948
    %2833 = vmatprep.subr.bf16.mxu0 %v1957
    %2834 = vmatpush1.bf16.msra.mxu0 %v1956
    %2835 = vmatprep.subr.bf16.mxu0 %v1965
    %2836 = vmatpush1.bf16.msra.mxu0 %v1964
    %2837 = vmatprep.subr.bf16.mxu0 %v1973
    %2838 = vmatpush1.bf16.msra.mxu0 %v1972
    %2839 = vmatprep.subr.bf16.mxu0 %v1981
    %2840 = vmatpush1.bf16.msra.mxu0 %v1980
    %2841 = vmatprep.mubr.bf16.mxu0 %v269
    %2842 = vmatmul.mubr.bf16.gmra.mrb[0].mxu0 %v268
    %v2843 = vpop.f32.mrb[0].mxu0
    %v2844 = vadd.f32 %v2791, %v2843
    %v2845 = vpop.f32.mrb[0].mxu0
    %v2846 = vadd.f32 %v2793, %v2845
    %v2847 = vpop.f32.mrb[0].mxu0
    %v2848 = vadd.f32 %v2795, %v2847
    %v2849 = vpop.f32.mrb[0].mxu0
    %v2850 = vadd.f32 %v2797, %v2849
    %2851 = vmatprep.mubr.bf16.mxu0 %v275
    %2852 = vmatmul.mubr.bf16.gmra.mrb[0].mxu0 %v274
    %v2853 = vpop.f32.mrb[0].mxu0
    %v2854 = vadd.f32 %v2801, %v2853
    %v2855 = vpop.f32.mrb[0].mxu0
    %v2856 = vadd.f32 %v2803, %v2855
    %v2857 = vpop.f32.mrb[0].mxu0
    %v2858 = vadd.f32 %v2805, %v2857
    %v2859 = vpop.f32.mrb[0].mxu0
    %v2860 = vadd.f32 %v2807, %v2859
    %2861 = vdwg.mxu0
    %2862 = vmatprep.subr.bf16.mxu0 %v1989
    %2863 = vmatpush1.bf16.msra.mxu0 %v1988
    %2864 = vmatprep.subr.bf16.mxu0 %v1997
    %2865 = vmatpush1.bf16.msra.mxu0 %v1996
    %2866 = vmatprep.subr.bf16.mxu0 %v2005
    %2867 = vmatpush1.bf16.msra.mxu0 %v2004
    %2868 = vmatprep.subr.bf16.mxu0 %v2013
    %2869 = vmatpush1.bf16.msra.mxu0 %v2012
    %2870 = vmatprep.subr.bf16.mxu0 %v2021
    %2871 = vmatpush1.bf16.msra.mxu0 %v2020
    %2872 = vmatprep.subr.bf16.mxu0 %v2029
    %2873 = vmatpush1.bf16.msra.mxu0 %v2028
    %2874 = vmatprep.subr.bf16.mxu0 %v2037
    %2875 = vmatpush1.bf16.msra.mxu0 %v2036
    %2876 = vmatprep.subr.bf16.mxu0 %v2045
    %2877 = vmatpush1.bf16.msra.mxu0 %v2044
    %2878 = vmatprep.subr.bf16.mxu0 %v2053
    %2879 = vmatpush1.bf16.msra.mxu0 %v2052
    %2880 = vmatprep.subr.bf16.mxu0 %v2061
    %2881 = vmatpush1.bf16.msra.mxu0 %v2060
    %2882 = vmatprep.subr.bf16.mxu0 %v2069
    %2883 = vmatpush1.bf16.msra.mxu0 %v2068
    %2884 = vmatprep.subr.bf16.mxu0 %v2077
    %2885 = vmatpush1.bf16.msra.mxu0 %v2076
    %2886 = vmatprep.subr.bf16.mxu0 0
    %2887 = vmatpush1.bf16.msra.mxu0 0
    %2888 = vmatprep.subr.bf16.mxu0 0
    %2889 = vmatpush1.bf16.msra.mxu0 0
    %2890 = vmatprep.subr.bf16.mxu0 0
    %2891 = vmatpush1.bf16.msra.mxu0 0
    %2892 = vmatprep.subr.bf16.mxu0 0
    %2893 = vmatpush1.bf16.msra.mxu0 0
    %2894 = vmatprep.mubr.bf16.mxu0 %v2433
    %2895 = vmatmul.mubr.bf16.gmra.mrb[0].mxu0 %v270
    %v2896 = vpop.f32.mrb[0].mxu0
    %v2897 = vadd.f32 %v2844, %v2896
    %v2898 = vpop.f32.mrb[0].mxu0
    %v2899 = vadd.f32 %v2846, %v2898
    %v2900 = vpop.f32.mrb[0].mxu0
    %v2901 = vadd.f32 %v2848, %v2900
    %v2902 = vpop.f32.mrb[0].mxu0
    %v2903 = vadd.f32 %v2850, %v2902
    %2904 = vmatprep.mubr.bf16.mxu0 %v2436
    %2905 = vmatmul.mubr.bf16.gmra.mrb[0].mxu0 %v276
    %v2906 = vpop.f32.mrb[0].mxu0
    %v2907 = vadd.f32 %v2854, %v2906
    %v2908 = vpop.f32.mrb[0].mxu0
    %v2909 = vadd.f32 %v2856, %v2908
    %v2910 = vpop.f32.mrb[0].mxu0
    %v2911 = vadd.f32 %v2858, %v2910
    %v2912 = vpop.f32.mrb[0].mxu0
    %v2913 = vadd.f32 %v2860, %v2912
    %2914 = vdwg.mxu0
    %2915 = vmatprep.subr.bf16.mxu0 %v1735
    %2916 = vmatpush1.bf16.msra.mxu0 %v1734
    %2917 = vmatprep.subr.bf16.mxu0 %v1743
    %2918 = vmatpush1.bf16.msra.mxu0 %v1742
    %2919 = vmatprep.subr.bf16.mxu0 %v1751
    %2920 = vmatpush1.bf16.msra.mxu0 %v1750
    %2921 = vmatprep.subr.bf16.mxu0 %v1759
    %2922 = vmatpush1.bf16.msra.mxu0 %v1758
    %2923 = vmatprep.subr.bf16.mxu0 %v1767
    %2924 = vmatpush1.bf16.msra.mxu0 %v1766
    %2925 = vmatprep.subr.bf16.mxu0 %v1775
    %2926 = vmatpush1.bf16.msra.mxu0 %v1774
    %2927 = vmatprep.subr.bf16.mxu0 %v1783
    %2928 = vmatpush1.bf16.msra.mxu0 %v1782
    %2929 = vmatprep.subr.bf16.mxu0 %v1791
    %2930 = vmatpush1.bf16.msra.mxu0 %v1790
    %2931 = vmatprep.subr.bf16.mxu0 %v1799
    %2932 = vmatpush1.bf16.msra.mxu0 %v1798
    %2933 = vmatprep.subr.bf16.mxu0 %v1807
    %2934 = vmatpush1.bf16.msra.mxu0 %v1806
    %2935 = vmatprep.subr.bf16.mxu0 %v1815
    %2936 = vmatpush1.bf16.msra.mxu0 %v1814
    %2937 = vmatprep.subr.bf16.mxu0 %v1823
    %2938 = vmatpush1.bf16.msra.mxu0 %v1822
    %2939 = vmatprep.subr.bf16.mxu0 %v1831
    %2940 = vmatpush1.bf16.msra.mxu0 %v1830
    %2941 = vmatprep.subr.bf16.mxu0 %v1839
    %2942 = vmatpush1.bf16.msra.mxu0 %v1838
    %2943 = vmatprep.subr.bf16.mxu0 %v1847
    %2944 = vmatpush1.bf16.msra.mxu0 %v1846
    %2945 = vmatprep.subr.bf16.mxu0 %v1855
    %2946 = vmatpush1.bf16.msra.mxu0 %v1854
    %2947 = vmatprep.mubr.bf16.mxu0 %v267
    %2948 = vmatmul.mubr.bf16.gmra.mrb[0].mxu0 %v266
    %v2949 = vpop.f32.mrb[0].mxu0
    %v2950 = vadd.f32 %v659, %v2949
    %v2951 = vpop.f32.mrb[0].mxu0
    %v2952 = vadd.f32 %v663, %v2951
    %v2953 = vpop.f32.mrb[0].mxu0
    %v2954 = vadd.f32 %v659, %v2953
    %v2955 = vpop.f32.mrb[0].mxu0
    %v2956 = vadd.f32 %v663, %v2955
    %2957 = vmatprep.mubr.bf16.mxu0 %v273
    %2958 = vmatmul.mubr.bf16.gmra.mrb[0].mxu0 %v272
    %v2959 = vpop.f32.mrb[0].mxu0
    %v2960 = vadd.f32 %v659, %v2959
    %v2961 = vpop.f32.mrb[0].mxu0
    %v2962 = vadd.f32 %v663, %v2961
    %v2963 = vpop.f32.mrb[0].mxu0
    %v2964 = vadd.f32 %v659, %v2963
    %v2965 = vpop.f32.mrb[0].mxu0
    %v2966 = vadd.f32 %v663, %v2965
    %2967 = vdwg.mxu0
    %2968 = vmatprep.subr.bf16.mxu0 %v1863
    %2969 = vmatpush1.bf16.msra.mxu0 %v1862
    %2970 = vmatprep.subr.bf16.mxu0 %v1871
    %2971 = vmatpush1.bf16.msra.mxu0 %v1870
    %2972 = vmatprep.subr.bf16.mxu0 %v1879
    %2973 = vmatpush1.bf16.msra.mxu0 %v1878
    %2974 = vmatprep.subr.bf16.mxu0 %v1887
    %2975 = vmatpush1.bf16.msra.mxu0 %v1886
    %2976 = vmatprep.subr.bf16.mxu0 %v1895
    %2977 = vmatpush1.bf16.msra.mxu0 %v1894
    %2978 = vmatprep.subr.bf16.mxu0 %v1903
    %2979 = vmatpush1.bf16.msra.mxu0 %v1902
    %2980 = vmatprep.subr.bf16.mxu0 %v1911
    %2981 = vmatpush1.bf16.msra.mxu0 %v1910
    %2982 = vmatprep.subr.bf16.mxu0 %v1919
    %2983 = vmatpush1.bf16.msra.mxu0 %v1918
    %2984 = vmatprep.subr.bf16.mxu0 %v1927
    %2985 = vmatpush1.bf16.msra.mxu0 %v1926
    %2986 = vmatprep.subr.bf16.mxu0 %v1935
    %2987 = vmatpush1.bf16.msra.mxu0 %v1934
    %2988 = vmatprep.subr.bf16.mxu0 %v1943
    %2989 = vmatpush1.bf16.msra.mxu0 %v1942
    %2990 = vmatprep.subr.bf16.mxu0 %v1951
    %2991 = vmatpush1.bf16.msra.mxu0 %v1950
    %2992 = vmatprep.subr.bf16.mxu0 %v1959
    %2993 = vmatpush1.bf16.msra.mxu0 %v1958
    %2994 = vmatprep.subr.bf16.mxu0 %v1967
    %2995 = vmatpush1.bf16.msra.mxu0 %v1966
    %2996 = vmatprep.subr.bf16.mxu0 %v1975
    %2997 = vmatpush1.bf16.msra.mxu0 %v1974
    %2998 = vmatprep.subr.bf16.mxu0 %v1983
    %2999 = vmatpush1.bf16.msra.mxu0 %v1982
    %3000 = vmatprep.mubr.bf16.mxu0 %v269
    %3001 = vmatmul.mubr.bf16.gmra.mrb[0].mxu0 %v268
    %v3002 = vpop.f32.mrb[0].mxu0
    %v3003 = vadd.f32 %v2950, %v3002
    %v3004 = vpop.f32.mrb[0].mxu0
    %v3005 = vadd.f32 %v2952, %v3004
    %v3006 = vpop.f32.mrb[0].mxu0
    %v3007 = vadd.f32 %v2954, %v3006
    %v3008 = vpop.f32.mrb[0].mxu0
    %v3009 = vadd.f32 %v2956, %v3008
    %3010 = vmatprep.mubr.bf16.mxu0 %v275
    %3011 = vmatmul.mubr.bf16.gmra.mrb[0].mxu0 %v274
    %v3012 = vpop.f32.mrb[0].mxu0
    %v3013 = vadd.f32 %v2960, %v3012
    %v3014 = vpop.f32.mrb[0].mxu0
    %v3015 = vadd.f32 %v2962, %v3014
    %v3016 = vpop.f32.mrb[0].mxu0
    %v3017 = vadd.f32 %v2964, %v3016
    %v3018 = vpop.f32.mrb[0].mxu0
    %v3019 = vadd.f32 %v2966, %v3018
    %3020 = vdwg.mxu0
    %3021 = vmatprep.subr.bf16.mxu0 %v1991
    %3022 = vmatpush1.bf16.msra.mxu0 %v1990
    %3023 = vmatprep.subr.bf16.mxu0 %v1999
    %3024 = vmatpush1.bf16.msra.mxu0 %v1998
    %3025 = vmatprep.subr.bf16.mxu0 %v2007
    %3026 = vmatpush1.bf16.msra.mxu0 %v2006
    %3027 = vmatprep.subr.bf16.mxu0 %v2015
    %3028 = vmatpush1.bf16.msra.mxu0 %v2014
    %3029 = vmatprep.subr.bf16.mxu0 %v2023
    %3030 = vmatpush1.bf16.msra.mxu0 %v2022
    %3031 = vmatprep.subr.bf16.mxu0 %v2031
    %3032 = vmatpush1.bf16.msra.mxu0 %v2030
    %3033 = vmatprep.subr.bf16.mxu0 %v2039
    %3034 = vmatpush1.bf16.msra.mxu0 %v2038
    %3035 = vmatprep.subr.bf16.mxu0 %v2047
    %3036 = vmatpush1.bf16.msra.mxu0 %v2046
    %3037 = vmatprep.subr.bf16.mxu0 %v2055
    %3038 = vmatpush1.bf16.msra.mxu0 %v2054
    %3039 = vmatprep.subr.bf16.mxu0 %v2063
    %3040 = vmatpush1.bf16.msra.mxu0 %v2062
    %3041 = vmatprep.subr.bf16.mxu0 %v2071
    %3042 = vmatpush1.bf16.msra.mxu0 %v2070
    %3043 = vmatprep.subr.bf16.mxu0 %v2079
    %3044 = vmatpush1.bf16.msra.mxu0 %v2078
    %3045 = vmatprep.subr.bf16.mxu0 0
    %3046 = vmatpush1.bf16.msra.mxu0 0
    %3047 = vmatprep.subr.bf16.mxu0 0
    %3048 = vmatpush1.bf16.msra.mxu0 0
    %3049 = vmatprep.subr.bf16.mxu0 0
    %3050 = vmatpush1.bf16.msra.mxu0 0
    %3051 = vmatprep.subr.bf16.mxu0 0
    %3052 = vmatpush1.bf16.msra.mxu0 0
    %3053 = vmatprep.mubr.bf16.mxu0 %v2433
    %3054 = vmatmul.mubr.bf16.gmra.mrb[0].mxu0 %v270
    %v3055 = vpop.f32.mrb[0].mxu0
    %v3056 = vadd.f32 %v3003, %v3055
    %v3057 = vpop.f32.mrb[0].mxu0
    %v3058 = vadd.f32 %v3005, %v3057
    %v3059 = vpop.f32.mrb[0].mxu0
    %v3060 = vadd.f32 %v3007, %v3059
    %v3061 = vpop.f32.mrb[0].mxu0
    %v3062 = vadd.f32 %v3009, %v3061
    %3063 = vmatprep.mubr.bf16.mxu0 %v2436
    %3064 = vmatmul.mubr.bf16.gmra.mrb[0].mxu0 %v276
    %v3065 = vpop.f32.mrb[0].mxu0
    %v3066 = vadd.f32 %v3013, %v3065
    %v3067 = vpop.f32.mrb[0].mxu0
    %v3068 = vadd.f32 %v3015, %v3067
    %v3069 = vpop.f32.mrb[0].mxu0
    %v3070 = vadd.f32 %v3017, %v3069
    %v3071 = vpop.f32.mrb[0].mxu0
    %v3072 = vadd.f32 %v3019, %v3071
    %3073 = vdwg.mxu0
    %v3074 = vmax.f32 %v2579, 0.0
    %v3075 = vmax.f32 %v2581, 0.0
    %v3076 = vmax.f32 %v2738, 0.0
    %v3077 = vmax.f32 %v2740, 0.0
    %v3078 = vmax.f32 %v2897, 0.0
    %v3079 = vmax.f32 %v2899, 0.0
    %v3080 = vmax.f32 %v3056, 0.0
    %v3081 = vmax.f32 %v3058, 0.0
    %v3082 = vmax.f32 %v2583, 0.0
    %v3083 = vmax.f32 %v2585, 0.0
    %v3084 = vmax.f32 %v2742, 0.0
    %v3085 = vmax.f32 %v2744, 0.0
    %v3086 = vmax.f32 %v2901, 0.0
    %v3087 = vmax.f32 %v2903, 0.0
    %v3088 = vmax.f32 %v3060, 0.0
    %v3089 = vmax.f32 %v3062, 0.0
    %v3090 = vmax.f32 %v2589, 0.0
    %v3091 = vmax.f32 %v2591, 0.0
    %v3092 = vmax.f32 %v2748, 0.0
    %v3093 = vmax.f32 %v2750, 0.0
    %v3094 = vmax.f32 %v2907, 0.0
    %v3095 = vmax.f32 %v2909, 0.0
    %v3096 = vmax.f32 %v3066, 0.0
    %v3097 = vmax.f32 %v3068, 0.0
    %v3098 = vmax.f32 %v2593, 0.0
    %v3099 = vmax.f32 %v2595, 0.0
    %v3100 = vmax.f32 %v2752, 0.0
    %v3101 = vmax.f32 %v2754, 0.0
    %v3102 = vmax.f32 %v2911, 0.0
    %v3103 = vmax.f32 %v2913, 0.0
    %v3104 = vmax.f32 %v3070, 0.0
    %v3105 = vmax.f32 %v3072, 0.0
    %v3106 = vpack.c.bf16 %v3082, %v3074
    %v3107 = vpack.c.bf16 %v3083, %v3075
    %v3108 = vpack.c.bf16 %v3084, %v3076
    %v3109 = vpack.c.bf16 %v3085, %v3077
    %v3110 = vpack.c.bf16 %v3086, %v3078
    %v3111 = vpack.c.bf16 %v3087, %v3079
    %v3112 = vpack.c.bf16 %v3088, %v3080
    %v3113 = vpack.c.bf16 %v3089, %v3081
    %v3114 = vpack.c.bf16 %v3098, %v3090
    %v3115 = vpack.c.bf16 %v3099, %v3091
    %v3116 = vpack.c.bf16 %v3100, %v3092
    %v3117 = vpack.c.bf16 %v3101, %v3093
    %v3118 = vpack.c.bf16 %v3102, %v3094
    %v3119 = vpack.c.bf16 %v3103, %v3095
    %v3120 = vpack.c.bf16 %v3104, %v3096
    %v3121 = vpack.c.bf16 %v3105, %v3097
    %v3122 = vld [vmem:[#allocation6] sm:$0xff]
    %v3123 = vld [vmem:[#allocation6 + $0x8] sm:$0xff]
    %v3124 = vld [vmem:[#allocation6 + $0x10] sm:$0xff]
    %v3125 = vld [vmem:[#allocation6 + $0x18] sm:$0xff]
    %v3126 = vld [vmem:[#allocation6 + $0x20] sm:$0xff]
    %v3127 = vld [vmem:[#allocation6 + $0x28] sm:$0xff]
    %v3128 = vld [vmem:[#allocation6 + $0x30] sm:$0xff]
    %v3129 = vld [vmem:[#allocation6 + $0x38] sm:$0xff]
    %v3130 = vld [vmem:[#allocation6 + $0x40] sm:$0xff]
    %v3131 = vld [vmem:[#allocation6 + $0x48] sm:$0xff]
    %v3132 = vld [vmem:[#allocation6 + $0x50] sm:$0xff]
    %v3133 = vld [vmem:[#allocation6 + $0x58] sm:$0xff]
    %v3134 = vld [vmem:[#allocation6 + $0x60] sm:$0xff]
    %v3135 = vld [vmem:[#allocation6 + $0x68] sm:$0xff]
    %v3136 = vld [vmem:[#allocation6 + $0x70] sm:$0xff]
    %v3137 = vld [vmem:[#allocation6 + $0x78] sm:$0xff]
    %v3138 = vld [vmem:[#allocation6 + $0x80] sm:$0xff]
    %v3139 = vld [vmem:[#allocation6 + $0x88] sm:$0xff]
    %v3140 = vld [vmem:[#allocation6 + $0x90] sm:$0xff]
    %v3141 = vld [vmem:[#allocation6 + $0x98] sm:$0xff]
    %v3142 = vld [vmem:[#allocation6 + $0xa0] sm:$0xff]
    %v3143 = vld [vmem:[#allocation6 + $0xa8] sm:$0xff]
    %v3144 = vld [vmem:[#allocation6 + $0xb0] sm:$0xff]
    %v3145 = vld [vmem:[#allocation6 + $0xb8] sm:$0xff]
    %v3146 = vld [vmem:[#allocation6 + $0xc0] sm:$0xff]
    %v3147 = vld [vmem:[#allocation6 + $0xc8] sm:$0xff]
    %v3148 = vld [vmem:[#allocation6 + $0xd0] sm:$0xff]
    %v3149 = vld [vmem:[#allocation6 + $0xd8] sm:$0xff]
    %v3150 = vld [vmem:[#allocation6 + $0xe0] sm:$0xff]
    %v3151 = vld [vmem:[#allocation6 + $0xe8] sm:$0xff]
    %v3152 = vld [vmem:[#allocation6 + $0xf0] sm:$0xff]
    %v3153 = vld [vmem:[#allocation6 + $0xf8] sm:$0xff]
    %v3154 = vld [vmem:[#allocation6 + $0x100] sm:$0xff]
    %v3155 = vld [vmem:[#allocation6 + $0x108] sm:$0xff]
    %v3156 = vld [vmem:[#allocation6 + $0x110] sm:$0xff]
    %v3157 = vld [vmem:[#allocation6 + $0x118] sm:$0xff]
    %v3158 = vld [vmem:[#allocation6 + $0x120] sm:$0xff]
    %v3159 = vld [vmem:[#allocation6 + $0x128] sm:$0xff]
    %v3160 = vld [vmem:[#allocation6 + $0x130] sm:$0xff]
    %v3161 = vld [vmem:[#allocation6 + $0x138] sm:$0xff]
    %v3162 = vld [vmem:[#allocation6 + $0x140] sm:$0xff]
    %v3163 = vld [vmem:[#allocation6 + $0x148] sm:$0xff]
    %v3164 = vld [vmem:[#allocation6 + $0x150] sm:$0xff]
    %v3165 = vld [vmem:[#allocation6 + $0x158] sm:$0xff]
    %v3166 = vld [vmem:[#allocation6 + $0x160] sm:$0xff]
    %v3167 = vld [vmem:[#allocation6 + $0x168] sm:$0xff]
    %v3168 = vld [vmem:[#allocation6 + $0x170] sm:$0xff]
    %v3169 = vld [vmem:[#allocation6 + $0x178] sm:$0xff]
    %v3170 = vld [vmem:[#allocation6 + $0x180] sm:$0xff]
    %v3171 = vld [vmem:[#allocation6 + $0x188] sm:$0xff]
    %v3172 = vld [vmem:[#allocation6 + $0x190] sm:$0xff]
    %v3173 = vld [vmem:[#allocation6 + $0x198] sm:$0xff]
    %v3174 = vld [vmem:[#allocation6 + $0x1a0] sm:$0xff]
    %v3175 = vld [vmem:[#allocation6 + $0x1a8] sm:$0xff]
    %v3176 = vld [vmem:[#allocation6 + $0x1b0] sm:$0xff]
    %v3177 = vld [vmem:[#allocation6 + $0x1b8] sm:$0xff]
    %v3178 = vld [vmem:[#allocation6 + $0x1c0] sm:$0xff]
    %v3179 = vld [vmem:[#allocation6 + $0x1c8] sm:$0xff]
    %v3180 = vld [vmem:[#allocation6 + $0x1d0] sm:$0xff]
    %v3181 = vld [vmem:[#allocation6 + $0x1d8] sm:$0xff]
    %v3182 = vld [vmem:[#allocation6 + $0x1e0] sm:$0xff]
    %v3183 = vld [vmem:[#allocation6 + $0x1e8] sm:$0xff]
    %v3184 = vld [vmem:[#allocation6 + $0x1f0] sm:$0xff]
    %v3185 = vld [vmem:[#allocation6 + $0x1f8] sm:$0xff]
    %v3186 = vld [vmem:[#allocation6 + $0x200] sm:$0xff]
    %v3187 = vld [vmem:[#allocation6 + $0x208] sm:$0xff]
    %v3188 = vld [vmem:[#allocation6 + $0x210] sm:$0xff]
    %v3189 = vld [vmem:[#allocation6 + $0x218] sm:$0xff]
    %v3190 = vld [vmem:[#allocation6 + $0x220] sm:$0xff]
    %v3191 = vld [vmem:[#allocation6 + $0x228] sm:$0xff]
    %v3192 = vld [vmem:[#allocation6 + $0x230] sm:$0xff]
    %v3193 = vld [vmem:[#allocation6 + $0x238] sm:$0xff]
    %v3194 = vld [vmem:[#allocation6 + $0x240] sm:$0xff]
    %v3195 = vld [vmem:[#allocation6 + $0x248] sm:$0xff]
    %v3196 = vld [vmem:[#allocation6 + $0x250] sm:$0xff]
    %v3197 = vld [vmem:[#allocation6 + $0x258] sm:$0xff]
    %v3198 = vld [vmem:[#allocation6 + $0x260] sm:$0xff]
    %v3199 = vld [vmem:[#allocation6 + $0x268] sm:$0xff]
    %v3200 = vld [vmem:[#allocation6 + $0x270] sm:$0xff]
    %v3201 = vld [vmem:[#allocation6 + $0x278] sm:$0xff]
    %v3202 = vld [vmem:[#allocation6 + $0x280] sm:$0xff]
    %v3203 = vld [vmem:[#allocation6 + $0x288] sm:$0xff]
    %v3204 = vld [vmem:[#allocation6 + $0x290] sm:$0xff]
    %v3205 = vld [vmem:[#allocation6 + $0x298] sm:$0xff]
    %v3206 = vld [vmem:[#allocation6 + $0x2a0] sm:$0xff]
    %v3207 = vld [vmem:[#allocation6 + $0x2a8] sm:$0xff]
    %v3208 = vld [vmem:[#allocation6 + $0x2b0] sm:$0xff]
    %v3209 = vld [vmem:[#allocation6 + $0x2b8] sm:$0xff]
    %v3210 = vld [vmem:[#allocation6 + $0x2c0] sm:$0xff]
    %v3211 = vld [vmem:[#allocation6 + $0x2c8] sm:$0xff]
    %v3212 = vld [vmem:[#allocation6 + $0x2d0] sm:$0xff]
    %v3213 = vld [vmem:[#allocation6 + $0x2d8] sm:$0xff]
    %v3214 = vld [vmem:[#allocation6 + $0x2e0] sm:$0xff]
    %v3215 = vld [vmem:[#allocation6 + $0x2e8] sm:$0xff]
    %v3216 = vld [vmem:[#allocation6 + $0x2f0] sm:$0xff]
    %v3217 = vld [vmem:[#allocation6 + $0x2f8] sm:$0xff]
    %v3218 = vld [vmem:[#allocation6 + $0x300] sm:$0xff]
    %v3219 = vld [vmem:[#allocation6 + $0x308] sm:$0xff]
    %v3220 = vld [vmem:[#allocation6 + $0x310] sm:$0xff]
    %v3221 = vld [vmem:[#allocation6 + $0x318] sm:$0xff]
    %v3222 = vld [vmem:[#allocation6 + $0x320] sm:$0xff]
    %v3223 = vld [vmem:[#allocation6 + $0x328] sm:$0xff]
    %v3224 = vld [vmem:[#allocation6 + $0x330] sm:$0xff]
    %v3225 = vld [vmem:[#allocation6 + $0x338] sm:$0xff]
    %v3226 = vld [vmem:[#allocation6 + $0x340] sm:$0xff]
    %v3227 = vld [vmem:[#allocation6 + $0x348] sm:$0xff]
    %v3228 = vld [vmem:[#allocation6 + $0x350] sm:$0xff]
    %v3229 = vld [vmem:[#allocation6 + $0x358] sm:$0xff]
    %v3230 = vld [vmem:[#allocation6 + $0x360] sm:$0xff]
    %v3231 = vld [vmem:[#allocation6 + $0x368] sm:$0xff]
    %v3232 = vld [vmem:[#allocation6 + $0x370] sm:$0xff]
    %v3233 = vld [vmem:[#allocation6 + $0x378] sm:$0xff]
    %v3234 = vld [vmem:[#allocation6 + $0x380] sm:$0xff]
    %v3235 = vld [vmem:[#allocation6 + $0x388] sm:$0xff]
    %v3236 = vld [vmem:[#allocation6 + $0x390] sm:$0xff]
    %v3237 = vld [vmem:[#allocation6 + $0x398] sm:$0xff]
    %v3238 = vld [vmem:[#allocation6 + $0x3a0] sm:$0xff]
    %v3239 = vld [vmem:[#allocation6 + $0x3a8] sm:$0xff]
    %v3240 = vld [vmem:[#allocation6 + $0x3b0] sm:$0xff]
    %v3241 = vld [vmem:[#allocation6 + $0x3b8] sm:$0xff]
    %v3242 = vld [vmem:[#allocation6 + $0x3c0] sm:$0xff]
    %v3243 = vld [vmem:[#allocation6 + $0x3c8] sm:$0xff]
    %v3244 = vld [vmem:[#allocation6 + $0x3d0] sm:$0xff]
    %v3245 = vld [vmem:[#allocation6 + $0x3d8] sm:$0xff]
    %v3246 = vld [vmem:[#allocation6 + $0x3e0] sm:$0xff]
    %v3247 = vld [vmem:[#allocation6 + $0x3e8] sm:$0xff]
    %v3248 = vld [vmem:[#allocation6 + $0x3f0] sm:$0xff]
    %v3249 = vld [vmem:[#allocation6 + $0x3f8] sm:$0xff]
    %v3250 = vld [vmem:[#allocation6 + $0x400] sm:$0xff]
    %v3251 = vld [vmem:[#allocation6 + $0x408] sm:$0xff]
    %v3252 = vld [vmem:[#allocation6 + $0x410] sm:$0xff]
    %v3253 = vld [vmem:[#allocation6 + $0x418] sm:$0xff]
    %v3254 = vld [vmem:[#allocation6 + $0x420] sm:$0xff]
    %v3255 = vld [vmem:[#allocation6 + $0x428] sm:$0xff]
    %v3256 = vld [vmem:[#allocation6 + $0x430] sm:$0xff]
    %v3257 = vld [vmem:[#allocation6 + $0x438] sm:$0xff]
    %v3258 = vld [vmem:[#allocation6 + $0x440] sm:$0xff]
    %v3259 = vld [vmem:[#allocation6 + $0x448] sm:$0xff]
    %v3260 = vld [vmem:[#allocation6 + $0x450] sm:$0xff]
    %v3261 = vld [vmem:[#allocation6 + $0x458] sm:$0xff]
    %v3262 = vld [vmem:[#allocation6 + $0x460] sm:$0xff]
    %v3263 = vld [vmem:[#allocation6 + $0x468] sm:$0xff]
    %v3264 = vld [vmem:[#allocation6 + $0x470] sm:$0xff]
    %v3265 = vld [vmem:[#allocation6 + $0x478] sm:$0xff]
    %v3266 = vld [vmem:[#allocation6 + $0x480] sm:$0xff]
    %v3267 = vld [vmem:[#allocation6 + $0x488] sm:$0xff]
    %v3268 = vld [vmem:[#allocation6 + $0x490] sm:$0xff]
    %v3269 = vld [vmem:[#allocation6 + $0x498] sm:$0xff]
    %v3270 = vld [vmem:[#allocation6 + $0x4a0] sm:$0xff]
    %v3271 = vld [vmem:[#allocation6 + $0x4a8] sm:$0xff]
    %v3272 = vld [vmem:[#allocation6 + $0x4b0] sm:$0xff]
    %v3273 = vld [vmem:[#allocation6 + $0x4b8] sm:$0xff]
    %v3274 = vld [vmem:[#allocation6 + $0x4c0] sm:$0xff]
    %v3275 = vld [vmem:[#allocation6 + $0x4c8] sm:$0xff]
    %v3276 = vld [vmem:[#allocation6 + $0x4d0] sm:$0xff]
    %v3277 = vld [vmem:[#allocation6 + $0x4d8] sm:$0xff]
    %v3278 = vld [vmem:[#allocation6 + $0x4e0] sm:$0xff]
    %v3279 = vld [vmem:[#allocation6 + $0x4e8] sm:$0xff]
    %v3280 = vld [vmem:[#allocation6 + $0x4f0] sm:$0xff]
    %v3281 = vld [vmem:[#allocation6 + $0x4f8] sm:$0xff]
    %v3282 = vld [vmem:[#allocation6 + $0x500] sm:$0xff]
    %v3283 = vld [vmem:[#allocation6 + $0x508] sm:$0xff]
    %v3284 = vld [vmem:[#allocation6 + $0x510] sm:$0xff]
    %v3285 = vld [vmem:[#allocation6 + $0x518] sm:$0xff]
    %v3286 = vld [vmem:[#allocation6 + $0x520] sm:$0xff]
    %v3287 = vld [vmem:[#allocation6 + $0x528] sm:$0xff]
    %v3288 = vld [vmem:[#allocation6 + $0x530] sm:$0xff]
    %v3289 = vld [vmem:[#allocation6 + $0x538] sm:$0xff]
    %v3290 = vld [vmem:[#allocation6 + $0x540] sm:$0xff]
    %v3291 = vld [vmem:[#allocation6 + $0x548] sm:$0xff]
    %v3292 = vld [vmem:[#allocation6 + $0x550] sm:$0xff]
    %v3293 = vld [vmem:[#allocation6 + $0x558] sm:$0xff]
    %v3294 = vld [vmem:[#allocation6 + $0x560] sm:$0xff]
    %v3295 = vld [vmem:[#allocation6 + $0x568] sm:$0xff]
    %v3296 = vld [vmem:[#allocation6 + $0x570] sm:$0xff]
    %v3297 = vld [vmem:[#allocation6 + $0x578] sm:$0xff]
    %v3298 = vld [vmem:[#allocation6 + $0x580] sm:$0xff]
    %v3299 = vld [vmem:[#allocation6 + $0x588] sm:$0xff]
    %v3300 = vld [vmem:[#allocation6 + $0x590] sm:$0xff]
    %v3301 = vld [vmem:[#allocation6 + $0x598] sm:$0xff]
    %v3302 = vld [vmem:[#allocation6 + $0x5a0] sm:$0xff]
    %v3303 = vld [vmem:[#allocation6 + $0x5a8] sm:$0xff]
    %v3304 = vld [vmem:[#allocation6 + $0x5b0] sm:$0xff]
    %v3305 = vld [vmem:[#allocation6 + $0x5b8] sm:$0xff]
    %v3306 = vld [vmem:[#allocation6 + $0x5c0] sm:$0xff]
    %v3307 = vld [vmem:[#allocation6 + $0x5c8] sm:$0xff]
    %v3308 = vld [vmem:[#allocation6 + $0x5d0] sm:$0xff]
    %v3309 = vld [vmem:[#allocation6 + $0x5d8] sm:$0xff]
    %v3310 = vld [vmem:[#allocation6 + $0x5e0] sm:$0xff]
    %v3311 = vld [vmem:[#allocation6 + $0x5e8] sm:$0xff]
    %v3312 = vld [vmem:[#allocation6 + $0x5f0] sm:$0xff]
    %v3313 = vld [vmem:[#allocation6 + $0x5f8] sm:$0xff]
    %v3314 = vld [vmem:[#allocation6 + $0x600] sm:$0xff]
    %v3315 = vld [vmem:[#allocation6 + $0x608] sm:$0xff]
    %v3316 = vld [vmem:[#allocation6 + $0x610] sm:$0xff]
    %v3317 = vld [vmem:[#allocation6 + $0x618] sm:$0xff]
    %v3318 = vld [vmem:[#allocation6 + $0x620] sm:$0xff]
    %v3319 = vld [vmem:[#allocation6 + $0x628] sm:$0xff]
    %v3320 = vld [vmem:[#allocation6 + $0x630] sm:$0xff]
    %v3321 = vld [vmem:[#allocation6 + $0x638] sm:$0xff]
    %v3322 = vld [vmem:[#allocation6 + $0x640] sm:$0xff]
    %v3323 = vld [vmem:[#allocation6 + $0x648] sm:$0xff]
    %v3324 = vld [vmem:[#allocation6 + $0x650] sm:$0xff]
    %v3325 = vld [vmem:[#allocation6 + $0x658] sm:$0xff]
    %v3326 = vld [vmem:[#allocation6 + $0x660] sm:$0xff]
    %v3327 = vld [vmem:[#allocation6 + $0x668] sm:$0xff]
    %v3328 = vld [vmem:[#allocation6 + $0x670] sm:$0xff]
    %v3329 = vld [vmem:[#allocation6 + $0x678] sm:$0xff]
    %v3330 = vld [vmem:[#allocation6 + $0x680] sm:$0xff]
    %v3331 = vld [vmem:[#allocation6 + $0x688] sm:$0xff]
    %v3332 = vld [vmem:[#allocation6 + $0x690] sm:$0xff]
    %v3333 = vld [vmem:[#allocation6 + $0x698] sm:$0xff]
    %v3334 = vld [vmem:[#allocation6 + $0x6a0] sm:$0xff]
    %v3335 = vld [vmem:[#allocation6 + $0x6a8] sm:$0xff]
    %v3336 = vld [vmem:[#allocation6 + $0x6b0] sm:$0xff]
    %v3337 = vld [vmem:[#allocation6 + $0x6b8] sm:$0xff]
    %v3338 = vld [vmem:[#allocation6 + $0x6c0] sm:$0xff]
    %v3339 = vld [vmem:[#allocation6 + $0x6c8] sm:$0xff]
    %v3340 = vld [vmem:[#allocation6 + $0x6d0] sm:$0xff]
    %v3341 = vld [vmem:[#allocation6 + $0x6d8] sm:$0xff]
    %v3342 = vld [vmem:[#allocation6 + $0x6e0] sm:$0xff]
    %v3343 = vld [vmem:[#allocation6 + $0x6e8] sm:$0xff]
    %v3344 = vld [vmem:[#allocation6 + $0x6f0] sm:$0xff]
    %v3345 = vld [vmem:[#allocation6 + $0x6f8] sm:$0xff]
    %v3346 = vld [vmem:[#allocation6 + $0x700] sm:$0xff]
    %v3347 = vld [vmem:[#allocation6 + $0x708] sm:$0xff]
    %v3348 = vld [vmem:[#allocation6 + $0x710] sm:$0xff]
    %v3349 = vld [vmem:[#allocation6 + $0x718] sm:$0xff]
    %v3350 = vld [vmem:[#allocation6 + $0x720] sm:$0xff]
    %v3351 = vld [vmem:[#allocation6 + $0x728] sm:$0xff]
    %v3352 = vld [vmem:[#allocation6 + $0x730] sm:$0xff]
    %v3353 = vld [vmem:[#allocation6 + $0x738] sm:$0xff]
    %v3354 = vld [vmem:[#allocation6 + $0x740] sm:$0xff]
    %v3355 = vld [vmem:[#allocation6 + $0x748] sm:$0xff]
    %v3356 = vld [vmem:[#allocation6 + $0x750] sm:$0xff]
    %v3357 = vld [vmem:[#allocation6 + $0x758] sm:$0xff]
    %v3358 = vld [vmem:[#allocation6 + $0x760] sm:$0xff]
    %v3359 = vld [vmem:[#allocation6 + $0x768] sm:$0xff]
    %v3360 = vld [vmem:[#allocation6 + $0x770] sm:$0xff]
    %v3361 = vld [vmem:[#allocation6 + $0x778] sm:$0xff]
    %v3362 = vld [vmem:[#allocation6 + $0x780] sm:$0xff]
    %v3363 = vld [vmem:[#allocation6 + $0x788] sm:$0xff]
    %v3364 = vld [vmem:[#allocation6 + $0x790] sm:$0xff]
    %v3365 = vld [vmem:[#allocation6 + $0x798] sm:$0xff]
    %v3366 = vld [vmem:[#allocation6 + $0x7a0] sm:$0xff]
    %v3367 = vld [vmem:[#allocation6 + $0x7a8] sm:$0xff]
    %v3368 = vld [vmem:[#allocation6 + $0x7b0] sm:$0xff]
    %v3369 = vld [vmem:[#allocation6 + $0x7b8] sm:$0xff]
    %v3370 = vld [vmem:[#allocation6 + $0x7c0] sm:$0xff]
    %v3371 = vld [vmem:[#allocation6 + $0x7c8] sm:$0xff]
    %v3372 = vld [vmem:[#allocation6 + $0x7d0] sm:$0xff]
    %v3373 = vld [vmem:[#allocation6 + $0x7d8] sm:$0xff]
    %v3374 = vld [vmem:[#allocation6 + $0x7e0] sm:$0xff]
    %v3375 = vld [vmem:[#allocation6 + $0x7e8] sm:$0xff]
    %v3376 = vld [vmem:[#allocation6 + $0x7f0] sm:$0xff]
    %v3377 = vld [vmem:[#allocation6 + $0x7f8] sm:$0xff]
    %v3378 = vld [vmem:[#allocation7] sm:$0xf]
    %v3380 = vlaneseq
    %v3381 = vshrl.u32 %v3380, 7
    %v3382 = vsub.s32 0, %v3381
    %v3383 = vrot.slane %v3378, %v3382
    %v3384 = vlaneseq
    %v3385 = vshrl.u32 %v3384, 7
    %v3386 = vsub.s32 1, %v3385
    %v3387 = vrot.slane %v3378, %v3386
    %v3388 = vlaneseq
    %v3389 = vshrl.u32 %v3388, 7
    %v3390 = vsub.s32 2, %v3389
    %v3391 = vrot.slane %v3378, %v3390
    %v3392 = vlaneseq
    %v3393 = vshrl.u32 %v3392, 7
    %v3394 = vsub.s32 3, %v3393
    %v3395 = vrot.slane %v3378, %v3394
    %v3656 = vunpack.c.l.b16 %v3122
    %v3657 = vunpack.c.h.b16 %v3122
    %v3658 = vunpack.c.l.b16 %v3123
    %v3659 = vunpack.c.h.b16 %v3123
    %v3660 = vunpack.c.l.b16 %v3124
    %v3661 = vunpack.c.h.b16 %v3124
    %v3662 = vunpack.c.l.b16 %v3125
    %v3663 = vunpack.c.h.b16 %v3125
    %v3664 = vunpack.c.l.b16 %v3126
    %v3665 = vunpack.c.h.b16 %v3126
    %v3666 = vunpack.c.l.b16 %v3127
    %v3667 = vunpack.c.h.b16 %v3127
    %v3668 = vunpack.c.l.b16 %v3128
    %v3669 = vunpack.c.h.b16 %v3128
    %v3670 = vunpack.c.l.b16 %v3129
    %v3671 = vunpack.c.h.b16 %v3129
    %v3672 = vunpack.c.l.b16 %v3130
    %v3673 = vunpack.c.h.b16 %v3130
    %v3674 = vunpack.c.l.b16 %v3131
    %v3675 = vunpack.c.h.b16 %v3131
    %v3676 = vunpack.c.l.b16 %v3132
    %v3677 = vunpack.c.h.b16 %v3132
    %v3678 = vunpack.c.l.b16 %v3133
    %v3679 = vunpack.c.h.b16 %v3133
    %v3680 = vunpack.c.l.b16 %v3134
    %v3681 = vunpack.c.h.b16 %v3134
    %v3682 = vunpack.c.l.b16 %v3135
    %v3683 = vunpack.c.h.b16 %v3135
    %v3684 = vunpack.c.l.b16 %v3136
    %v3685 = vunpack.c.h.b16 %v3136
    %v3686 = vunpack.c.l.b16 %v3137
    %v3687 = vunpack.c.h.b16 %v3137
    %v3688 = vunpack.c.l.b16 %v3138
    %v3689 = vunpack.c.h.b16 %v3138
    %v3690 = vunpack.c.l.b16 %v3139
    %v3691 = vunpack.c.h.b16 %v3139
    %v3692 = vunpack.c.l.b16 %v3140
    %v3693 = vunpack.c.h.b16 %v3140
    %v3694 = vunpack.c.l.b16 %v3141
    %v3695 = vunpack.c.h.b16 %v3141
    %v3696 = vunpack.c.l.b16 %v3142
    %v3697 = vunpack.c.h.b16 %v3142
    %v3698 = vunpack.c.l.b16 %v3143
    %v3699 = vunpack.c.h.b16 %v3143
    %v3700 = vunpack.c.l.b16 %v3144
    %v3701 = vunpack.c.h.b16 %v3144
    %v3702 = vunpack.c.l.b16 %v3145
    %v3703 = vunpack.c.h.b16 %v3145
    %v3704 = vunpack.c.l.b16 %v3146
    %v3705 = vunpack.c.h.b16 %v3146
    %v3706 = vunpack.c.l.b16 %v3147
    %v3707 = vunpack.c.h.b16 %v3147
    %v3708 = vunpack.c.l.b16 %v3148
    %v3709 = vunpack.c.h.b16 %v3148
    %v3710 = vunpack.c.l.b16 %v3149
    %v3711 = vunpack.c.h.b16 %v3149
    %v3712 = vunpack.c.l.b16 %v3150
    %v3713 = vunpack.c.h.b16 %v3150
    %v3714 = vunpack.c.l.b16 %v3151
    %v3715 = vunpack.c.h.b16 %v3151
    %v3716 = vunpack.c.l.b16 %v3152
    %v3717 = vunpack.c.h.b16 %v3152
    %v3718 = vunpack.c.l.b16 %v3153
    %v3719 = vunpack.c.h.b16 %v3153
    %v3720 = vunpack.c.l.b16 %v3154
    %v3721 = vunpack.c.h.b16 %v3154
    %v3722 = vunpack.c.l.b16 %v3155
    %v3723 = vunpack.c.h.b16 %v3155
    %v3724 = vunpack.c.l.b16 %v3156
    %v3725 = vunpack.c.h.b16 %v3156
    %v3726 = vunpack.c.l.b16 %v3157
    %v3727 = vunpack.c.h.b16 %v3157
    %v3728 = vunpack.c.l.b16 %v3158
    %v3729 = vunpack.c.h.b16 %v3158
    %v3730 = vunpack.c.l.b16 %v3159
    %v3731 = vunpack.c.h.b16 %v3159
    %v3732 = vunpack.c.l.b16 %v3160
    %v3733 = vunpack.c.h.b16 %v3160
    %v3734 = vunpack.c.l.b16 %v3161
    %v3735 = vunpack.c.h.b16 %v3161
    %v3736 = vunpack.c.l.b16 %v3162
    %v3737 = vunpack.c.h.b16 %v3162
    %v3738 = vunpack.c.l.b16 %v3163
    %v3739 = vunpack.c.h.b16 %v3163
    %v3740 = vunpack.c.l.b16 %v3164
    %v3741 = vunpack.c.h.b16 %v3164
    %v3742 = vunpack.c.l.b16 %v3165
    %v3743 = vunpack.c.h.b16 %v3165
    %v3744 = vunpack.c.l.b16 %v3166
    %v3745 = vunpack.c.h.b16 %v3166
    %v3746 = vunpack.c.l.b16 %v3167
    %v3747 = vunpack.c.h.b16 %v3167
    %v3748 = vunpack.c.l.b16 %v3168
    %v3749 = vunpack.c.h.b16 %v3168
    %v3750 = vunpack.c.l.b16 %v3169
    %v3751 = vunpack.c.h.b16 %v3169
    %v3752 = vunpack.c.l.b16 %v3170
    %v3753 = vunpack.c.h.b16 %v3170
    %v3754 = vunpack.c.l.b16 %v3171
    %v3755 = vunpack.c.h.b16 %v3171
    %v3756 = vunpack.c.l.b16 %v3172
    %v3757 = vunpack.c.h.b16 %v3172
    %v3758 = vunpack.c.l.b16 %v3173
    %v3759 = vunpack.c.h.b16 %v3173
    %v3760 = vunpack.c.l.b16 %v3174
    %v3761 = vunpack.c.h.b16 %v3174
    %v3762 = vunpack.c.l.b16 %v3175
    %v3763 = vunpack.c.h.b16 %v3175
    %v3764 = vunpack.c.l.b16 %v3176
    %v3765 = vunpack.c.h.b16 %v3176
    %v3766 = vunpack.c.l.b16 %v3177
    %v3767 = vunpack.c.h.b16 %v3177
    %v3768 = vunpack.c.l.b16 %v3178
    %v3769 = vunpack.c.h.b16 %v3178
    %v3770 = vunpack.c.l.b16 %v3179
    %v3771 = vunpack.c.h.b16 %v3179
    %v3772 = vunpack.c.l.b16 %v3180
    %v3773 = vunpack.c.h.b16 %v3180
    %v3774 = vunpack.c.l.b16 %v3181
    %v3775 = vunpack.c.h.b16 %v3181
    %v3776 = vunpack.c.l.b16 %v3182
    %v3777 = vunpack.c.h.b16 %v3182
    %v3778 = vunpack.c.l.b16 %v3183
    %v3779 = vunpack.c.h.b16 %v3183
    %v3780 = vunpack.c.l.b16 %v3184
    %v3781 = vunpack.c.h.b16 %v3184
    %v3782 = vunpack.c.l.b16 %v3185
    %v3783 = vunpack.c.h.b16 %v3185
    %v3784 = vunpack.c.l.b16 %v3186
    %v3785 = vunpack.c.h.b16 %v3186
    %v3786 = vunpack.c.l.b16 %v3187
    %v3787 = vunpack.c.h.b16 %v3187
    %v3788 = vunpack.c.l.b16 %v3188
    %v3789 = vunpack.c.h.b16 %v3188
    %v3790 = vunpack.c.l.b16 %v3189
    %v3791 = vunpack.c.h.b16 %v3189
    %v3792 = vunpack.c.l.b16 %v3190
    %v3793 = vunpack.c.h.b16 %v3190
    %v3794 = vunpack.c.l.b16 %v3191
    %v3795 = vunpack.c.h.b16 %v3191
    %v3796 = vunpack.c.l.b16 %v3192
    %v3797 = vunpack.c.h.b16 %v3192
    %v3798 = vunpack.c.l.b16 %v3193
    %v3799 = vunpack.c.h.b16 %v3193
    %v3800 = vunpack.c.l.b16 %v3194
    %v3801 = vunpack.c.h.b16 %v3194
    %v3802 = vunpack.c.l.b16 %v3195
    %v3803 = vunpack.c.h.b16 %v3195
    %v3804 = vunpack.c.l.b16 %v3196
    %v3805 = vunpack.c.h.b16 %v3196
    %v3806 = vunpack.c.l.b16 %v3197
    %v3807 = vunpack.c.h.b16 %v3197
    %v3808 = vunpack.c.l.b16 %v3198
    %v3809 = vunpack.c.h.b16 %v3198
    %v3810 = vunpack.c.l.b16 %v3199
    %v3811 = vunpack.c.h.b16 %v3199
    %v3812 = vunpack.c.l.b16 %v3200
    %v3813 = vunpack.c.h.b16 %v3200
    %v3814 = vunpack.c.l.b16 %v3201
    %v3815 = vunpack.c.h.b16 %v3201
    %v3816 = vunpack.c.l.b16 %v3202
    %v3817 = vunpack.c.h.b16 %v3202
    %v3818 = vunpack.c.l.b16 %v3203
    %v3819 = vunpack.c.h.b16 %v3203
    %v3820 = vunpack.c.l.b16 %v3204
    %v3821 = vunpack.c.h.b16 %v3204
    %v3822 = vunpack.c.l.b16 %v3205
    %v3823 = vunpack.c.h.b16 %v3205
    %v3824 = vunpack.c.l.b16 %v3206
    %v3825 = vunpack.c.h.b16 %v3206
    %v3826 = vunpack.c.l.b16 %v3207
    %v3827 = vunpack.c.h.b16 %v3207
    %v3828 = vunpack.c.l.b16 %v3208
    %v3829 = vunpack.c.h.b16 %v3208
    %v3830 = vunpack.c.l.b16 %v3209
    %v3831 = vunpack.c.h.b16 %v3209
    %v3832 = vunpack.c.l.b16 %v3210
    %v3833 = vunpack.c.h.b16 %v3210
    %v3834 = vunpack.c.l.b16 %v3211
    %v3835 = vunpack.c.h.b16 %v3211
    %v3836 = vunpack.c.l.b16 %v3212
    %v3837 = vunpack.c.h.b16 %v3212
    %v3838 = vunpack.c.l.b16 %v3213
    %v3839 = vunpack.c.h.b16 %v3213
    %v3840 = vunpack.c.l.b16 %v3214
    %v3841 = vunpack.c.h.b16 %v3214
    %v3842 = vunpack.c.l.b16 %v3215
    %v3843 = vunpack.c.h.b16 %v3215
    %v3844 = vunpack.c.l.b16 %v3216
    %v3845 = vunpack.c.h.b16 %v3216
    %v3846 = vunpack.c.l.b16 %v3217
    %v3847 = vunpack.c.h.b16 %v3217
    %v3848 = vunpack.c.l.b16 %v3218
    %v3849 = vunpack.c.h.b16 %v3218
    %v3850 = vunpack.c.l.b16 %v3219
    %v3851 = vunpack.c.h.b16 %v3219
    %v3852 = vunpack.c.l.b16 %v3220
    %v3853 = vunpack.c.h.b16 %v3220
    %v3854 = vunpack.c.l.b16 %v3221
    %v3855 = vunpack.c.h.b16 %v3221
    %v3856 = vunpack.c.l.b16 %v3222
    %v3857 = vunpack.c.h.b16 %v3222
    %v3858 = vunpack.c.l.b16 %v3223
    %v3859 = vunpack.c.h.b16 %v3223
    %v3860 = vunpack.c.l.b16 %v3224
    %v3861 = vunpack.c.h.b16 %v3224
    %v3862 = vunpack.c.l.b16 %v3225
    %v3863 = vunpack.c.h.b16 %v3225
    %v3864 = vunpack.c.l.b16 %v3226
    %v3865 = vunpack.c.h.b16 %v3226
    %v3866 = vunpack.c.l.b16 %v3227
    %v3867 = vunpack.c.h.b16 %v3227
    %v3868 = vunpack.c.l.b16 %v3228
    %v3869 = vunpack.c.h.b16 %v3228
    %v3870 = vunpack.c.l.b16 %v3229
    %v3871 = vunpack.c.h.b16 %v3229
    %v3872 = vunpack.c.l.b16 %v3230
    %v3873 = vunpack.c.h.b16 %v3230
    %v3874 = vunpack.c.l.b16 %v3231
    %v3875 = vunpack.c.h.b16 %v3231
    %v3876 = vunpack.c.l.b16 %v3232
    %v3877 = vunpack.c.h.b16 %v3232
    %v3878 = vunpack.c.l.b16 %v3233
    %v3879 = vunpack.c.h.b16 %v3233
    %v3880 = vunpack.c.l.b16 %v3234
    %v3881 = vunpack.c.h.b16 %v3234
    %v3882 = vunpack.c.l.b16 %v3235
    %v3883 = vunpack.c.h.b16 %v3235
    %v3884 = vunpack.c.l.b16 %v3236
    %v3885 = vunpack.c.h.b16 %v3236
    %v3886 = vunpack.c.l.b16 %v3237
    %v3887 = vunpack.c.h.b16 %v3237
    %v3888 = vunpack.c.l.b16 %v3238
    %v3889 = vunpack.c.h.b16 %v3238
    %v3890 = vunpack.c.l.b16 %v3239
    %v3891 = vunpack.c.h.b16 %v3239
    %v3892 = vunpack.c.l.b16 %v3240
    %v3893 = vunpack.c.h.b16 %v3240
    %v3894 = vunpack.c.l.b16 %v3241
    %v3895 = vunpack.c.h.b16 %v3241
    %v3896 = vunpack.c.l.b16 %v3242
    %v3897 = vunpack.c.h.b16 %v3242
    %v3898 = vunpack.c.l.b16 %v3243
    %v3899 = vunpack.c.h.b16 %v3243
    %v3900 = vunpack.c.l.b16 %v3244
    %v3901 = vunpack.c.h.b16 %v3244
    %v3902 = vunpack.c.l.b16 %v3245
    %v3903 = vunpack.c.h.b16 %v3245
    %v3904 = vunpack.c.l.b16 %v3246
    %v3905 = vunpack.c.h.b16 %v3246
    %v3906 = vunpack.c.l.b16 %v3247
    %v3907 = vunpack.c.h.b16 %v3247
    %v3908 = vunpack.c.l.b16 %v3248
    %v3909 = vunpack.c.h.b16 %v3248
    %v3910 = vunpack.c.l.b16 %v3249
    %v3911 = vunpack.c.h.b16 %v3249
    %v3912 = vunpack.c.l.b16 %v3250
    %v3913 = vunpack.c.h.b16 %v3250
    %v3914 = vunpack.c.l.b16 %v3251
    %v3915 = vunpack.c.h.b16 %v3251
    %v3916 = vunpack.c.l.b16 %v3252
    %v3917 = vunpack.c.h.b16 %v3252
    %v3918 = vunpack.c.l.b16 %v3253
    %v3919 = vunpack.c.h.b16 %v3253
    %v3920 = vunpack.c.l.b16 %v3254
    %v3921 = vunpack.c.h.b16 %v3254
    %v3922 = vunpack.c.l.b16 %v3255
    %v3923 = vunpack.c.h.b16 %v3255
    %v3924 = vunpack.c.l.b16 %v3256
    %v3925 = vunpack.c.h.b16 %v3256
    %v3926 = vunpack.c.l.b16 %v3257
    %v3927 = vunpack.c.h.b16 %v3257
    %v3928 = vunpack.c.l.b16 %v3258
    %v3929 = vunpack.c.h.b16 %v3258
    %v3930 = vunpack.c.l.b16 %v3259
    %v3931 = vunpack.c.h.b16 %v3259
    %v3932 = vunpack.c.l.b16 %v3260
    %v3933 = vunpack.c.h.b16 %v3260
    %v3934 = vunpack.c.l.b16 %v3261
    %v3935 = vunpack.c.h.b16 %v3261
    %v3936 = vunpack.c.l.b16 %v3262
    %v3937 = vunpack.c.h.b16 %v3262
    %v3938 = vunpack.c.l.b16 %v3263
    %v3939 = vunpack.c.h.b16 %v3263
    %v3940 = vunpack.c.l.b16 %v3264
    %v3941 = vunpack.c.h.b16 %v3264
    %v3942 = vunpack.c.l.b16 %v3265
    %v3943 = vunpack.c.h.b16 %v3265
    %v3944 = vunpack.c.l.b16 %v3266
    %v3945 = vunpack.c.h.b16 %v3266
    %v3946 = vunpack.c.l.b16 %v3267
    %v3947 = vunpack.c.h.b16 %v3267
    %v3948 = vunpack.c.l.b16 %v3268
    %v3949 = vunpack.c.h.b16 %v3268
    %v3950 = vunpack.c.l.b16 %v3269
    %v3951 = vunpack.c.h.b16 %v3269
    %v3952 = vunpack.c.l.b16 %v3270
    %v3953 = vunpack.c.h.b16 %v3270
    %v3954 = vunpack.c.l.b16 %v3271
    %v3955 = vunpack.c.h.b16 %v3271
    %v3956 = vunpack.c.l.b16 %v3272
    %v3957 = vunpack.c.h.b16 %v3272
    %v3958 = vunpack.c.l.b16 %v3273
    %v3959 = vunpack.c.h.b16 %v3273
    %v3960 = vunpack.c.l.b16 %v3274
    %v3961 = vunpack.c.h.b16 %v3274
    %v3962 = vunpack.c.l.b16 %v3275
    %v3963 = vunpack.c.h.b16 %v3275
    %v3964 = vunpack.c.l.b16 %v3276
    %v3965 = vunpack.c.h.b16 %v3276
    %v3966 = vunpack.c.l.b16 %v3277
    %v3967 = vunpack.c.h.b16 %v3277
    %v3968 = vunpack.c.l.b16 %v3278
    %v3969 = vunpack.c.h.b16 %v3278
    %v3970 = vunpack.c.l.b16 %v3279
    %v3971 = vunpack.c.h.b16 %v3279
    %v3972 = vunpack.c.l.b16 %v3280
    %v3973 = vunpack.c.h.b16 %v3280
    %v3974 = vunpack.c.l.b16 %v3281
    %v3975 = vunpack.c.h.b16 %v3281
    %v3976 = vunpack.c.l.b16 %v3282
    %v3977 = vunpack.c.h.b16 %v3282
    %v3978 = vunpack.c.l.b16 %v3283
    %v3979 = vunpack.c.h.b16 %v3283
    %v3980 = vunpack.c.l.b16 %v3284
    %v3981 = vunpack.c.h.b16 %v3284
    %v3982 = vunpack.c.l.b16 %v3285
    %v3983 = vunpack.c.h.b16 %v3285
    %v3984 = vunpack.c.l.b16 %v3286
    %v3985 = vunpack.c.h.b16 %v3286
    %v3986 = vunpack.c.l.b16 %v3287
    %v3987 = vunpack.c.h.b16 %v3287
    %v3988 = vunpack.c.l.b16 %v3288
    %v3989 = vunpack.c.h.b16 %v3288
    %v3990 = vunpack.c.l.b16 %v3289
    %v3991 = vunpack.c.h.b16 %v3289
    %v3992 = vunpack.c.l.b16 %v3290
    %v3993 = vunpack.c.h.b16 %v3290
    %v3994 = vunpack.c.l.b16 %v3291
    %v3995 = vunpack.c.h.b16 %v3291
    %v3996 = vunpack.c.l.b16 %v3292
    %v3997 = vunpack.c.h.b16 %v3292
    %v3998 = vunpack.c.l.b16 %v3293
    %v3999 = vunpack.c.h.b16 %v3293
    %v4000 = vunpack.c.l.b16 %v3294
    %v4001 = vunpack.c.h.b16 %v3294
    %v4002 = vunpack.c.l.b16 %v3295
    %v4003 = vunpack.c.h.b16 %v3295
    %v4004 = vunpack.c.l.b16 %v3296
    %v4005 = vunpack.c.h.b16 %v3296
    %v4006 = vunpack.c.l.b16 %v3297
    %v4007 = vunpack.c.h.b16 %v3297
    %v4008 = vunpack.c.l.b16 %v3298
    %v4009 = vunpack.c.h.b16 %v3298
    %v4010 = vunpack.c.l.b16 %v3299
    %v4011 = vunpack.c.h.b16 %v3299
    %v4012 = vunpack.c.l.b16 %v3300
    %v4013 = vunpack.c.h.b16 %v3300
    %v4014 = vunpack.c.l.b16 %v3301
    %v4015 = vunpack.c.h.b16 %v3301
    %v4016 = vunpack.c.l.b16 %v3302
    %v4017 = vunpack.c.h.b16 %v3302
    %v4018 = vunpack.c.l.b16 %v3303
    %v4019 = vunpack.c.h.b16 %v3303
    %v4020 = vunpack.c.l.b16 %v3304
    %v4021 = vunpack.c.h.b16 %v3304
    %v4022 = vunpack.c.l.b16 %v3305
    %v4023 = vunpack.c.h.b16 %v3305
    %v4024 = vunpack.c.l.b16 %v3306
    %v4025 = vunpack.c.h.b16 %v3306
    %v4026 = vunpack.c.l.b16 %v3307
    %v4027 = vunpack.c.h.b16 %v3307
    %v4028 = vunpack.c.l.b16 %v3308
    %v4029 = vunpack.c.h.b16 %v3308
    %v4030 = vunpack.c.l.b16 %v3309
    %v4031 = vunpack.c.h.b16 %v3309
    %v4032 = vunpack.c.l.b16 %v3310
    %v4033 = vunpack.c.h.b16 %v3310
    %v4034 = vunpack.c.l.b16 %v3311
    %v4035 = vunpack.c.h.b16 %v3311
    %v4036 = vunpack.c.l.b16 %v3312
    %v4037 = vunpack.c.h.b16 %v3312
    %v4038 = vunpack.c.l.b16 %v3313
    %v4039 = vunpack.c.h.b16 %v3313
    %v4040 = vunpack.c.l.b16 %v3314
    %v4041 = vunpack.c.h.b16 %v3314
    %v4042 = vunpack.c.l.b16 %v3315
    %v4043 = vunpack.c.h.b16 %v3315
    %v4044 = vunpack.c.l.b16 %v3316
    %v4045 = vunpack.c.h.b16 %v3316
    %v4046 = vunpack.c.l.b16 %v3317
    %v4047 = vunpack.c.h.b16 %v3317
    %v4048 = vunpack.c.l.b16 %v3318
    %v4049 = vunpack.c.h.b16 %v3318
    %v4050 = vunpack.c.l.b16 %v3319
    %v4051 = vunpack.c.h.b16 %v3319
    %v4052 = vunpack.c.l.b16 %v3320
    %v4053 = vunpack.c.h.b16 %v3320
    %v4054 = vunpack.c.l.b16 %v3321
    %v4055 = vunpack.c.h.b16 %v3321
    %v4056 = vunpack.c.l.b16 %v3322
    %v4057 = vunpack.c.h.b16 %v3322
    %v4058 = vunpack.c.l.b16 %v3323
    %v4059 = vunpack.c.h.b16 %v3323
    %v4060 = vunpack.c.l.b16 %v3324
    %v4061 = vunpack.c.h.b16 %v3324
    %v4062 = vunpack.c.l.b16 %v3325
    %v4063 = vunpack.c.h.b16 %v3325
    %v4064 = vunpack.c.l.b16 %v3326
    %v4065 = vunpack.c.h.b16 %v3326
    %v4066 = vunpack.c.l.b16 %v3327
    %v4067 = vunpack.c.h.b16 %v3327
    %v4068 = vunpack.c.l.b16 %v3328
    %v4069 = vunpack.c.h.b16 %v3328
    %v4070 = vunpack.c.l.b16 %v3329
    %v4071 = vunpack.c.h.b16 %v3329
    %v4072 = vunpack.c.l.b16 %v3330
    %v4073 = vunpack.c.h.b16 %v3330
    %v4074 = vunpack.c.l.b16 %v3331
    %v4075 = vunpack.c.h.b16 %v3331
    %v4076 = vunpack.c.l.b16 %v3332
    %v4077 = vunpack.c.h.b16 %v3332
    %v4078 = vunpack.c.l.b16 %v3333
    %v4079 = vunpack.c.h.b16 %v3333
    %v4080 = vunpack.c.l.b16 %v3334
    %v4081 = vunpack.c.h.b16 %v3334
    %v4082 = vunpack.c.l.b16 %v3335
    %v4083 = vunpack.c.h.b16 %v3335
    %v4084 = vunpack.c.l.b16 %v3336
    %v4085 = vunpack.c.h.b16 %v3336
    %v4086 = vunpack.c.l.b16 %v3337
    %v4087 = vunpack.c.h.b16 %v3337
    %v4088 = vunpack.c.l.b16 %v3338
    %v4089 = vunpack.c.h.b16 %v3338
    %v4090 = vunpack.c.l.b16 %v3339
    %v4091 = vunpack.c.h.b16 %v3339
    %v4092 = vunpack.c.l.b16 %v3340
    %v4093 = vunpack.c.h.b16 %v3340
    %v4094 = vunpack.c.l.b16 %v3341
    %v4095 = vunpack.c.h.b16 %v3341
    %v4096 = vunpack.c.l.b16 %v3342
    %v4097 = vunpack.c.h.b16 %v3342
    %v4098 = vunpack.c.l.b16 %v3343
    %v4099 = vunpack.c.h.b16 %v3343
    %v4100 = vunpack.c.l.b16 %v3344
    %v4101 = vunpack.c.h.b16 %v3344
    %v4102 = vunpack.c.l.b16 %v3345
    %v4103 = vunpack.c.h.b16 %v3345
    %v4104 = vunpack.c.l.b16 %v3346
    %v4105 = vunpack.c.h.b16 %v3346
    %v4106 = vunpack.c.l.b16 %v3347
    %v4107 = vunpack.c.h.b16 %v3347
    %v4108 = vunpack.c.l.b16 %v3348
    %v4109 = vunpack.c.h.b16 %v3348
    %v4110 = vunpack.c.l.b16 %v3349
    %v4111 = vunpack.c.h.b16 %v3349
    %v4112 = vunpack.c.l.b16 %v3350
    %v4113 = vunpack.c.h.b16 %v3350
    %v4114 = vunpack.c.l.b16 %v3351
    %v4115 = vunpack.c.h.b16 %v3351
    %v4116 = vunpack.c.l.b16 %v3352
    %v4117 = vunpack.c.h.b16 %v3352
    %v4118 = vunpack.c.l.b16 %v3353
    %v4119 = vunpack.c.h.b16 %v3353
    %v4120 = vunpack.c.l.b16 %v3354
    %v4121 = vunpack.c.h.b16 %v3354
    %v4122 = vunpack.c.l.b16 %v3355
    %v4123 = vunpack.c.h.b16 %v3355
    %v4124 = vunpack.c.l.b16 %v3356
    %v4125 = vunpack.c.h.b16 %v3356
    %v4126 = vunpack.c.l.b16 %v3357
    %v4127 = vunpack.c.h.b16 %v3357
    %v4128 = vunpack.c.l.b16 %v3358
    %v4129 = vunpack.c.h.b16 %v3358
    %v4130 = vunpack.c.l.b16 %v3359
    %v4131 = vunpack.c.h.b16 %v3359
    %v4132 = vunpack.c.l.b16 %v3360
    %v4133 = vunpack.c.h.b16 %v3360
    %v4134 = vunpack.c.l.b16 %v3361
    %v4135 = vunpack.c.h.b16 %v3361
    %v4136 = vunpack.c.l.b16 %v3362
    %v4137 = vunpack.c.h.b16 %v3362
    %v4138 = vunpack.c.l.b16 %v3363
    %v4139 = vunpack.c.h.b16 %v3363
    %v4140 = vunpack.c.l.b16 %v3364
    %v4141 = vunpack.c.h.b16 %v3364
    %v4142 = vunpack.c.l.b16 %v3365
    %v4143 = vunpack.c.h.b16 %v3365
    %v4144 = vunpack.c.l.b16 %v3366
    %v4145 = vunpack.c.h.b16 %v3366
    %v4146 = vunpack.c.l.b16 %v3367
    %v4147 = vunpack.c.h.b16 %v3367
    %v4148 = vunpack.c.l.b16 %v3368
    %v4149 = vunpack.c.h.b16 %v3368
    %v4150 = vunpack.c.l.b16 %v3369
    %v4151 = vunpack.c.h.b16 %v3369
    %v4152 = vunpack.c.l.b16 %v3370
    %v4153 = vunpack.c.h.b16 %v3370
    %v4154 = vunpack.c.l.b16 %v3371
    %v4155 = vunpack.c.h.b16 %v3371
    %v4156 = vunpack.c.l.b16 %v3372
    %v4157 = vunpack.c.h.b16 %v3372
    %v4158 = vunpack.c.l.b16 %v3373
    %v4159 = vunpack.c.h.b16 %v3373
    %v4160 = vunpack.c.l.b16 %v3374
    %v4161 = vunpack.c.h.b16 %v3374
    %v4162 = vunpack.c.l.b16 %v3375
    %v4163 = vunpack.c.h.b16 %v3375
    %v4164 = vunpack.c.l.b16 %v3376
    %v4165 = vunpack.c.h.b16 %v3376
    %v4166 = vunpack.c.l.b16 %v3377
    %v4167 = vunpack.c.h.b16 %v3377
    %v4168 = vpack.c.b16 %v3660, %v3656
    %v4169 = vpack.c.b16 %v3661, %v3657
    %v4170 = vpack.c.b16 %v3662, %v3658
    %v4171 = vpack.c.b16 %v3663, %v3659
    %v4172 = vpack.c.b16 %v3668, %v3664
    %v4173 = vpack.c.b16 %v3669, %v3665
    %v4174 = vpack.c.b16 %v3670, %v3666
    %v4175 = vpack.c.b16 %v3671, %v3667
    %v4176 = vpack.c.b16 %v3676, %v3672
    %v4177 = vpack.c.b16 %v3677, %v3673
    %v4178 = vpack.c.b16 %v3678, %v3674
    %v4179 = vpack.c.b16 %v3679, %v3675
    %v4180 = vpack.c.b16 %v3684, %v3680
    %v4181 = vpack.c.b16 %v3685, %v3681
    %v4182 = vpack.c.b16 %v3686, %v3682
    %v4183 = vpack.c.b16 %v3687, %v3683
    %v4184 = vpack.c.b16 %v3692, %v3688
    %v4185 = vpack.c.b16 %v3693, %v3689
    %v4186 = vpack.c.b16 %v3694, %v3690
    %v4187 = vpack.c.b16 %v3695, %v3691
    %v4188 = vpack.c.b16 %v3700, %v3696
    %v4189 = vpack.c.b16 %v3701, %v3697
    %v4190 = vpack.c.b16 %v3702, %v3698
    %v4191 = vpack.c.b16 %v3703, %v3699
    %v4192 = vpack.c.b16 %v3708, %v3704
    %v4193 = vpack.c.b16 %v3709, %v3705
    %v4194 = vpack.c.b16 %v3710, %v3706
    %v4195 = vpack.c.b16 %v3711, %v3707
    %v4196 = vpack.c.b16 %v3716, %v3712
    %v4197 = vpack.c.b16 %v3717, %v3713
    %v4198 = vpack.c.b16 %v3718, %v3714
    %v4199 = vpack.c.b16 %v3719, %v3715
    %v4200 = vpack.c.b16 %v3724, %v3720
    %v4201 = vpack.c.b16 %v3725, %v3721
    %v4202 = vpack.c.b16 %v3726, %v3722
    %v4203 = vpack.c.b16 %v3727, %v3723
    %v4204 = vpack.c.b16 %v3732, %v3728
    %v4205 = vpack.c.b16 %v3733, %v3729
    %v4206 = vpack.c.b16 %v3734, %v3730
    %v4207 = vpack.c.b16 %v3735, %v3731
    %v4208 = vpack.c.b16 %v3740, %v3736
    %v4209 = vpack.c.b16 %v3741, %v3737
    %v4210 = vpack.c.b16 %v3742, %v3738
    %v4211 = vpack.c.b16 %v3743, %v3739
    %v4212 = vpack.c.b16 %v3748, %v3744
    %v4213 = vpack.c.b16 %v3749, %v3745
    %v4214 = vpack.c.b16 %v3750, %v3746
    %v4215 = vpack.c.b16 %v3751, %v3747
    %v4216 = vpack.c.b16 %v3756, %v3752
    %v4217 = vpack.c.b16 %v3757, %v3753
    %v4218 = vpack.c.b16 %v3758, %v3754
    %v4219 = vpack.c.b16 %v3759, %v3755
    %v4220 = vpack.c.b16 %v3764, %v3760
    %v4221 = vpack.c.b16 %v3765, %v3761
    %v4222 = vpack.c.b16 %v3766, %v3762
    %v4223 = vpack.c.b16 %v3767, %v3763
    %v4224 = vpack.c.b16 %v3772, %v3768
    %v4225 = vpack.c.b16 %v3773, %v3769
    %v4226 = vpack.c.b16 %v3774, %v3770
    %v4227 = vpack.c.b16 %v3775, %v3771
    %v4228 = vpack.c.b16 %v3780, %v3776
    %v4229 = vpack.c.b16 %v3781, %v3777
    %v4230 = vpack.c.b16 %v3782, %v3778
    %v4231 = vpack.c.b16 %v3783, %v3779
    %v4232 = vpack.c.b16 %v3788, %v3784
    %v4233 = vpack.c.b16 %v3789, %v3785
    %v4234 = vpack.c.b16 %v3790, %v3786
    %v4235 = vpack.c.b16 %v3791, %v3787
    %v4236 = vpack.c.b16 %v3796, %v3792
    %v4237 = vpack.c.b16 %v3797, %v3793
    %v4238 = vpack.c.b16 %v3798, %v3794
    %v4239 = vpack.c.b16 %v3799, %v3795
    %v4240 = vpack.c.b16 %v3804, %v3800
    %v4241 = vpack.c.b16 %v3805, %v3801
    %v4242 = vpack.c.b16 %v3806, %v3802
    %v4243 = vpack.c.b16 %v3807, %v3803
    %v4244 = vpack.c.b16 %v3812, %v3808
    %v4245 = vpack.c.b16 %v3813, %v3809
    %v4246 = vpack.c.b16 %v3814, %v3810
    %v4247 = vpack.c.b16 %v3815, %v3811
    %v4248 = vpack.c.b16 %v3820, %v3816
    %v4249 = vpack.c.b16 %v3821, %v3817
    %v4250 = vpack.c.b16 %v3822, %v3818
    %v4251 = vpack.c.b16 %v3823, %v3819
    %v4252 = vpack.c.b16 %v3828, %v3824
    %v4253 = vpack.c.b16 %v3829, %v3825
    %v4254 = vpack.c.b16 %v3830, %v3826
    %v4255 = vpack.c.b16 %v3831, %v3827
    %v4256 = vpack.c.b16 %v3836, %v3832
    %v4257 = vpack.c.b16 %v3837, %v3833
    %v4258 = vpack.c.b16 %v3838, %v3834
    %v4259 = vpack.c.b16 %v3839, %v3835
    %v4260 = vpack.c.b16 %v3844, %v3840
    %v4261 = vpack.c.b16 %v3845, %v3841
    %v4262 = vpack.c.b16 %v3846, %v3842
    %v4263 = vpack.c.b16 %v3847, %v3843
    %v4264 = vpack.c.b16 %v3852, %v3848
    %v4265 = vpack.c.b16 %v3853, %v3849
    %v4266 = vpack.c.b16 %v3854, %v3850
    %v4267 = vpack.c.b16 %v3855, %v3851
    %v4268 = vpack.c.b16 %v3860, %v3856
    %v4269 = vpack.c.b16 %v3861, %v3857
    %v4270 = vpack.c.b16 %v3862, %v3858
    %v4271 = vpack.c.b16 %v3863, %v3859
    %v4272 = vpack.c.b16 %v3868, %v3864
    %v4273 = vpack.c.b16 %v3869, %v3865
    %v4274 = vpack.c.b16 %v3870, %v3866
    %v4275 = vpack.c.b16 %v3871, %v3867
    %v4276 = vpack.c.b16 %v3876, %v3872
    %v4277 = vpack.c.b16 %v3877, %v3873
    %v4278 = vpack.c.b16 %v3878, %v3874
    %v4279 = vpack.c.b16 %v3879, %v3875
    %v4280 = vpack.c.b16 %v3884, %v3880
    %v4281 = vpack.c.b16 %v3885, %v3881
    %v4282 = vpack.c.b16 %v3886, %v3882
    %v4283 = vpack.c.b16 %v3887, %v3883
    %v4284 = vpack.c.b16 %v3892, %v3888
    %v4285 = vpack.c.b16 %v3893, %v3889
    %v4286 = vpack.c.b16 %v3894, %v3890
    %v4287 = vpack.c.b16 %v3895, %v3891
    %v4288 = vpack.c.b16 %v3900, %v3896
    %v4289 = vpack.c.b16 %v3901, %v3897
    %v4290 = vpack.c.b16 %v3902, %v3898
    %v4291 = vpack.c.b16 %v3903, %v3899
    %v4292 = vpack.c.b16 %v3908, %v3904
    %v4293 = vpack.c.b16 %v3909, %v3905
    %v4294 = vpack.c.b16 %v3910, %v3906
    %v4295 = vpack.c.b16 %v3911, %v3907
    %v4296 = vpack.c.b16 %v3916, %v3912
    %v4297 = vpack.c.b16 %v3917, %v3913
    %v4298 = vpack.c.b16 %v3918, %v3914
    %v4299 = vpack.c.b16 %v3919, %v3915
    %v4300 = vpack.c.b16 %v3924, %v3920
    %v4301 = vpack.c.b16 %v3925, %v3921
    %v4302 = vpack.c.b16 %v3926, %v3922
    %v4303 = vpack.c.b16 %v3927, %v3923
    %v4304 = vpack.c.b16 %v3932, %v3928
    %v4305 = vpack.c.b16 %v3933, %v3929
    %v4306 = vpack.c.b16 %v3934, %v3930
    %v4307 = vpack.c.b16 %v3935, %v3931
    %v4308 = vpack.c.b16 %v3940, %v3936
    %v4309 = vpack.c.b16 %v3941, %v3937
    %v4310 = vpack.c.b16 %v3942, %v3938
    %v4311 = vpack.c.b16 %v3943, %v3939
    %v4312 = vpack.c.b16 %v3948, %v3944
    %v4313 = vpack.c.b16 %v3949, %v3945
    %v4314 = vpack.c.b16 %v3950, %v3946
    %v4315 = vpack.c.b16 %v3951, %v3947
    %v4316 = vpack.c.b16 %v3956, %v3952
    %v4317 = vpack.c.b16 %v3957, %v3953
    %v4318 = vpack.c.b16 %v3958, %v3954
    %v4319 = vpack.c.b16 %v3959, %v3955
    %v4320 = vpack.c.b16 %v3964, %v3960
    %v4321 = vpack.c.b16 %v3965, %v3961
    %v4322 = vpack.c.b16 %v3966, %v3962
    %v4323 = vpack.c.b16 %v3967, %v3963
    %v4324 = vpack.c.b16 %v3972, %v3968
    %v4325 = vpack.c.b16 %v3973, %v3969
    %v4326 = vpack.c.b16 %v3974, %v3970
    %v4327 = vpack.c.b16 %v3975, %v3971
    %v4328 = vpack.c.b16 %v3980, %v3976
    %v4329 = vpack.c.b16 %v3981, %v3977
    %v4330 = vpack.c.b16 %v3982, %v3978
    %v4331 = vpack.c.b16 %v3983, %v3979
    %v4332 = vpack.c.b16 %v3988, %v3984
    %v4333 = vpack.c.b16 %v3989, %v3985
    %v4334 = vpack.c.b16 %v3990, %v3986
    %v4335 = vpack.c.b16 %v3991, %v3987
    %v4336 = vpack.c.b16 %v3996, %v3992
    %v4337 = vpack.c.b16 %v3997, %v3993
    %v4338 = vpack.c.b16 %v3998, %v3994
    %v4339 = vpack.c.b16 %v3999, %v3995
    %v4340 = vpack.c.b16 %v4004, %v4000
    %v4341 = vpack.c.b16 %v4005, %v4001
    %v4342 = vpack.c.b16 %v4006, %v4002
    %v4343 = vpack.c.b16 %v4007, %v4003
    %v4344 = vpack.c.b16 %v4012, %v4008
    %v4345 = vpack.c.b16 %v4013, %v4009
    %v4346 = vpack.c.b16 %v4014, %v4010
    %v4347 = vpack.c.b16 %v4015, %v4011
    %v4348 = vpack.c.b16 %v4020, %v4016
    %v4349 = vpack.c.b16 %v4021, %v4017
    %v4350 = vpack.c.b16 %v4022, %v4018
    %v4351 = vpack.c.b16 %v4023, %v4019
    %v4352 = vpack.c.b16 %v4028, %v4024
    %v4353 = vpack.c.b16 %v4029, %v4025
    %v4354 = vpack.c.b16 %v4030, %v4026
    %v4355 = vpack.c.b16 %v4031, %v4027
    %v4356 = vpack.c.b16 %v4036, %v4032
    %v4357 = vpack.c.b16 %v4037, %v4033
    %v4358 = vpack.c.b16 %v4038, %v4034
    %v4359 = vpack.c.b16 %v4039, %v4035
    %v4360 = vpack.c.b16 %v4044, %v4040
    %v4361 = vpack.c.b16 %v4045, %v4041
    %v4362 = vpack.c.b16 %v4046, %v4042
    %v4363 = vpack.c.b16 %v4047, %v4043
    %v4364 = vpack.c.b16 %v4052, %v4048
    %v4365 = vpack.c.b16 %v4053, %v4049
    %v4366 = vpack.c.b16 %v4054, %v4050
    %v4367 = vpack.c.b16 %v4055, %v4051
    %v4368 = vpack.c.b16 %v4060, %v4056
    %v4369 = vpack.c.b16 %v4061, %v4057
    %v4370 = vpack.c.b16 %v4062, %v4058
    %v4371 = vpack.c.b16 %v4063, %v4059
    %v4372 = vpack.c.b16 %v4068, %v4064
    %v4373 = vpack.c.b16 %v4069, %v4065
    %v4374 = vpack.c.b16 %v4070, %v4066
    %v4375 = vpack.c.b16 %v4071, %v4067
    %v4376 = vpack.c.b16 %v4076, %v4072
    %v4377 = vpack.c.b16 %v4077, %v4073
    %v4378 = vpack.c.b16 %v4078, %v4074
    %v4379 = vpack.c.b16 %v4079, %v4075
    %v4380 = vpack.c.b16 %v4084, %v4080
    %v4381 = vpack.c.b16 %v4085, %v4081
    %v4382 = vpack.c.b16 %v4086, %v4082
    %v4383 = vpack.c.b16 %v4087, %v4083
    %v4384 = vpack.c.b16 %v4092, %v4088
    %v4385 = vpack.c.b16 %v4093, %v4089
    %v4386 = vpack.c.b16 %v4094, %v4090
    %v4387 = vpack.c.b16 %v4095, %v4091
    %v4388 = vpack.c.b16 %v4100, %v4096
    %v4389 = vpack.c.b16 %v4101, %v4097
    %v4390 = vpack.c.b16 %v4102, %v4098
    %v4391 = vpack.c.b16 %v4103, %v4099
    %v4392 = vpack.c.b16 %v4108, %v4104
    %v4393 = vpack.c.b16 %v4109, %v4105
    %v4394 = vpack.c.b16 %v4110, %v4106
    %v4395 = vpack.c.b16 %v4111, %v4107
    %v4396 = vpack.c.b16 %v4116, %v4112
    %v4397 = vpack.c.b16 %v4117, %v4113
    %v4398 = vpack.c.b16 %v4118, %v4114
    %v4399 = vpack.c.b16 %v4119, %v4115
    %v4400 = vpack.c.b16 %v4124, %v4120
    %v4401 = vpack.c.b16 %v4125, %v4121
    %v4402 = vpack.c.b16 %v4126, %v4122
    %v4403 = vpack.c.b16 %v4127, %v4123
    %v4404 = vpack.c.b16 %v4132, %v4128
    %v4405 = vpack.c.b16 %v4133, %v4129
    %v4406 = vpack.c.b16 %v4134, %v4130
    %v4407 = vpack.c.b16 %v4135, %v4131
    %v4408 = vpack.c.b16 %v4140, %v4136
    %v4409 = vpack.c.b16 %v4141, %v4137
    %v4410 = vpack.c.b16 %v4142, %v4138
    %v4411 = vpack.c.b16 %v4143, %v4139
    %v4412 = vpack.c.b16 %v4148, %v4144
    %v4413 = vpack.c.b16 %v4149, %v4145
    %v4414 = vpack.c.b16 %v4150, %v4146
    %v4415 = vpack.c.b16 %v4151, %v4147
    %v4416 = vpack.c.b16 %v4156, %v4152
    %v4417 = vpack.c.b16 %v4157, %v4153
    %v4418 = vpack.c.b16 %v4158, %v4154
    %v4419 = vpack.c.b16 %v4159, %v4155
    %v4420 = vpack.c.b16 %v4164, %v4160
    %v4421 = vpack.c.b16 %v4165, %v4161
    %v4422 = vpack.c.b16 %v4166, %v4162
    %v4423 = vpack.c.b16 %v4167, %v4163
    %4680 = vmatprep.subr.bf16.mxu0 %v4169
    %4681 = vmatpush1.bf16.msra.mxu0 %v4168
    %4682 = vmatprep.subr.bf16.mxu0 %v4173
    %4683 = vmatpush1.bf16.msra.mxu0 %v4172
    %4684 = vmatprep.subr.bf16.mxu0 %v4177
    %4685 = vmatpush1.bf16.msra.mxu0 %v4176
    %4686 = vmatprep.subr.bf16.mxu0 %v4181
    %4687 = vmatpush1.bf16.msra.mxu0 %v4180
    %4688 = vmatprep.subr.bf16.mxu0 %v4185
    %4689 = vmatpush1.bf16.msra.mxu0 %v4184
    %4690 = vmatprep.subr.bf16.mxu0 %v4189
    %4691 = vmatpush1.bf16.msra.mxu0 %v4188
    %4692 = vmatprep.subr.bf16.mxu0 %v4193
    %4693 = vmatpush1.bf16.msra.mxu0 %v4192
    %4694 = vmatprep.subr.bf16.mxu0 %v4197
    %4695 = vmatpush1.bf16.msra.mxu0 %v4196
    %4696 = vmatprep.subr.bf16.mxu0 %v4201
    %4697 = vmatpush1.bf16.msra.mxu0 %v4200
    %4698 = vmatprep.subr.bf16.mxu0 %v4205
    %4699 = vmatpush1.bf16.msra.mxu0 %v4204
    %4700 = vmatprep.subr.bf16.mxu0 %v4209
    %4701 = vmatpush1.bf16.msra.mxu0 %v4208
    %4702 = vmatprep.subr.bf16.mxu0 %v4213
    %4703 = vmatpush1.bf16.msra.mxu0 %v4212
    %4704 = vmatprep.subr.bf16.mxu0 %v4217
    %4705 = vmatpush1.bf16.msra.mxu0 %v4216
    %4706 = vmatprep.subr.bf16.mxu0 %v4221
    %4707 = vmatpush1.bf16.msra.mxu0 %v4220
    %4708 = vmatprep.subr.bf16.mxu0 %v4225
    %4709 = vmatpush1.bf16.msra.mxu0 %v4224
    %4710 = vmatprep.subr.bf16.mxu0 %v4229
    %4711 = vmatpush1.bf16.msra.mxu0 %v4228
    %4712 = vmatprep.mubr.bf16.mxu0 %v3107
    %4713 = vmatmul.mubr.bf16.gmra.mrb[0].mxu0 %v3106
    %v4714 = vpop.f32.mrb[0].mxu0
    %v4715 = vadd.f32 %v3383, %v4714
    %v4716 = vpop.f32.mrb[0].mxu0
    %v4717 = vadd.f32 %v3387, %v4716
    %v4718 = vpop.f32.mrb[0].mxu0
    %v4719 = vadd.f32 %v3383, %v4718
    %v4720 = vpop.f32.mrb[0].mxu0
    %v4721 = vadd.f32 %v3387, %v4720
    %4722 = vmatprep.mubr.bf16.mxu0 %v3115
    %4723 = vmatmul.mubr.bf16.gmra.mrb[0].mxu0 %v3114
    %v4724 = vpop.f32.mrb[0].mxu0
    %v4725 = vadd.f32 %v3383, %v4724
    %v4726 = vpop.f32.mrb[0].mxu0
    %v4727 = vadd.f32 %v3387, %v4726
    %v4728 = vpop.f32.mrb[0].mxu0
    %v4729 = vadd.f32 %v3383, %v4728
    %v4730 = vpop.f32.mrb[0].mxu0
    %v4731 = vadd.f32 %v3387, %v4730
    %4732 = vdwg.mxu0
    %4733 = vmatprep.subr.bf16.mxu0 %v4233
    %4734 = vmatpush1.bf16.msra.mxu0 %v4232
    %4735 = vmatprep.subr.bf16.mxu0 %v4237
    %4736 = vmatpush1.bf16.msra.mxu0 %v4236
    %4737 = vmatprep.subr.bf16.mxu0 %v4241
    %4738 = vmatpush1.bf16.msra.mxu0 %v4240
    %4739 = vmatprep.subr.bf16.mxu0 %v4245
    %4740 = vmatpush1.bf16.msra.mxu0 %v4244
    %4741 = vmatprep.subr.bf16.mxu0 %v4249
    %4742 = vmatpush1.bf16.msra.mxu0 %v4248
    %4743 = vmatprep.subr.bf16.mxu0 %v4253
    %4744 = vmatpush1.bf16.msra.mxu0 %v4252
    %4745 = vmatprep.subr.bf16.mxu0 %v4257
    %4746 = vmatpush1.bf16.msra.mxu0 %v4256
    %4747 = vmatprep.subr.bf16.mxu0 %v4261
    %4748 = vmatpush1.bf16.msra.mxu0 %v4260
    %4749 = vmatprep.subr.bf16.mxu0 %v4265
    %4750 = vmatpush1.bf16.msra.mxu0 %v4264
    %4751 = vmatprep.subr.bf16.mxu0 %v4269
    %4752 = vmatpush1.bf16.msra.mxu0 %v4268
    %4753 = vmatprep.subr.bf16.mxu0 %v4273
    %4754 = vmatpush1.bf16.msra.mxu0 %v4272
    %4755 = vmatprep.subr.bf16.mxu0 %v4277
    %4756 = vmatpush1.bf16.msra.mxu0 %v4276
    %4757 = vmatprep.subr.bf16.mxu0 %v4281
    %4758 = vmatpush1.bf16.msra.mxu0 %v4280
    %4759 = vmatprep.subr.bf16.mxu0 %v4285
    %4760 = vmatpush1.bf16.msra.mxu0 %v4284
    %4761 = vmatprep.subr.bf16.mxu0 %v4289
    %4762 = vmatpush1.bf16.msra.mxu0 %v4288
    %4763 = vmatprep.subr.bf16.mxu0 %v4293
    %4764 = vmatpush1.bf16.msra.mxu0 %v4292
    %4765 = vmatprep.mubr.bf16.mxu0 %v3109
    %4766 = vmatmul.mubr.bf16.gmra.mrb[0].mxu0 %v3108
    %v4767 = vpop.f32.mrb[0].mxu0
    %v4768 = vadd.f32 %v4715, %v4767
    %v4769 = vpop.f32.mrb[0].mxu0
    %v4770 = vadd.f32 %v4717, %v4769
    %v4771 = vpop.f32.mrb[0].mxu0
    %v4772 = vadd.f32 %v4719, %v4771
    %v4773 = vpop.f32.mrb[0].mxu0
    %v4774 = vadd.f32 %v4721, %v4773
    %4775 = vmatprep.mubr.bf16.mxu0 %v3117
    %4776 = vmatmul.mubr.bf16.gmra.mrb[0].mxu0 %v3116
    %v4777 = vpop.f32.mrb[0].mxu0
    %v4778 = vadd.f32 %v4725, %v4777
    %v4779 = vpop.f32.mrb[0].mxu0
    %v4780 = vadd.f32 %v4727, %v4779
    %v4781 = vpop.f32.mrb[0].mxu0
    %v4782 = vadd.f32 %v4729, %v4781
    %v4783 = vpop.f32.mrb[0].mxu0
    %v4784 = vadd.f32 %v4731, %v4783
    %4785 = vdwg.mxu0
    %4786 = vmatprep.subr.bf16.mxu0 %v4297
    %4787 = vmatpush1.bf16.msra.mxu0 %v4296
    %4788 = vmatprep.subr.bf16.mxu0 %v4301
    %4789 = vmatpush1.bf16.msra.mxu0 %v4300
    %4790 = vmatprep.subr.bf16.mxu0 %v4305
    %4791 = vmatpush1.bf16.msra.mxu0 %v4304
    %4792 = vmatprep.subr.bf16.mxu0 %v4309
    %4793 = vmatpush1.bf16.msra.mxu0 %v4308
    %4794 = vmatprep.subr.bf16.mxu0 %v4313
    %4795 = vmatpush1.bf16.msra.mxu0 %v4312
    %4796 = vmatprep.subr.bf16.mxu0 %v4317
    %4797 = vmatpush1.bf16.msra.mxu0 %v4316
    %4798 = vmatprep.subr.bf16.mxu0 %v4321
    %4799 = vmatpush1.bf16.msra.mxu0 %v4320
    %4800 = vmatprep.subr.bf16.mxu0 %v4325
    %4801 = vmatpush1.bf16.msra.mxu0 %v4324
    %4802 = vmatprep.subr.bf16.mxu0 %v4329
    %4803 = vmatpush1.bf16.msra.mxu0 %v4328
    %4804 = vmatprep.subr.bf16.mxu0 %v4333
    %4805 = vmatpush1.bf16.msra.mxu0 %v4332
    %4806 = vmatprep.subr.bf16.mxu0 %v4337
    %4807 = vmatpush1.bf16.msra.mxu0 %v4336
    %4808 = vmatprep.subr.bf16.mxu0 %v4341
    %4809 = vmatpush1.bf16.msra.mxu0 %v4340
    %4810 = vmatprep.subr.bf16.mxu0 %v4345
    %4811 = vmatpush1.bf16.msra.mxu0 %v4344
    %4812 = vmatprep.subr.bf16.mxu0 %v4349
    %4813 = vmatpush1.bf16.msra.mxu0 %v4348
    %4814 = vmatprep.subr.bf16.mxu0 %v4353
    %4815 = vmatpush1.bf16.msra.mxu0 %v4352
    %4816 = vmatprep.subr.bf16.mxu0 %v4357
    %4817 = vmatpush1.bf16.msra.mxu0 %v4356
    %4818 = vmatprep.mubr.bf16.mxu0 %v3111
    %4819 = vmatmul.mubr.bf16.gmra.mrb[0].mxu0 %v3110
    %v4820 = vpop.f32.mrb[0].mxu0
    %v4821 = vadd.f32 %v4768, %v4820
    %v4822 = vpop.f32.mrb[0].mxu0
    %v4823 = vadd.f32 %v4770, %v4822
    %v4824 = vpop.f32.mrb[0].mxu0
    %v4825 = vadd.f32 %v4772, %v4824
    %v4826 = vpop.f32.mrb[0].mxu0
    %v4827 = vadd.f32 %v4774, %v4826
    %4828 = vmatprep.mubr.bf16.mxu0 %v3119
    %4829 = vmatmul.mubr.bf16.gmra.mrb[0].mxu0 %v3118
    %v4830 = vpop.f32.mrb[0].mxu0
    %v4831 = vadd.f32 %v4778, %v4830
    %v4832 = vpop.f32.mrb[0].mxu0
    %v4833 = vadd.f32 %v4780, %v4832
    %v4834 = vpop.f32.mrb[0].mxu0
    %v4835 = vadd.f32 %v4782, %v4834
    %v4836 = vpop.f32.mrb[0].mxu0
    %v4837 = vadd.f32 %v4784, %v4836
    %4838 = vdwg.mxu0
    %4839 = vmatprep.subr.bf16.mxu0 %v4361
    %4840 = vmatpush1.bf16.msra.mxu0 %v4360
    %4841 = vmatprep.subr.bf16.mxu0 %v4365
    %4842 = vmatpush1.bf16.msra.mxu0 %v4364
    %4843 = vmatprep.subr.bf16.mxu0 %v4369
    %4844 = vmatpush1.bf16.msra.mxu0 %v4368
    %4845 = vmatprep.subr.bf16.mxu0 %v4373
    %4846 = vmatpush1.bf16.msra.mxu0 %v4372
    %4847 = vmatprep.subr.bf16.mxu0 %v4377
    %4848 = vmatpush1.bf16.msra.mxu0 %v4376
    %4849 = vmatprep.subr.bf16.mxu0 %v4381
    %4850 = vmatpush1.bf16.msra.mxu0 %v4380
    %4851 = vmatprep.subr.bf16.mxu0 %v4385
    %4852 = vmatpush1.bf16.msra.mxu0 %v4384
    %4853 = vmatprep.subr.bf16.mxu0 %v4389
    %4854 = vmatpush1.bf16.msra.mxu0 %v4388
    %4855 = vmatprep.subr.bf16.mxu0 %v4393
    %4856 = vmatpush1.bf16.msra.mxu0 %v4392
    %4857 = vmatprep.subr.bf16.mxu0 %v4397
    %4858 = vmatpush1.bf16.msra.mxu0 %v4396
    %4859 = vmatprep.subr.bf16.mxu0 %v4401
    %4860 = vmatpush1.bf16.msra.mxu0 %v4400
    %4861 = vmatprep.subr.bf16.mxu0 %v4405
    %4862 = vmatpush1.bf16.msra.mxu0 %v4404
    %4863 = vmatprep.subr.bf16.mxu0 %v4409
    %4864 = vmatpush1.bf16.msra.mxu0 %v4408
    %4865 = vmatprep.subr.bf16.mxu0 %v4413
    %4866 = vmatpush1.bf16.msra.mxu0 %v4412
    %4867 = vmatprep.subr.bf16.mxu0 %v4417
    %4868 = vmatpush1.bf16.msra.mxu0 %v4416
    %4869 = vmatprep.subr.bf16.mxu0 %v4421
    %4870 = vmatpush1.bf16.msra.mxu0 %v4420
    %4871 = vmatprep.mubr.bf16.mxu0 %v3113
    %4872 = vmatmul.mubr.bf16.gmra.mrb[0].mxu0 %v3112
    %v4873 = vpop.f32.mrb[0].mxu0
    %v4874 = vadd.f32 %v4821, %v4873
    %v4875 = vpop.f32.mrb[0].mxu0
    %v4876 = vadd.f32 %v4823, %v4875
    %v4877 = vpop.f32.mrb[0].mxu0
    %v4878 = vadd.f32 %v4825, %v4877
    %v4879 = vpop.f32.mrb[0].mxu0
    %v4880 = vadd.f32 %v4827, %v4879
    %4881 = vmatprep.mubr.bf16.mxu0 %v3121
    %4882 = vmatmul.mubr.bf16.gmra.mrb[0].mxu0 %v3120
    %v4883 = vpop.f32.mrb[0].mxu0
    %v4884 = vadd.f32 %v4831, %v4883
    %v4885 = vpop.f32.mrb[0].mxu0
    %v4886 = vadd.f32 %v4833, %v4885
    %v4887 = vpop.f32.mrb[0].mxu0
    %v4888 = vadd.f32 %v4835, %v4887
    %v4889 = vpop.f32.mrb[0].mxu0
    %v4890 = vadd.f32 %v4837, %v4889
    %4891 = vdwg.mxu0
    %4892 = vmatprep.subr.bf16.mxu0 %v4171
    %4893 = vmatpush1.bf16.msra.mxu0 %v4170
    %4894 = vmatprep.subr.bf16.mxu0 %v4175
    %4895 = vmatpush1.bf16.msra.mxu0 %v4174
    %4896 = vmatprep.subr.bf16.mxu0 %v4179
    %4897 = vmatpush1.bf16.msra.mxu0 %v4178
    %4898 = vmatprep.subr.bf16.mxu0 %v4183
    %4899 = vmatpush1.bf16.msra.mxu0 %v4182
    %4900 = vmatprep.subr.bf16.mxu0 %v4187
    %4901 = vmatpush1.bf16.msra.mxu0 %v4186
    %4902 = vmatprep.subr.bf16.mxu0 %v4191
    %4903 = vmatpush1.bf16.msra.mxu0 %v4190
    %4904 = vmatprep.subr.bf16.mxu0 %v4195
    %4905 = vmatpush1.bf16.msra.mxu0 %v4194
    %4906 = vmatprep.subr.bf16.mxu0 %v4199
    %4907 = vmatpush1.bf16.msra.mxu0 %v4198
    %4908 = vmatprep.subr.bf16.mxu0 %v4203
    %4909 = vmatpush1.bf16.msra.mxu0 %v4202
    %4910 = vmatprep.subr.bf16.mxu0 %v4207
    %4911 = vmatpush1.bf16.msra.mxu0 %v4206
    %4912 = vmatprep.subr.bf16.mxu0 %v4211
    %4913 = vmatpush1.bf16.msra.mxu0 %v4210
    %4914 = vmatprep.subr.bf16.mxu0 %v4215
    %4915 = vmatpush1.bf16.msra.mxu0 %v4214
    %4916 = vmatprep.subr.bf16.mxu0 %v4219
    %4917 = vmatpush1.bf16.msra.mxu0 %v4218
    %4918 = vmatprep.subr.bf16.mxu0 %v4223
    %4919 = vmatpush1.bf16.msra.mxu0 %v4222
    %4920 = vmatprep.subr.bf16.mxu0 %v4227
    %4921 = vmatpush1.bf16.msra.mxu0 %v4226
    %4922 = vmatprep.subr.bf16.mxu0 %v4231
    %4923 = vmatpush1.bf16.msra.mxu0 %v4230
    %4924 = vmatprep.mubr.bf16.mxu0 %v3107
    %4925 = vmatmul.mubr.bf16.gmra.mrb[0].mxu0 %v3106
    %v4926 = vpop.f32.mrb[0].mxu0
    %v4927 = vadd.f32 %v3391, %v4926
    %v4928 = vpop.f32.mrb[0].mxu0
    %v4929 = vadd.f32 %v3395, %v4928
    %v4930 = vpop.f32.mrb[0].mxu0
    %v4931 = vadd.f32 %v3391, %v4930
    %v4932 = vpop.f32.mrb[0].mxu0
    %v4933 = vadd.f32 %v3395, %v4932
    %4934 = vmatprep.mubr.bf16.mxu0 %v3115
    %4935 = vmatmul.mubr.bf16.gmra.mrb[0].mxu0 %v3114
    %v4936 = vpop.f32.mrb[0].mxu0
    %v4937 = vadd.f32 %v3391, %v4936
    %v4938 = vpop.f32.mrb[0].mxu0
    %v4939 = vadd.f32 %v3395, %v4938
    %v4940 = vpop.f32.mrb[0].mxu0
    %v4941 = vadd.f32 %v3391, %v4940
    %v4942 = vpop.f32.mrb[0].mxu0
    %v4943 = vadd.f32 %v3395, %v4942
    %4944 = vdwg.mxu0
    %4945 = vmatprep.subr.bf16.mxu0 %v4235
    %4946 = vmatpush1.bf16.msra.mxu0 %v4234
    %4947 = vmatprep.subr.bf16.mxu0 %v4239
    %4948 = vmatpush1.bf16.msra.mxu0 %v4238
    %4949 = vmatprep.subr.bf16.mxu0 %v4243
    %4950 = vmatpush1.bf16.msra.mxu0 %v4242
    %4951 = vmatprep.subr.bf16.mxu0 %v4247
    %4952 = vmatpush1.bf16.msra.mxu0 %v4246
    %4953 = vmatprep.subr.bf16.mxu0 %v4251
    %4954 = vmatpush1.bf16.msra.mxu0 %v4250
    %4955 = vmatprep.subr.bf16.mxu0 %v4255
    %4956 = vmatpush1.bf16.msra.mxu0 %v4254
    %4957 = vmatprep.subr.bf16.mxu0 %v4259
    %4958 = vmatpush1.bf16.msra.mxu0 %v4258
    %4959 = vmatprep.subr.bf16.mxu0 %v4263
    %4960 = vmatpush1.bf16.msra.mxu0 %v4262
    %4961 = vmatprep.subr.bf16.mxu0 %v4267
    %4962 = vmatpush1.bf16.msra.mxu0 %v4266
    %4963 = vmatprep.subr.bf16.mxu0 %v4271
    %4964 = vmatpush1.bf16.msra.mxu0 %v4270
    %4965 = vmatprep.subr.bf16.mxu0 %v4275
    %4966 = vmatpush1.bf16.msra.mxu0 %v4274
    %4967 = vmatprep.subr.bf16.mxu0 %v4279
    %4968 = vmatpush1.bf16.msra.mxu0 %v4278
    %4969 = vmatprep.subr.bf16.mxu0 %v4283
    %4970 = vmatpush1.bf16.msra.mxu0 %v4282
    %4971 = vmatprep.subr.bf16.mxu0 %v4287
    %4972 = vmatpush1.bf16.msra.mxu0 %v4286
    %4973 = vmatprep.subr.bf16.mxu0 %v4291
    %4974 = vmatpush1.bf16.msra.mxu0 %v4290
    %4975 = vmatprep.subr.bf16.mxu0 %v4295
    %4976 = vmatpush1.bf16.msra.mxu0 %v4294
    %4977 = vmatprep.mubr.bf16.mxu0 %v3109
    %4978 = vmatmul.mubr.bf16.gmra.mrb[0].mxu0 %v3108
    %v4979 = vpop.f32.mrb[0].mxu0
    %v4980 = vadd.f32 %v4927, %v4979
    %v4981 = vpop.f32.mrb[0].mxu0
    %v4982 = vadd.f32 %v4929, %v4981
    %v4983 = vpop.f32.mrb[0].mxu0
    %v4984 = vadd.f32 %v4931, %v4983
    %v4985 = vpop.f32.mrb[0].mxu0
    %v4986 = vadd.f32 %v4933, %v4985
    %4987 = vmatprep.mubr.bf16.mxu0 %v3117
    %4988 = vmatmul.mubr.bf16.gmra.mrb[0].mxu0 %v3116
    %v4989 = vpop.f32.mrb[0].mxu0
    %v4990 = vadd.f32 %v4937, %v4989
    %v4991 = vpop.f32.mrb[0].mxu0
    %v4992 = vadd.f32 %v4939, %v4991
    %v4993 = vpop.f32.mrb[0].mxu0
    %v4994 = vadd.f32 %v4941, %v4993
    %v4995 = vpop.f32.mrb[0].mxu0
    %v4996 = vadd.f32 %v4943, %v4995
    %4997 = vdwg.mxu0
    %4998 = vmatprep.subr.bf16.mxu0 %v4299
    %4999 = vmatpush1.bf16.msra.mxu0 %v4298
    %5000 = vmatprep.subr.bf16.mxu0 %v4303
    %5001 = vmatpush1.bf16.msra.mxu0 %v4302
    %5002 = vmatprep.subr.bf16.mxu0 %v4307
    %5003 = vmatpush1.bf16.msra.mxu0 %v4306
    %5004 = vmatprep.subr.bf16.mxu0 %v4311
    %5005 = vmatpush1.bf16.msra.mxu0 %v4310
    %5006 = vmatprep.subr.bf16.mxu0 %v4315
    %5007 = vmatpush1.bf16.msra.mxu0 %v4314
    %5008 = vmatprep.subr.bf16.mxu0 %v4319
    %5009 = vmatpush1.bf16.msra.mxu0 %v4318
    %5010 = vmatprep.subr.bf16.mxu0 %v4323
    %5011 = vmatpush1.bf16.msra.mxu0 %v4322
    %5012 = vmatprep.subr.bf16.mxu0 %v4327
    %5013 = vmatpush1.bf16.msra.mxu0 %v4326
    %5014 = vmatprep.subr.bf16.mxu0 %v4331
    %5015 = vmatpush1.bf16.msra.mxu0 %v4330
    %5016 = vmatprep.subr.bf16.mxu0 %v4335
    %5017 = vmatpush1.bf16.msra.mxu0 %v4334
    %5018 = vmatprep.subr.bf16.mxu0 %v4339
    %5019 = vmatpush1.bf16.msra.mxu0 %v4338
    %5020 = vmatprep.subr.bf16.mxu0 %v4343
    %5021 = vmatpush1.bf16.msra.mxu0 %v4342
    %5022 = vmatprep.subr.bf16.mxu0 %v4347
    %5023 = vmatpush1.bf16.msra.mxu0 %v4346
    %5024 = vmatprep.subr.bf16.mxu0 %v4351
    %5025 = vmatpush1.bf16.msra.mxu0 %v4350
    %5026 = vmatprep.subr.bf16.mxu0 %v4355
    %5027 = vmatpush1.bf16.msra.mxu0 %v4354
    %5028 = vmatprep.subr.bf16.mxu0 %v4359
    %5029 = vmatpush1.bf16.msra.mxu0 %v4358
    %5030 = vmatprep.mubr.bf16.mxu0 %v3111
    %5031 = vmatmul.mubr.bf16.gmra.mrb[0].mxu0 %v3110
    %v5032 = vpop.f32.mrb[0].mxu0
    %v5033 = vadd.f32 %v4980, %v5032
    %v5034 = vpop.f32.mrb[0].mxu0
    %v5035 = vadd.f32 %v4982, %v5034
    %v5036 = vpop.f32.mrb[0].mxu0
    %v5037 = vadd.f32 %v4984, %v5036
    %v5038 = vpop.f32.mrb[0].mxu0
    %v5039 = vadd.f32 %v4986, %v5038
    %5040 = vmatprep.mubr.bf16.mxu0 %v3119
    %5041 = vmatmul.mubr.bf16.gmra.mrb[0].mxu0 %v3118
    %v5042 = vpop.f32.mrb[0].mxu0
    %v5043 = vadd.f32 %v4990, %v5042
    %v5044 = vpop.f32.mrb[0].mxu0
    %v5045 = vadd.f32 %v4992, %v5044
    %v5046 = vpop.f32.mrb[0].mxu0
    %v5047 = vadd.f32 %v4994, %v5046
    %v5048 = vpop.f32.mrb[0].mxu0
    %v5049 = vadd.f32 %v4996, %v5048
    %5050 = vdwg.mxu0
    %5051 = vmatprep.subr.bf16.mxu0 %v4363
    %5052 = vmatpush1.bf16.msra.mxu0 %v4362
    %5053 = vmatprep.subr.bf16.mxu0 %v4367
    %5054 = vmatpush1.bf16.msra.mxu0 %v4366
    %5055 = vmatprep.subr.bf16.mxu0 %v4371
    %5056 = vmatpush1.bf16.msra.mxu0 %v4370
    %5057 = vmatprep.subr.bf16.mxu0 %v4375
    %5058 = vmatpush1.bf16.msra.mxu0 %v4374
    %5059 = vmatprep.subr.bf16.mxu0 %v4379
    %5060 = vmatpush1.bf16.msra.mxu0 %v4378
    %5061 = vmatprep.subr.bf16.mxu0 %v4383
    %5062 = vmatpush1.bf16.msra.mxu0 %v4382
    %5063 = vmatprep.subr.bf16.mxu0 %v4387
    %5064 = vmatpush1.bf16.msra.mxu0 %v4386
    %5065 = vmatprep.subr.bf16.mxu0 %v4391
    %5066 = vmatpush1.bf16.msra.mxu0 %v4390
    %5067 = vmatprep.subr.bf16.mxu0 %v4395
    %5068 = vmatpush1.bf16.msra.mxu0 %v4394
    %5069 = vmatprep.subr.bf16.mxu0 %v4399
    %5070 = vmatpush1.bf16.msra.mxu0 %v4398
    %5071 = vmatprep.subr.bf16.mxu0 %v4403
    %5072 = vmatpush1.bf16.msra.mxu0 %v4402
    %5073 = vmatprep.subr.bf16.mxu0 %v4407
    %5074 = vmatpush1.bf16.msra.mxu0 %v4406
    %5075 = vmatprep.subr.bf16.mxu0 %v4411
    %5076 = vmatpush1.bf16.msra.mxu0 %v4410
    %5077 = vmatprep.subr.bf16.mxu0 %v4415
    %5078 = vmatpush1.bf16.msra.mxu0 %v4414
    %5079 = vmatprep.subr.bf16.mxu0 %v4419
    %5080 = vmatpush1.bf16.msra.mxu0 %v4418
    %5081 = vmatprep.subr.bf16.mxu0 %v4423
    %5082 = vmatpush1.bf16.msra.mxu0 %v4422
    %5083 = vmatprep.mubr.bf16.mxu0 %v3113
    %5084 = vmatmul.mubr.bf16.gmra.mrb[0].mxu0 %v3112
    %v5085 = vpop.f32.mrb[0].mxu0
    %v5086 = vadd.f32 %v5033, %v5085
    %v5087 = vpop.f32.mrb[0].mxu0
    %v5088 = vadd.f32 %v5035, %v5087
    %v5089 = vpop.f32.mrb[0].mxu0
    %v5090 = vadd.f32 %v5037, %v5089
    %v5091 = vpop.f32.mrb[0].mxu0
    %v5092 = vadd.f32 %v5039, %v5091
    %5093 = vmatprep.mubr.bf16.mxu0 %v3121
    %5094 = vmatmul.mubr.bf16.gmra.mrb[0].mxu0 %v3120
    %v5095 = vpop.f32.mrb[0].mxu0
    %v5096 = vadd.f32 %v5043, %v5095
    %v5097 = vpop.f32.mrb[0].mxu0
    %v5098 = vadd.f32 %v5045, %v5097
    %v5099 = vpop.f32.mrb[0].mxu0
    %v5100 = vadd.f32 %v5047, %v5099
    %v5101 = vpop.f32.mrb[0].mxu0
    %v5102 = vadd.f32 %v5049, %v5101
    %5103 = vdwg.mxu0
    %v5104 = vmax.f32 %v4874, 0.0
    %v5105 = vmax.f32 %v4876, 0.0
    %v5106 = vmax.f32 %v5086, 0.0
    %v5107 = vmax.f32 %v5088, 0.0
    %v5108 = vmax.f32 %v4878, 0.0
    %v5109 = vmax.f32 %v4880, 0.0
    %v5110 = vmax.f32 %v5090, 0.0
    %v5111 = vmax.f32 %v5092, 0.0
    %v5112 = vmax.f32 %v4884, 0.0
    %v5113 = vmax.f32 %v4886, 0.0
    %v5114 = vmax.f32 %v5096, 0.0
    %v5115 = vmax.f32 %v5098, 0.0
    %v5116 = vmax.f32 %v4888, 0.0
    %v5117 = vmax.f32 %v4890, 0.0
    %v5118 = vmax.f32 %v5100, 0.0
    %v5119 = vmax.f32 %v5102, 0.0
    %v5120 = vpack.c.bf16 %v5108, %v5104
    %v5121 = vpack.c.bf16 %v5109, %v5105
    %v5122 = vpack.c.bf16 %v5110, %v5106
    %v5123 = vpack.c.bf16 %v5111, %v5107
    %v5124 = vpack.c.bf16 %v5116, %v5112
    %v5125 = vpack.c.bf16 %v5117, %v5113
    %v5126 = vpack.c.bf16 %v5118, %v5114
    %v5127 = vpack.c.bf16 %v5119, %v5115
    %v5128 = vld [vmem:[#allocation9] sm:$0xff]
    %v5129 = vld [vmem:[#allocation9 + $0x8] sm:$0xff]
    %v5130 = vld [vmem:[#allocation9 + $0x10] sm:$0xff]
    %v5131 = vld [vmem:[#allocation9 + $0x18] sm:$0xff]
    %v5132 = vld [vmem:[#allocation9 + $0x20] sm:$0xff]
    %v5133 = vld [vmem:[#allocation9 + $0x28] sm:$0xff]
    %v5134 = vld [vmem:[#allocation9 + $0x30] sm:$0xff]
    %v5135 = vld [vmem:[#allocation9 + $0x38] sm:$0xff]
    %v5136 = vld [vmem:[#allocation9 + $0x40] sm:$0xff]
    %v5137 = vld [vmem:[#allocation9 + $0x48] sm:$0xff]
    %v5138 = vld [vmem:[#allocation9 + $0x50] sm:$0xff]
    %v5139 = vld [vmem:[#allocation9 + $0x58] sm:$0xff]
    %v5140 = vld [vmem:[#allocation9 + $0x60] sm:$0xff]
    %v5141 = vld [vmem:[#allocation9 + $0x68] sm:$0xff]
    %v5142 = vld [vmem:[#allocation9 + $0x70] sm:$0xff]
    %v5143 = vld [vmem:[#allocation9 + $0x78] sm:$0xff]
    %v5144 = vld [vmem:[#allocation9 + $0x80] sm:$0xff]
    %v5145 = vld [vmem:[#allocation9 + $0x88] sm:$0xff]
    %v5146 = vld [vmem:[#allocation9 + $0x90] sm:$0xff]
    %v5147 = vld [vmem:[#allocation9 + $0x98] sm:$0xff]
    %v5148 = vld [vmem:[#allocation9 + $0xa0] sm:$0xff]
    %v5149 = vld [vmem:[#allocation9 + $0xa8] sm:$0xff]
    %v5150 = vld [vmem:[#allocation9 + $0xb0] sm:$0xff]
    %v5151 = vld [vmem:[#allocation9 + $0xb8] sm:$0xff]
    %v5152 = vld [vmem:[#allocation9 + $0xc0] sm:$0xff]
    %v5153 = vld [vmem:[#allocation9 + $0xc8] sm:$0xff]
    %v5154 = vld [vmem:[#allocation9 + $0xd0] sm:$0xff]
    %v5155 = vld [vmem:[#allocation9 + $0xd8] sm:$0xff]
    %v5156 = vld [vmem:[#allocation9 + $0xe0] sm:$0xff]
    %v5157 = vld [vmem:[#allocation9 + $0xe8] sm:$0xff]
    %v5158 = vld [vmem:[#allocation9 + $0xf0] sm:$0xff]
    %v5159 = vld [vmem:[#allocation9 + $0xf8] sm:$0xff]
    %v5160 = vld [vmem:[#allocation9 + $0x100] sm:$0xff]
    %v5161 = vld [vmem:[#allocation9 + $0x108] sm:$0xff]
    %v5162 = vld [vmem:[#allocation9 + $0x110] sm:$0xff]
    %v5163 = vld [vmem:[#allocation9 + $0x118] sm:$0xff]
    %v5164 = vld [vmem:[#allocation9 + $0x120] sm:$0xff]
    %v5165 = vld [vmem:[#allocation9 + $0x128] sm:$0xff]
    %v5166 = vld [vmem:[#allocation9 + $0x130] sm:$0xff]
    %v5167 = vld [vmem:[#allocation9 + $0x138] sm:$0xff]
    %v5168 = vld [vmem:[#allocation9 + $0x140] sm:$0xff]
    %v5169 = vld [vmem:[#allocation9 + $0x148] sm:$0xff]
    %v5170 = vld [vmem:[#allocation9 + $0x150] sm:$0xff]
    %v5171 = vld [vmem:[#allocation9 + $0x158] sm:$0xff]
    %v5172 = vld [vmem:[#allocation9 + $0x160] sm:$0xff]
    %v5173 = vld [vmem:[#allocation9 + $0x168] sm:$0xff]
    %v5174 = vld [vmem:[#allocation9 + $0x170] sm:$0xff]
    %v5175 = vld [vmem:[#allocation9 + $0x178] sm:$0xff]
    %v5176 = vld [vmem:[#allocation9 + $0x180] sm:$0xff]
    %v5177 = vld [vmem:[#allocation9 + $0x188] sm:$0xff]
    %v5178 = vld [vmem:[#allocation9 + $0x190] sm:$0xff]
    %v5179 = vld [vmem:[#allocation9 + $0x198] sm:$0xff]
    %v5180 = vld [vmem:[#allocation9 + $0x1a0] sm:$0xff]
    %v5181 = vld [vmem:[#allocation9 + $0x1a8] sm:$0xff]
    %v5182 = vld [vmem:[#allocation9 + $0x1b0] sm:$0xff]
    %v5183 = vld [vmem:[#allocation9 + $0x1b8] sm:$0xff]
    %v5184 = vld [vmem:[#allocation9 + $0x1c0] sm:$0xff]
    %v5185 = vld [vmem:[#allocation9 + $0x1c8] sm:$0xff]
    %v5186 = vld [vmem:[#allocation9 + $0x1d0] sm:$0xff]
    %v5187 = vld [vmem:[#allocation9 + $0x1d8] sm:$0xff]
    %v5188 = vld [vmem:[#allocation9 + $0x1e0] sm:$0xff]
    %v5189 = vld [vmem:[#allocation9 + $0x1e8] sm:$0xff]
    %v5190 = vld [vmem:[#allocation9 + $0x1f0] sm:$0xff]
    %v5191 = vld [vmem:[#allocation9 + $0x1f8] sm:$0xff]
    %v5192 = vld [vmem:[#allocation10] sm:$0x3]
    %v5194 = vlaneseq
    %v5195 = vshrl.u32 %v5194, 7
    %v5196 = vsub.s32 0, %v5195
    %v5197 = vrot.slane %v5192, %v5196
    %v5198 = vlaneseq
    %v5199 = vshrl.u32 %v5198, 7
    %v5200 = vsub.s32 1, %v5199
    %v5201 = vrot.slane %v5192, %v5200
    %v5268 = vunpack.c.l.b16 %v5128
    %v5269 = vunpack.c.h.b16 %v5128
    %v5270 = vunpack.c.l.b16 %v5129
    %v5271 = vunpack.c.h.b16 %v5129
    %v5272 = vunpack.c.l.b16 %v5130
    %v5273 = vunpack.c.h.b16 %v5130
    %v5274 = vunpack.c.l.b16 %v5131
    %v5275 = vunpack.c.h.b16 %v5131
    %v5276 = vunpack.c.l.b16 %v5132
    %v5277 = vunpack.c.h.b16 %v5132
    %v5278 = vunpack.c.l.b16 %v5133
    %v5279 = vunpack.c.h.b16 %v5133
    %v5280 = vunpack.c.l.b16 %v5134
    %v5281 = vunpack.c.h.b16 %v5134
    %v5282 = vunpack.c.l.b16 %v5135
    %v5283 = vunpack.c.h.b16 %v5135
    %v5284 = vunpack.c.l.b16 %v5136
    %v5285 = vunpack.c.h.b16 %v5136
    %v5286 = vunpack.c.l.b16 %v5137
    %v5287 = vunpack.c.h.b16 %v5137
    %v5288 = vunpack.c.l.b16 %v5138
    %v5289 = vunpack.c.h.b16 %v5138
    %v5290 = vunpack.c.l.b16 %v5139
    %v5291 = vunpack.c.h.b16 %v5139
    %v5292 = vunpack.c.l.b16 %v5140
    %v5293 = vunpack.c.h.b16 %v5140
    %v5294 = vunpack.c.l.b16 %v5141
    %v5295 = vunpack.c.h.b16 %v5141
    %v5296 = vunpack.c.l.b16 %v5142
    %v5297 = vunpack.c.h.b16 %v5142
    %v5298 = vunpack.c.l.b16 %v5143
    %v5299 = vunpack.c.h.b16 %v5143
    %v5300 = vunpack.c.l.b16 %v5144
    %v5301 = vunpack.c.h.b16 %v5144
    %v5302 = vunpack.c.l.b16 %v5145
    %v5303 = vunpack.c.h.b16 %v5145
    %v5304 = vunpack.c.l.b16 %v5146
    %v5305 = vunpack.c.h.b16 %v5146
    %v5306 = vunpack.c.l.b16 %v5147
    %v5307 = vunpack.c.h.b16 %v5147
    %v5308 = vunpack.c.l.b16 %v5148
    %v5309 = vunpack.c.h.b16 %v5148
    %v5310 = vunpack.c.l.b16 %v5149
    %v5311 = vunpack.c.h.b16 %v5149
    %v5312 = vunpack.c.l.b16 %v5150
    %v5313 = vunpack.c.h.b16 %v5150
    %v5314 = vunpack.c.l.b16 %v5151
    %v5315 = vunpack.c.h.b16 %v5151
    %v5316 = vunpack.c.l.b16 %v5152
    %v5317 = vunpack.c.h.b16 %v5152
    %v5318 = vunpack.c.l.b16 %v5153
    %v5319 = vunpack.c.h.b16 %v5153
    %v5320 = vunpack.c.l.b16 %v5154
    %v5321 = vunpack.c.h.b16 %v5154
    %v5322 = vunpack.c.l.b16 %v5155
    %v5323 = vunpack.c.h.b16 %v5155
    %v5324 = vunpack.c.l.b16 %v5156
    %v5325 = vunpack.c.h.b16 %v5156
    %v5326 = vunpack.c.l.b16 %v5157
    %v5327 = vunpack.c.h.b16 %v5157
    %v5328 = vunpack.c.l.b16 %v5158
    %v5329 = vunpack.c.h.b16 %v5158
    %v5330 = vunpack.c.l.b16 %v5159
    %v5331 = vunpack.c.h.b16 %v5159
    %v5332 = vunpack.c.l.b16 %v5160
    %v5333 = vunpack.c.h.b16 %v5160
    %v5334 = vunpack.c.l.b16 %v5161
    %v5335 = vunpack.c.h.b16 %v5161
    %v5336 = vunpack.c.l.b16 %v5162
    %v5337 = vunpack.c.h.b16 %v5162
    %v5338 = vunpack.c.l.b16 %v5163
    %v5339 = vunpack.c.h.b16 %v5163
    %v5340 = vunpack.c.l.b16 %v5164
    %v5341 = vunpack.c.h.b16 %v5164
    %v5342 = vunpack.c.l.b16 %v5165
    %v5343 = vunpack.c.h.b16 %v5165
    %v5344 = vunpack.c.l.b16 %v5166
    %v5345 = vunpack.c.h.b16 %v5166
    %v5346 = vunpack.c.l.b16 %v5167
    %v5347 = vunpack.c.h.b16 %v5167
    %v5348 = vunpack.c.l.b16 %v5168
    %v5349 = vunpack.c.h.b16 %v5168
    %v5350 = vunpack.c.l.b16 %v5169
    %v5351 = vunpack.c.h.b16 %v5169
    %v5352 = vunpack.c.l.b16 %v5170
    %v5353 = vunpack.c.h.b16 %v5170
    %v5354 = vunpack.c.l.b16 %v5171
    %v5355 = vunpack.c.h.b16 %v5171
    %v5356 = vunpack.c.l.b16 %v5172
    %v5357 = vunpack.c.h.b16 %v5172
    %v5358 = vunpack.c.l.b16 %v5173
    %v5359 = vunpack.c.h.b16 %v5173
    %v5360 = vunpack.c.l.b16 %v5174
    %v5361 = vunpack.c.h.b16 %v5174
    %v5362 = vunpack.c.l.b16 %v5175
    %v5363 = vunpack.c.h.b16 %v5175
    %v5364 = vunpack.c.l.b16 %v5176
    %v5365 = vunpack.c.h.b16 %v5176
    %v5366 = vunpack.c.l.b16 %v5177
    %v5367 = vunpack.c.h.b16 %v5177
    %v5368 = vunpack.c.l.b16 %v5178
    %v5369 = vunpack.c.h.b16 %v5178
    %v5370 = vunpack.c.l.b16 %v5179
    %v5371 = vunpack.c.h.b16 %v5179
    %v5372 = vunpack.c.l.b16 %v5180
    %v5373 = vunpack.c.h.b16 %v5180
    %v5374 = vunpack.c.l.b16 %v5181
    %v5375 = vunpack.c.h.b16 %v5181
    %v5376 = vunpack.c.l.b16 %v5182
    %v5377 = vunpack.c.h.b16 %v5182
    %v5378 = vunpack.c.l.b16 %v5183
    %v5379 = vunpack.c.h.b16 %v5183
    %v5380 = vunpack.c.l.b16 %v5184
    %v5381 = vunpack.c.h.b16 %v5184
    %v5382 = vunpack.c.l.b16 %v5185
    %v5383 = vunpack.c.h.b16 %v5185
    %v5384 = vunpack.c.l.b16 %v5186
    %v5385 = vunpack.c.h.b16 %v5186
    %v5386 = vunpack.c.l.b16 %v5187
    %v5387 = vunpack.c.h.b16 %v5187
    %v5388 = vunpack.c.l.b16 %v5188
    %v5389 = vunpack.c.h.b16 %v5188
    %v5390 = vunpack.c.l.b16 %v5189
    %v5391 = vunpack.c.h.b16 %v5189
    %v5392 = vunpack.c.l.b16 %v5190
    %v5393 = vunpack.c.h.b16 %v5190
    %v5394 = vunpack.c.l.b16 %v5191
    %v5395 = vunpack.c.h.b16 %v5191
    %v5396 = vpack.c.b16 %v5270, %v5268
    %v5397 = vpack.c.b16 %v5271, %v5269
    %v5398 = vpack.c.b16 %v5274, %v5272
    %v5399 = vpack.c.b16 %v5275, %v5273
    %v5400 = vpack.c.b16 %v5278, %v5276
    %v5401 = vpack.c.b16 %v5279, %v5277
    %v5402 = vpack.c.b16 %v5282, %v5280
    %v5403 = vpack.c.b16 %v5283, %v5281
    %v5404 = vpack.c.b16 %v5286, %v5284
    %v5405 = vpack.c.b16 %v5287, %v5285
    %v5406 = vpack.c.b16 %v5290, %v5288
    %v5407 = vpack.c.b16 %v5291, %v5289
    %v5408 = vpack.c.b16 %v5294, %v5292
    %v5409 = vpack.c.b16 %v5295, %v5293
    %v5410 = vpack.c.b16 %v5298, %v5296
    %v5411 = vpack.c.b16 %v5299, %v5297
    %v5412 = vpack.c.b16 %v5302, %v5300
    %v5413 = vpack.c.b16 %v5303, %v5301
    %v5414 = vpack.c.b16 %v5306, %v5304
    %v5415 = vpack.c.b16 %v5307, %v5305
    %v5416 = vpack.c.b16 %v5310, %v5308
    %v5417 = vpack.c.b16 %v5311, %v5309
    %v5418 = vpack.c.b16 %v5314, %v5312
    %v5419 = vpack.c.b16 %v5315, %v5313
    %v5420 = vpack.c.b16 %v5318, %v5316
    %v5421 = vpack.c.b16 %v5319, %v5317
    %v5422 = vpack.c.b16 %v5322, %v5320
    %v5423 = vpack.c.b16 %v5323, %v5321
    %v5424 = vpack.c.b16 %v5326, %v5324
    %v5425 = vpack.c.b16 %v5327, %v5325
    %v5426 = vpack.c.b16 %v5330, %v5328
    %v5427 = vpack.c.b16 %v5331, %v5329
    %v5428 = vpack.c.b16 %v5334, %v5332
    %v5429 = vpack.c.b16 %v5335, %v5333
    %v5430 = vpack.c.b16 %v5338, %v5336
    %v5431 = vpack.c.b16 %v5339, %v5337
    %v5432 = vpack.c.b16 %v5342, %v5340
    %v5433 = vpack.c.b16 %v5343, %v5341
    %v5434 = vpack.c.b16 %v5346, %v5344
    %v5435 = vpack.c.b16 %v5347, %v5345
    %v5436 = vpack.c.b16 %v5350, %v5348
    %v5437 = vpack.c.b16 %v5351, %v5349
    %v5438 = vpack.c.b16 %v5354, %v5352
    %v5439 = vpack.c.b16 %v5355, %v5353
    %v5440 = vpack.c.b16 %v5358, %v5356
    %v5441 = vpack.c.b16 %v5359, %v5357
    %v5442 = vpack.c.b16 %v5362, %v5360
    %v5443 = vpack.c.b16 %v5363, %v5361
    %v5444 = vpack.c.b16 %v5366, %v5364
    %v5445 = vpack.c.b16 %v5367, %v5365
    %v5446 = vpack.c.b16 %v5370, %v5368
    %v5447 = vpack.c.b16 %v5371, %v5369
    %v5448 = vpack.c.b16 %v5374, %v5372
    %v5449 = vpack.c.b16 %v5375, %v5373
    %v5450 = vpack.c.b16 %v5378, %v5376
    %v5451 = vpack.c.b16 %v5379, %v5377
    %v5452 = vpack.c.b16 %v5382, %v5380
    %v5453 = vpack.c.b16 %v5383, %v5381
    %v5454 = vpack.c.b16 %v5386, %v5384
    %v5455 = vpack.c.b16 %v5387, %v5385
    %v5456 = vpack.c.b16 %v5390, %v5388
    %v5457 = vpack.c.b16 %v5391, %v5389
    %v5458 = vpack.c.b16 %v5394, %v5392
    %v5459 = vpack.c.b16 %v5395, %v5393
    %5524 = vmatprep.subr.bf16.mxu0 %v5397
    %5525 = vmatpush1.bf16.msra.mxu0 %v5396
    %5526 = vmatprep.subr.bf16.mxu0 %v5399
    %5527 = vmatpush1.bf16.msra.mxu0 %v5398
    %5528 = vmatprep.subr.bf16.mxu0 %v5401
    %5529 = vmatpush1.bf16.msra.mxu0 %v5400
    %5530 = vmatprep.subr.bf16.mxu0 %v5403
    %5531 = vmatpush1.bf16.msra.mxu0 %v5402
    %5532 = vmatprep.subr.bf16.mxu0 %v5405
    %5533 = vmatpush1.bf16.msra.mxu0 %v5404
    %5534 = vmatprep.subr.bf16.mxu0 %v5407
    %5535 = vmatpush1.bf16.msra.mxu0 %v5406
    %5536 = vmatprep.subr.bf16.mxu0 %v5409
    %5537 = vmatpush1.bf16.msra.mxu0 %v5408
    %5538 = vmatprep.subr.bf16.mxu0 %v5411
    %5539 = vmatpush1.bf16.msra.mxu0 %v5410
    %5540 = vmatprep.subr.bf16.mxu0 %v5413
    %5541 = vmatpush1.bf16.msra.mxu0 %v5412
    %5542 = vmatprep.subr.bf16.mxu0 %v5415
    %5543 = vmatpush1.bf16.msra.mxu0 %v5414
    %5544 = vmatprep.subr.bf16.mxu0 %v5417
    %5545 = vmatpush1.bf16.msra.mxu0 %v5416
    %5546 = vmatprep.subr.bf16.mxu0 %v5419
    %5547 = vmatpush1.bf16.msra.mxu0 %v5418
    %5548 = vmatprep.subr.bf16.mxu0 %v5421
    %5549 = vmatpush1.bf16.msra.mxu0 %v5420
    %5550 = vmatprep.subr.bf16.mxu0 %v5423
    %5551 = vmatpush1.bf16.msra.mxu0 %v5422
    %5552 = vmatprep.subr.bf16.mxu0 %v5425
    %5553 = vmatpush1.bf16.msra.mxu0 %v5424
    %5554 = vmatprep.subr.bf16.mxu0 %v5427
    %5555 = vmatpush1.bf16.msra.mxu0 %v5426
    %5556 = vmatprep.mubr.bf16.mxu0 %v5121
    %5557 = vmatmul.mubr.bf16.gmra.mrb[0].mxu0 %v5120
    %v5558 = vpop.f32.mrb[0].mxu0
    %v5559 = vadd.f32 %v5197, %v5558
    %v5560 = vpop.f32.mrb[0].mxu0
    %v5561 = vadd.f32 %v5201, %v5560
    %v5562 = vpop.f32.mrb[0].mxu0
    %v5563 = vadd.f32 %v5197, %v5562
    %v5564 = vpop.f32.mrb[0].mxu0
    %v5565 = vadd.f32 %v5201, %v5564
    %5566 = vmatprep.mubr.bf16.mxu0 %v5125
    %5567 = vmatmul.mubr.bf16.gmra.mrb[0].mxu0 %v5124
    %v5568 = vpop.f32.mrb[0].mxu0
    %v5569 = vadd.f32 %v5197, %v5568
    %v5570 = vpop.f32.mrb[0].mxu0
    %v5571 = vadd.f32 %v5201, %v5570
    %v5572 = vpop.f32.mrb[0].mxu0
    %v5573 = vadd.f32 %v5197, %v5572
    %v5574 = vpop.f32.mrb[0].mxu0
    %v5575 = vadd.f32 %v5201, %v5574
    %5576 = vdwg.mxu0
    %5577 = vmatprep.subr.bf16.mxu0 %v5429
    %5578 = vmatpush1.bf16.msra.mxu0 %v5428
    %5579 = vmatprep.subr.bf16.mxu0 %v5431
    %5580 = vmatpush1.bf16.msra.mxu0 %v5430
    %5581 = vmatprep.subr.bf16.mxu0 %v5433
    %5582 = vmatpush1.bf16.msra.mxu0 %v5432
    %5583 = vmatprep.subr.bf16.mxu0 %v5435
    %5584 = vmatpush1.bf16.msra.mxu0 %v5434
    %5585 = vmatprep.subr.bf16.mxu0 %v5437
    %5586 = vmatpush1.bf16.msra.mxu0 %v5436
    %5587 = vmatprep.subr.bf16.mxu0 %v5439
    %5588 = vmatpush1.bf16.msra.mxu0 %v5438
    %5589 = vmatprep.subr.bf16.mxu0 %v5441
    %5590 = vmatpush1.bf16.msra.mxu0 %v5440
    %5591 = vmatprep.subr.bf16.mxu0 %v5443
    %5592 = vmatpush1.bf16.msra.mxu0 %v5442
    %5593 = vmatprep.subr.bf16.mxu0 %v5445
    %5594 = vmatpush1.bf16.msra.mxu0 %v5444
    %5595 = vmatprep.subr.bf16.mxu0 %v5447
    %5596 = vmatpush1.bf16.msra.mxu0 %v5446
    %5597 = vmatprep.subr.bf16.mxu0 %v5449
    %5598 = vmatpush1.bf16.msra.mxu0 %v5448
    %5599 = vmatprep.subr.bf16.mxu0 %v5451
    %5600 = vmatpush1.bf16.msra.mxu0 %v5450
    %5601 = vmatprep.subr.bf16.mxu0 %v5453
    %5602 = vmatpush1.bf16.msra.mxu0 %v5452
    %5603 = vmatprep.subr.bf16.mxu0 %v5455
    %5604 = vmatpush1.bf16.msra.mxu0 %v5454
    %5605 = vmatprep.subr.bf16.mxu0 %v5457
    %5606 = vmatpush1.bf16.msra.mxu0 %v5456
    %5607 = vmatprep.subr.bf16.mxu0 %v5459
    %5608 = vmatpush1.bf16.msra.mxu0 %v5458
    %5609 = vmatprep.mubr.bf16.mxu0 %v5123
    %5610 = vmatmul.mubr.bf16.gmra.mrb[0].mxu0 %v5122
    %v5611 = vpop.f32.mrb[0].mxu0
    %v5612 = vadd.f32 %v5559, %v5611
    %v5613 = vpop.f32.mrb[0].mxu0
    %v5614 = vadd.f32 %v5561, %v5613
    %v5615 = vpop.f32.mrb[0].mxu0
    %v5616 = vadd.f32 %v5563, %v5615
    %v5617 = vpop.f32.mrb[0].mxu0
    %v5618 = vadd.f32 %v5565, %v5617
    %5619 = vmatprep.mubr.bf16.mxu0 %v5127
    %5620 = vmatmul.mubr.bf16.gmra.mrb[0].mxu0 %v5126
    %v5621 = vpop.f32.mrb[0].mxu0
    %v5622 = vadd.f32 %v5569, %v5621
    %v5623 = vpop.f32.mrb[0].mxu0
    %v5624 = vadd.f32 %v5571, %v5623
    %v5625 = vpop.f32.mrb[0].mxu0
    %v5626 = vadd.f32 %v5573, %v5625
    %v5627 = vpop.f32.mrb[0].mxu0
    %v5628 = vadd.f32 %v5575, %v5627
    %5629 = vdwg.mxu0
    %v5630 = vmax.f32 %v5612, 0.0
    %v5631 = vmax.f32 %v5614, 0.0
    %v5632 = vmax.f32 %v5616, 0.0
    %v5633 = vmax.f32 %v5618, 0.0
    %v5634 = vmax.f32 %v5622, 0.0
    %v5635 = vmax.f32 %v5624, 0.0
    %v5636 = vmax.f32 %v5626, 0.0
    %v5637 = vmax.f32 %v5628, 0.0
    %v5638 = vpack.c.bf16 %v5632, %v5630
    %v5639 = vpack.c.bf16 %v5633, %v5631
    %v5640 = vpack.c.bf16 %v5636, %v5634
    %v5641 = vpack.c.bf16 %v5637, %v5635
    %v5642 = vld [vmem:[#allocation12] sm:$0xf]
    %v5643 = vld [vmem:[#allocation12 + $0x4] sm:$0xf]
    %v5644 = vld [vmem:[#allocation12 + $0x8] sm:$0xf]
    %v5645 = vld [vmem:[#allocation12 + $0xc] sm:$0xf]
    %v5646 = vld [vmem:[#allocation12 + $0x10] sm:$0xf]
    %v5647 = vld [vmem:[#allocation12 + $0x14] sm:$0xf]
    %v5648 = vld [vmem:[#allocation12 + $0x18] sm:$0xf]
    %v5649 = vld [vmem:[#allocation12 + $0x1c] sm:$0xf]
    %v5650 = vld [vmem:[#allocation12 + $0x20] sm:$0xf]
    %v5651 = vld [vmem:[#allocation12 + $0x24] sm:$0xf]
    %v5652 = vld [vmem:[#allocation12 + $0x28] sm:$0xf]
    %v5653 = vld [vmem:[#allocation12 + $0x2c] sm:$0xf]
    %v5654 = vld [vmem:[#allocation12 + $0x30] sm:$0xf]
    %v5655 = vld [vmem:[#allocation12 + $0x34] sm:$0xf]
    %v5656 = vld [vmem:[#allocation12 + $0x38] sm:$0xf]
    %v5657 = vld [vmem:[#allocation12 + $0x3c] sm:$0xf]
    %v5658 = vld [vmem:[#allocation12 + $0x40] sm:$0xf]
    %v5659 = vld [vmem:[#allocation12 + $0x44] sm:$0xf]
    %v5660 = vld [vmem:[#allocation12 + $0x48] sm:$0xf]
    %v5661 = vld [vmem:[#allocation12 + $0x4c] sm:$0xf]
    %v5662 = vld [vmem:[#allocation12 + $0x50] sm:$0xf]
    %v5663 = vld [vmem:[#allocation12 + $0x54] sm:$0xf]
    %v5664 = vld [vmem:[#allocation12 + $0x58] sm:$0xf]
    %v5665 = vld [vmem:[#allocation12 + $0x5c] sm:$0xf]
    %v5666 = vld [vmem:[#allocation12 + $0x60] sm:$0xf]
    %v5667 = vld [vmem:[#allocation12 + $0x64] sm:$0xf]
    %v5668 = vld [vmem:[#allocation12 + $0x68] sm:$0xf]
    %v5669 = vld [vmem:[#allocation12 + $0x6c] sm:$0xf]
    %v5670 = vld [vmem:[#allocation12 + $0x70] sm:$0xf]
    %v5671 = vld [vmem:[#allocation12 + $0x74] sm:$0xf]
    %v5672 = vld [vmem:[#allocation12 + $0x78] sm:$0xf]
    %v5673 = vld [vmem:[#allocation12 + $0x7c] sm:$0xf]
    %v5674 = vld [vmem:[#allocation13] sm:$0xf]
    %v5675 = vld [vmem:[#allocation13 + $0x4] sm:$0xf]
    %v5676 = vld [vmem:[#allocation13 + $0x8] sm:$0xf]
    %v5677 = vld [vmem:[#allocation13 + $0xc] sm:$0xf]
    %v5678 = vld [vmem:[#allocation13 + $0x10] sm:$0xf]
    %v5679 = vld [vmem:[#allocation13 + $0x14] sm:$0xf]
    %v5680 = vld [vmem:[#allocation13 + $0x18] sm:$0xf]
    %v5681 = vld [vmem:[#allocation13 + $0x1c] sm:$0xf]
    %v5682 = vld [vmem:[#allocation13 + $0x20] sm:$0xf]
    %v5683 = vld [vmem:[#allocation13 + $0x24] sm:$0xf]
    %v5684 = vld [vmem:[#allocation13 + $0x28] sm:$0xf]
    %v5685 = vld [vmem:[#allocation13 + $0x2c] sm:$0xf]
    %v5686 = vld [vmem:[#allocation13 + $0x30] sm:$0xf]
    %v5687 = vld [vmem:[#allocation13 + $0x34] sm:$0xf]
    %v5688 = vld [vmem:[#allocation13 + $0x38] sm:$0xf]
    %v5689 = vld [vmem:[#allocation13 + $0x3c] sm:$0xf]
    %v5690 = vld [vmem:[#allocation13 + $0x40] sm:$0xf]
    %v5691 = vld [vmem:[#allocation13 + $0x44] sm:$0xf]
    %v5692 = vld [vmem:[#allocation13 + $0x48] sm:$0xf]
    %v5693 = vld [vmem:[#allocation13 + $0x4c] sm:$0xf]
    %v5694 = vld [vmem:[#allocation13 + $0x50] sm:$0xf]
    %v5695 = vld [vmem:[#allocation13 + $0x54] sm:$0xf]
    %v5696 = vld [vmem:[#allocation13 + $0x58] sm:$0xf]
    %v5697 = vld [vmem:[#allocation13 + $0x5c] sm:$0xf]
    %v5698 = vld [vmem:[#allocation13 + $0x60] sm:$0xf]
    %v5699 = vld [vmem:[#allocation13 + $0x64] sm:$0xf]
    %v5700 = vld [vmem:[#allocation13 + $0x68] sm:$0xf]
    %v5701 = vld [vmem:[#allocation13 + $0x6c] sm:$0xf]
    %v5702 = vld [vmem:[#allocation13 + $0x70] sm:$0xf]
    %v5703 = vld [vmem:[#allocation13 + $0x74] sm:$0xf]
    %v5704 = vld [vmem:[#allocation13 + $0x78] sm:$0xf]
    %v5705 = vld [vmem:[#allocation13 + $0x7c] sm:$0xf]
    %v5738 = vunpack.c.l.b16 %v5674
    %v5739 = vunpack.c.l.b16 %v5675
    %v5740 = vunpack.c.l.b16 %v5676
    %v5741 = vunpack.c.l.b16 %v5677
    %v5742 = vunpack.c.l.b16 %v5678
    %v5743 = vunpack.c.l.b16 %v5679
    %v5744 = vunpack.c.l.b16 %v5680
    %v5745 = vunpack.c.l.b16 %v5681
    %v5746 = vunpack.c.l.b16 %v5682
    %v5747 = vunpack.c.l.b16 %v5683
    %v5748 = vunpack.c.l.b16 %v5684
    %v5749 = vunpack.c.l.b16 %v5685
    %v5750 = vunpack.c.l.b16 %v5686
    %v5751 = vunpack.c.l.b16 %v5687
    %v5752 = vunpack.c.l.b16 %v5688
    %v5753 = vunpack.c.l.b16 %v5689
    %v5754 = vunpack.c.l.b16 %v5690
    %v5755 = vunpack.c.l.b16 %v5691
    %v5756 = vunpack.c.l.b16 %v5692
    %v5757 = vunpack.c.l.b16 %v5693
    %v5758 = vunpack.c.l.b16 %v5694
    %v5759 = vunpack.c.l.b16 %v5695
    %v5760 = vunpack.c.l.b16 %v5696
    %v5761 = vunpack.c.l.b16 %v5697
    %v5762 = vunpack.c.l.b16 %v5698
    %v5763 = vunpack.c.l.b16 %v5699
    %v5764 = vunpack.c.l.b16 %v5700
    %v5765 = vunpack.c.l.b16 %v5701
    %v5766 = vunpack.c.l.b16 %v5702
    %v5767 = vunpack.c.l.b16 %v5703
    %v5768 = vunpack.c.l.b16 %v5704
    %v5769 = vunpack.c.l.b16 %v5705
    %v5770 = vpack.c.b16 %v5739, %v5738
    %v5771 = vpack.c.b16 %v5741, %v5740
    %v5772 = vpack.c.b16 %v5743, %v5742
    %v5773 = vpack.c.b16 %v5745, %v5744
    %v5774 = vpack.c.b16 %v5747, %v5746
    %v5775 = vpack.c.b16 %v5749, %v5748
    %v5776 = vpack.c.b16 %v5751, %v5750
    %v5777 = vpack.c.b16 %v5753, %v5752
    %v5778 = vpack.c.b16 %v5755, %v5754
    %v5779 = vpack.c.b16 %v5757, %v5756
    %v5780 = vpack.c.b16 %v5759, %v5758
    %v5781 = vpack.c.b16 %v5761, %v5760
    %v5782 = vpack.c.b16 %v5763, %v5762
    %v5783 = vpack.c.b16 %v5765, %v5764
    %v5784 = vpack.c.b16 %v5767, %v5766
    %v5785 = vpack.c.b16 %v5769, %v5768
    %5802 = vmatprep.subr.bf16.mxu0 0
    %5803 = vmatpush1.bf16.msra.mxu0 %v5770
    %5804 = vmatprep.subr.bf16.mxu0 0
    %5805 = vmatpush1.bf16.msra.mxu0 %v5771
    %5806 = vmatprep.subr.bf16.mxu0 0
    %5807 = vmatpush1.bf16.msra.mxu0 %v5772
    %5808 = vmatprep.subr.bf16.mxu0 0
    %5809 = vmatpush1.bf16.msra.mxu0 %v5773
    %5810 = vmatprep.subr.bf16.mxu0 0
    %5811 = vmatpush1.bf16.msra.mxu0 %v5774
    %5812 = vmatprep.subr.bf16.mxu0 0
    %5813 = vmatpush1.bf16.msra.mxu0 %v5775
    %5814 = vmatprep.subr.bf16.mxu0 0
    %5815 = vmatpush1.bf16.msra.mxu0 %v5776
    %5816 = vmatprep.subr.bf16.mxu0 0
    %5817 = vmatpush1.bf16.msra.mxu0 %v5777
    %5818 = vmatprep.subr.bf16.mxu0 0
    %5819 = vmatpush1.bf16.msra.mxu0 %v5778
    %5820 = vmatprep.subr.bf16.mxu0 0
    %5821 = vmatpush1.bf16.msra.mxu0 %v5779
    %5822 = vmatprep.subr.bf16.mxu0 0
    %5823 = vmatpush1.bf16.msra.mxu0 %v5780
    %5824 = vmatprep.subr.bf16.mxu0 0
    %5825 = vmatpush1.bf16.msra.mxu0 %v5781
    %5826 = vmatprep.subr.bf16.mxu0 0
    %5827 = vmatpush1.bf16.msra.mxu0 %v5782
    %5828 = vmatprep.subr.bf16.mxu0 0
    %5829 = vmatpush1.bf16.msra.mxu0 %v5783
    %5830 = vmatprep.subr.bf16.mxu0 0
    %5831 = vmatpush1.bf16.msra.mxu0 %v5784
    %5832 = vmatprep.subr.bf16.mxu0 0
    %5833 = vmatpush1.bf16.msra.mxu0 %v5785
    %5834 = vmatprep.mubr.bf16.mxu0 %v5641
    %5835 = vmatmul.mubr.bf16.gmra.mrb[0].mxu0 %v5640
    %v5836 = vpop.f32.mrb[0].mxu0
    %v5837 = vadd.f32 0.0, %v5836
    %v5838 = vpop.f32.mrb[0].mxu0
    %v5839 = vpop.f32.mrb[0].mxu0
    %v5840 = vadd.f32 0.0, %v5839
    %v5841 = vpop.f32.mrb[0].mxu0
    %5842 = vdwg.mxu0
    %v5875 = vunpack.c.l.b16 %v5642
    %v5876 = vunpack.c.l.b16 %v5643
    %v5877 = vunpack.c.l.b16 %v5644
    %v5878 = vunpack.c.l.b16 %v5645
    %v5879 = vunpack.c.l.b16 %v5646
    %v5880 = vunpack.c.l.b16 %v5647
    %v5881 = vunpack.c.l.b16 %v5648
    %v5882 = vunpack.c.l.b16 %v5649
    %v5883 = vunpack.c.l.b16 %v5650
    %v5884 = vunpack.c.l.b16 %v5651
    %v5885 = vunpack.c.l.b16 %v5652
    %v5886 = vunpack.c.l.b16 %v5653
    %v5887 = vunpack.c.l.b16 %v5654
    %v5888 = vunpack.c.l.b16 %v5655
    %v5889 = vunpack.c.l.b16 %v5656
    %v5890 = vunpack.c.l.b16 %v5657
    %v5891 = vunpack.c.l.b16 %v5658
    %v5892 = vunpack.c.l.b16 %v5659
    %v5893 = vunpack.c.l.b16 %v5660
    %v5894 = vunpack.c.l.b16 %v5661
    %v5895 = vunpack.c.l.b16 %v5662
    %v5896 = vunpack.c.l.b16 %v5663
    %v5897 = vunpack.c.l.b16 %v5664
    %v5898 = vunpack.c.l.b16 %v5665
    %v5899 = vunpack.c.l.b16 %v5666
    %v5900 = vunpack.c.l.b16 %v5667
    %v5901 = vunpack.c.l.b16 %v5668
    %v5902 = vunpack.c.l.b16 %v5669
    %v5903 = vunpack.c.l.b16 %v5670
    %v5904 = vunpack.c.l.b16 %v5671
    %v5905 = vunpack.c.l.b16 %v5672
    %v5906 = vunpack.c.l.b16 %v5673
    %v5907 = vpack.c.b16 %v5876, %v5875
    %v5908 = vpack.c.b16 %v5878, %v5877
    %v5909 = vpack.c.b16 %v5880, %v5879
    %v5910 = vpack.c.b16 %v5882, %v5881
    %v5911 = vpack.c.b16 %v5884, %v5883
    %v5912 = vpack.c.b16 %v5886, %v5885
    %v5913 = vpack.c.b16 %v5888, %v5887
    %v5914 = vpack.c.b16 %v5890, %v5889
    %v5915 = vpack.c.b16 %v5892, %v5891
    %v5916 = vpack.c.b16 %v5894, %v5893
    %v5917 = vpack.c.b16 %v5896, %v5895
    %v5918 = vpack.c.b16 %v5898, %v5897
    %v5919 = vpack.c.b16 %v5900, %v5899
    %v5920 = vpack.c.b16 %v5902, %v5901
    %v5921 = vpack.c.b16 %v5904, %v5903
    %v5922 = vpack.c.b16 %v5906, %v5905
    %5939 = vmatprep.subr.bf16.mxu0 0
    %5940 = vmatpush1.bf16.msra.mxu0 %v5907
    %5941 = vmatprep.subr.bf16.mxu0 0
    %5942 = vmatpush1.bf16.msra.mxu0 %v5908
    %5943 = vmatprep.subr.bf16.mxu0 0
    %5944 = vmatpush1.bf16.msra.mxu0 %v5909
    %5945 = vmatprep.subr.bf16.mxu0 0
    %5946 = vmatpush1.bf16.msra.mxu0 %v5910
    %5947 = vmatprep.subr.bf16.mxu0 0
    %5948 = vmatpush1.bf16.msra.mxu0 %v5911
    %5949 = vmatprep.subr.bf16.mxu0 0
    %5950 = vmatpush1.bf16.msra.mxu0 %v5912
    %5951 = vmatprep.subr.bf16.mxu0 0
    %5952 = vmatpush1.bf16.msra.mxu0 %v5913
    %5953 = vmatprep.subr.bf16.mxu0 0
    %5954 = vmatpush1.bf16.msra.mxu0 %v5914
    %5955 = vmatprep.subr.bf16.mxu0 0
    %5956 = vmatpush1.bf16.msra.mxu0 %v5915
    %5957 = vmatprep.subr.bf16.mxu0 0
    %5958 = vmatpush1.bf16.msra.mxu0 %v5916
    %5959 = vmatprep.subr.bf16.mxu0 0
    %5960 = vmatpush1.bf16.msra.mxu0 %v5917
    %5961 = vmatprep.subr.bf16.mxu0 0
    %5962 = vmatpush1.bf16.msra.mxu0 %v5918
    %5963 = vmatprep.subr.bf16.mxu0 0
    %5964 = vmatpush1.bf16.msra.mxu0 %v5919
    %5965 = vmatprep.subr.bf16.mxu0 0
    %5966 = vmatpush1.bf16.msra.mxu0 %v5920
    %5967 = vmatprep.subr.bf16.mxu0 0
    %5968 = vmatpush1.bf16.msra.mxu0 %v5921
    %5969 = vmatprep.subr.bf16.mxu0 0
    %5970 = vmatpush1.bf16.msra.mxu0 %v5922
    %5971 = vmatprep.mubr.bf16.mxu0 %v5639
    %5972 = vmatmul.mubr.bf16.gmra.mrb[0].mxu0 %v5638
    %v5973 = vpop.f32.mrb[0].mxu0
    %v5974 = vadd.f32 %v5837, %v5973
    %v5975 = vpop.f32.mrb[0].mxu0
    %v5976 = vpop.f32.mrb[0].mxu0
    %v5977 = vadd.f32 %v5840, %v5976
    %v5978 = vpop.f32.mrb[0].mxu0
    %5979 = vdwg.mxu0
    %v5980 = vld [vmem:[#allocation15] sm:$0x1]
    %v5982 = vlaneseq
    %v5983 = vshrl.u32 %v5982, 7
    %v5984 = vsub.s32 0, %v5983
    %v5985 = vrot.slane %v5980, %v5984
    %v5987 = vadd.f32 %v5974, %v5985
    %v5988 = vadd.f32 %v5977, %v5985
    %v5989 = vmax.f32 %v5987, 0.0
    %v5990 = vmax.f32 %v5988, 0.0
    %v5991 = vpack.c.bf16 %v5990, %v5989
    %v5992 = vld [vmem:[%s10] sm:$0xf]
    %v5993 = vld [vmem:[%s10 + $0x4] sm:$0xf]
    %v5994 = vld [vmem:[%s10 + $0x8] sm:$0xf]
    %v5995 = vld [vmem:[%s10 + $0xc] sm:$0xf]
    %v5996 = vld [vmem:[%s10 + $0x10] sm:$0xf]
    %v5997 = vld [vmem:[%s10 + $0x14] sm:$0xf]
    %v5998 = vld [vmem:[%s10 + $0x18] sm:$0xf]
    %v5999 = vld [vmem:[%s10 + $0x1c] sm:$0xf]
    %v6000 = vld [vmem:[%s10 + $0x20] sm:$0xf]
    %v6001 = vld [vmem:[%s10 + $0x24] sm:$0xf]
    %v6002 = vld [vmem:[%s10 + $0x28] sm:$0xf]
    %v6003 = vld [vmem:[%s10 + $0x2c] sm:$0xf]
    %v6004 = vld [vmem:[%s10 + $0x30] sm:$0xf]
    %v6005 = vld [vmem:[%s10 + $0x34] sm:$0xf]
    %v6006 = vld [vmem:[%s10 + $0x38] sm:$0xf]
    %v6007 = vld [vmem:[%s10 + $0x3c] sm:$0xf]
    %v6008 = vld [vmem:[#allocation16] sm:$0x1]
    %v6010 = vlaneseq
    %v6011 = vshrl.u32 %v6010, 7
    %v6012 = vsub.s32 0, %v6011
    %v6013 = vrot.slane %v6008, %v6012
    %v6031 = vunpack.c.l.b16 %v5992
    %v6032 = vunpack.c.l.b16 %v5993
    %v6033 = vunpack.c.l.b16 %v5994
    %v6034 = vunpack.c.l.b16 %v5995
    %v6035 = vunpack.c.l.b16 %v5996
    %v6036 = vunpack.c.l.b16 %v5997
    %v6037 = vunpack.c.l.b16 %v5998
    %v6038 = vunpack.c.l.b16 %v5999
    %v6039 = vunpack.c.l.b16 %v6000
    %v6040 = vunpack.c.l.b16 %v6001
    %v6041 = vunpack.c.l.b16 %v6002
    %v6042 = vunpack.c.l.b16 %v6003
    %v6043 = vunpack.c.l.b16 %v6004
    %v6044 = vunpack.c.l.b16 %v6005
    %v6045 = vunpack.c.l.b16 %v6006
    %v6046 = vunpack.c.l.b16 %v6007
    %v6047 = vpack.c.b16 %v6032, %v6031
    %v6048 = vpack.c.b16 %v6034, %v6033
    %v6049 = vpack.c.b16 %v6036, %v6035
    %v6050 = vpack.c.b16 %v6038, %v6037
    %v6051 = vpack.c.b16 %v6040, %v6039
    %v6052 = vpack.c.b16 %v6042, %v6041
    %v6053 = vpack.c.b16 %v6044, %v6043
    %v6054 = vpack.c.b16 %v6046, %v6045
    %6063 = vmatprep.subr.bf16.mxu0 0
    %6064 = vmatpush1.bf16.msra.mxu0 %v6047
    %6065 = vmatprep.subr.bf16.mxu0 0
    %6066 = vmatpush1.bf16.msra.mxu0 %v6048
    %6067 = vmatprep.subr.bf16.mxu0 0
    %6068 = vmatpush1.bf16.msra.mxu0 %v6049
    %6069 = vmatprep.subr.bf16.mxu0 0
    %6070 = vmatpush1.bf16.msra.mxu0 %v6050
    %6071 = vmatprep.subr.bf16.mxu0 0
    %6072 = vmatpush1.bf16.msra.mxu0 %v6051
    %6073 = vmatprep.subr.bf16.mxu0 0
    %6074 = vmatpush1.bf16.msra.mxu0 %v6052
    %6075 = vmatprep.subr.bf16.mxu0 0
    %6076 = vmatpush1.bf16.msra.mxu0 %v6053
    %6077 = vmatprep.subr.bf16.mxu0 0
    %6078 = vmatpush1.bf16.msra.mxu0 %v6054
    %6079 = vmatprep.subr.bf16.mxu0 0
    %6080 = vmatpush1.bf16.msra.mxu0 0
    %6081 = vmatprep.subr.bf16.mxu0 0
    %6082 = vmatpush1.bf16.msra.mxu0 0
    %6083 = vmatprep.subr.bf16.mxu0 0
    %6084 = vmatpush1.bf16.msra.mxu0 0
    %6085 = vmatprep.subr.bf16.mxu0 0
    %6086 = vmatpush1.bf16.msra.mxu0 0
    %6087 = vmatprep.subr.bf16.mxu0 0
    %6088 = vmatpush1.bf16.msra.mxu0 0
    %6089 = vmatprep.subr.bf16.mxu0 0
    %6090 = vmatpush1.bf16.msra.mxu0 0
    %6091 = vmatprep.subr.bf16.mxu0 0
    %6092 = vmatpush1.bf16.msra.mxu0 0
    %6093 = vmatprep.subr.bf16.mxu0 0
    %6094 = vmatpush1.bf16.msra.mxu0 0
    %6095 = vmatprep.mubr.bf16.mxu0 0
    %6096 = vmatmul.mubr.bf16.gmra.mrb[0].mxu0 %v5991
    %v6097 = vpop.f32.mrb[0].mxu0
    %v6098 = vadd.f32 %v6013, %v6097
    %v6099 = vpop.f32.mrb[0].mxu0
    %v6100 = vpop.f32.mrb[0].mxu0
    %v6101 = vadd.f32 %v6013, %v6100
    %v6102 = vpop.f32.mrb[0].mxu0
    %6103 = vdwg.mxu0
    %v6104 = vmax.f32 %v6098, 0.0
    %v6105 = vmax.f32 %v6101, 0.0
    %v6106 = vpack.c.bf16 %v6105, %v6104
    %v6107 = vld [vmem:[%s12] sm:$0xf]
    %v6108 = vld [vmem:[%s12 + $0x4] sm:$0xf]
    %v6109 = vld [vmem:[%s12 + $0x8] sm:$0xf]
    %v6110 = vld [vmem:[%s12 + $0xc] sm:$0xf]
    %v6111 = vld [vmem:[%s12 + $0x10] sm:$0xf]
    %v6112 = vld [vmem:[%s12 + $0x14] sm:$0xf]
    %v6113 = vld [vmem:[%s12 + $0x18] sm:$0xf]
    %v6114 = vld [vmem:[%s12 + $0x1c] sm:$0xf]
    %v6115 = vld [vmem:[#allocation18] sm:$0x1]
    %v6117 = vlaneseq
    %v6118 = vshrl.u32 %v6117, 7
    %v6119 = vsub.s32 0, %v6118
    %v6120 = vrot.slane %v6115, %v6119
    %v6130 = vunpack.c.l.b16 %v6107
    %v6131 = vunpack.c.l.b16 %v6108
    %v6132 = vunpack.c.l.b16 %v6109
    %v6133 = vunpack.c.l.b16 %v6110
    %v6134 = vunpack.c.l.b16 %v6111
    %v6135 = vunpack.c.l.b16 %v6112
    %v6136 = vunpack.c.l.b16 %v6113
    %v6137 = vunpack.c.l.b16 %v6114
    %v6138 = vpack.c.b16 %v6131, %v6130
    %v6139 = vpack.c.b16 %v6133, %v6132
    %v6140 = vpack.c.b16 %v6135, %v6134
    %v6141 = vpack.c.b16 %v6137, %v6136
    %v6147 = vsel %vm243, %v6106, 0
    %6149 = vmatprep.subr.bf16.mxu0 0
    %6150 = vmatpush1.bf16.msra.mxu0 %v6138
    %6151 = vmatprep.subr.bf16.mxu0 0
    %6152 = vmatpush1.bf16.msra.mxu0 %v6139
    %6153 = vmatprep.subr.bf16.mxu0 0
    %6154 = vmatpush1.bf16.msra.mxu0 %v6140
    %6155 = vmatprep.subr.bf16.mxu0 0
    %6156 = vmatpush1.bf16.msra.mxu0 %v6141
    %6157 = vmatprep.subr.bf16.mxu0 0
    %6158 = vmatpush1.bf16.msra.mxu0 0
    %6159 = vmatprep.subr.bf16.mxu0 0
    %6160 = vmatpush1.bf16.msra.mxu0 0
    %6161 = vmatprep.subr.bf16.mxu0 0
    %6162 = vmatpush1.bf16.msra.mxu0 0
    %6163 = vmatprep.subr.bf16.mxu0 0
    %6164 = vmatpush1.bf16.msra.mxu0 0
    %6165 = vmatprep.subr.bf16.mxu0 0
    %6166 = vmatpush1.bf16.msra.mxu0 0
    %6167 = vmatprep.subr.bf16.mxu0 0
    %6168 = vmatpush1.bf16.msra.mxu0 0
    %6169 = vmatprep.subr.bf16.mxu0 0
    %6170 = vmatpush1.bf16.msra.mxu0 0
    %6171 = vmatprep.subr.bf16.mxu0 0
    %6172 = vmatpush1.bf16.msra.mxu0 0
    %6173 = vmatprep.subr.bf16.mxu0 0
    %6174 = vmatpush1.bf16.msra.mxu0 0
    %6175 = vmatprep.subr.bf16.mxu0 0
    %6176 = vmatpush1.bf16.msra.mxu0 0
    %6177 = vmatprep.subr.bf16.mxu0 0
    %6178 = vmatpush1.bf16.msra.mxu0 0
    %6179 = vmatprep.subr.bf16.mxu0 0
    %6180 = vmatpush1.bf16.msra.mxu0 0
    %6181 = vmatprep.mubr.bf16.mxu0 0
    %6182 = vmatmul.mubr.bf16.gmra.mrb[0].mxu0 %v6147
    %v6183 = vpop.f32.mrb[0].mxu0
    %v6184 = vadd.f32 %v6120, %v6183
    %v6185 = vpop.f32.mrb[0].mxu0
    %v6186 = vpop.f32.mrb[0].mxu0
    %v6187 = vadd.f32 %v6120, %v6186
    %v6188 = vpop.f32.mrb[0].mxu0
    %6189 = vdwg.mxu0
    %vm6190 = vcmask 64512
    %6191 = vst.msk [vmem:[%s14] sm:$0xff] %vm6190, %v6184
    %6192 = vst.msk [vmem:[%s14 + $0x8] sm:$0xff] %vm6190, %v6187
    // Predicated region
    $region102: #{chess_forward.1} parent=1 // pred_check
      _
    $region103: #{chess_forward.1} parent=1 // pred_check_branch
      %6194 = sbr.rel (0) target = $region105
    $region104: #{chess_forward.1} parent=1 // pred_region
      _
    $region105: #{chess_forward.1} parent=1 // pred_fallthru
      _
    // Predicated region
    $region106: #{chess_forward.1} parent=1 // pred_check
      _
    $region107: #{chess_forward.1} parent=1 // pred_check_branch
      %6196 = sbr.rel (0) target = $region109
    $region108: #{chess_forward.1} parent=1 // pred_region
      _
    $region109: #{chess_forward.1} parent=1 // pred_fallthru
      _
    %6197 = vsyncpa [#allocation3], 1
    %6198 = vsyncpa [#allocation5], 1
    %6199 = vsyncpa [#allocation8], 1
    %6200 = vsyncpa [#allocation11], 1
    %6201 = vsyncpa [#allocation14], 1
    %6202 = vsyncpa [#allocation17], 1

</llo_original>
